<compile_context>
chip_gen: v7x
topology: tpu7x:2x2x1
jax: 0.10.0
libtpu: 0.0.40
codegen_flags: <defaults>
</compile_context>

<pallas_src>
import jax
import jax.numpy as jnp
from jax.experimental import pallas as pl
from jax.experimental.pallas import tpu as pltpu


def housing_mlp_kernel(x_ref, w1_ref, b1_ref, w2_ref, b2_ref, w3_ref, b3_ref, o_ref):
    """One batch tile: x [TM, D] -> output row [1, TM] (lane-dense)."""
    d = x_ref.shape[1]

    # ---- Layer 1 on the VPU -------------------------------------------------
    # K = D (=16) is far too small for the MXU; D unrolled broadcast-FMAs in f32
    # keep the MXU (vext slot) free for layer 2 and are v5e-safe (f32-only VPU).
    x = x_ref[...].astype(jnp.float32)            # (TM, D), streamed as bf16
    w1 = w1_ref[...]                              # (D, 128) f32, VMEM-resident
    acc1 = x[:, 0:1] * w1[0:1, :]                 # (TM, 128)
    for k in range(1, d):                         # static, fully unrolled
        acc1 = acc1 + x[:, k:k + 1] * w1[k:k + 1, :]
    h1 = jnp.maximum(acc1 + b1_ref[...], 0.0)     # (TM, 128) f32

    # ---- Layer 2 on the MXU: bf16 operands, f32 accumulation -----------------
    h2 = jnp.dot(h1.astype(jnp.bfloat16), w2_ref[...],
                 preferred_element_type=jnp.float32)          # (TM, 64)
    h2 = jnp.maximum(h2 + b2_ref[...], 0.0)

    # ---- Layer 3 (out_features == 1), computed transposed --------------------
    # w3 @ h2^T -> (1, TM): the store is a single lane-dense row instead of a
    # 1-lane-wide masked column.  Layer 3 FLOPs / layout cost are negligible.
    out_row = jax.lax.dot_general(
        w3_ref[...], h2.astype(jnp.bfloat16),
        (((1,), (1,)), ((), ())),
        preferred_element_type=jnp.float32)                   # (1, TM)
    o_ref[...] = (out_row + b3_ref[0, 0]).astype(o_ref.dtype)


def _num_tensorcores_per_chip():
    """2 TensorCores per chip on v7x; v5e/v6e expose a single TC."""
    try:
        kind = jax.devices()[0].device_kind.lower()
    except Exception:
        return 1
    return 2 if "v7" in kind else 1


def _choose_block_m(batch, num_cores, max_block_m=2048):
    """Balanced, lane-dense batch tiles.

    Single full tile on 1-TC chips for small/medium batches (grid steps are pure
    ~0.35us overhead there); >=num_cores balanced tiles (multiple of 128 rows)
    otherwise, capped at max_block_m rows per tile.
    """
    if batch <= 128 or (num_cores == 1 and batch <= 2048):
        return batch                                     # single full-extent tile
    n_tiles = max(num_cores, pl.cdiv(batch, max_block_m))
    n_tiles = pl.cdiv(n_tiles, num_cores) * num_cores    # balance across TCs
    bm = pl.cdiv(pl.cdiv(batch, n_tiles), 128) * 128     # lane-dense output tiles
    return min(bm, batch)


def housing_nn_forward(x, params, *, block_m=None):
    """x: [batch, input_size]; returns [batch, 1] float32.

    x is streamed to the kernel as bf16 (the dominant HBM stream); ideally the
    producer emits bf16 directly instead of a standalone cast here.
    """
    B, D = x.shape
    x = x.astype(jnp.bfloat16)                       # bf16-at-the-boundary contract
    w1 = params["w1"].astype(jnp.float32)            # [D, 128]  (VPU layer -> f32)
    b1 = params["b1"].astype(jnp.float32)            # [1, 128]
    w2 = params["w2"].astype(jnp.bfloat16)           # [128, 64] (MXU layer -> bf16)
    b2 = params["b2"].astype(jnp.float32)            # [1, 64]
    w3 = params["w3"].astype(jnp.bfloat16)           # [1, 64]   (PyTorch [out, in])
    b3 = params["b3"].astype(jnp.float32).reshape(1, 1)
    H1 = w1.shape[1]
    H2 = w2.shape[1]

    if block_m is None:
        block_m = _choose_block_m(B, _num_tensorcores_per_chip())
    assert block_m == B or block_m % 128 == 0, (
        "block_m must equal batch or be a multiple of 128 for lane-dense output tiles")

    grid = (pl.cdiv(B, block_m),)

    cost = pl.CostEstimate(
        flops=2 * B * (D * H1 + H1 * H2 + H2 * 1),
        transcendentals=0,
        bytes_accessed=(x.size * 2                       # bf16 activations
                        + w1.size * 4 + w2.size * 2 + w3.size * 2
                        + (b1.size + b2.size + 1) * 4
                        + B * 4),
    )

    out_row = pl.pallas_call(
        housing_mlp_kernel,
        out_shape=jax.ShapeDtypeStruct((1, B), jnp.float32),
        grid=grid,
        in_specs=[
            pl.BlockSpec((block_m, D), lambda i: (i, 0)),        # x: streamed per tile
            pl.BlockSpec((D, H1), lambda i: (0, 0)),             # w1: VMEM-resident
            pl.BlockSpec((1, H1), lambda i: (0, 0)),             # b1
            pl.BlockSpec((H1, H2), lambda i: (0, 0)),            # w2
            pl.BlockSpec((1, H2), lambda i: (0, 0)),             # b2
            pl.BlockSpec((1, H2), lambda i: (0, 0)),             # w3 (row vector)
            pl.BlockSpec(memory_space=pltpu.MemorySpace.SMEM),   # b3 scalar
        ],
        out_specs=pl.BlockSpec((1, block_m), lambda i: (0, i)),  # lane-dense output row
        compiler_params=pltpu.CompilerParams(
            dimension_semantics=("parallel",),   # shard balanced batch tiles across TCs (v7x)
            # No vmem_limit override: per-tile footprint is only a few MiB even at
            # block_m=2048, well under the scoped default on v5e/v6e/v7x.
        ),
        cost_estimate=cost,
    )(x, w1, b1, w2, b2, w3, b3)

    return out_row.reshape(B, 1)


def init_params(key, input_size):
    """Deterministic init matching nn.Linear defaults (w1/w2 stored [in, out], w3 [out, in])."""
    ks = jax.random.split(key, 6)

    def lin(kw, kb, fan_in, fan_out, transpose_w=False):
        bound = 1.0 / jnp.sqrt(fan_in)
        wshape = (fan_out, fan_in) if transpose_w else (fan_in, fan_out)
        w = jax.random.uniform(kw, wshape, jnp.float32, -bound, bound)
        b = jax.random.uniform(kb, (1, fan_out), jnp.float32, -bound, bound)
        return w, b

    w1, b1 = lin(ks[0], ks[1], input_size, 128)
    w2, b2 = lin(ks[2], ks[3], 128, 64)
    w3, b3 = lin(ks[4], ks[5], 64, 1, transpose_w=True)   # [1, 64], b3 [1, 1]
    return {"w1": w1, "b1": b1, "w2": w2, "b2": b2, "w3": w3, "b3": b3}


if __name__ == "__main__":
    key = jax.random.PRNGKey(0)
    k_x, k_p = jax.random.split(key)
    batch, input_size = 256, 16
    x_f32 = jax.random.normal(k_x, (batch, input_size), jnp.float32)
    params = init_params(k_p, input_size)

    out = housing_nn_forward(x_f32, params)   # adaptive block_m (1 tile on v5e/v6e, 2 on v7x)
    jax.block_until_ready(out)
    assert out.shape == (batch, 1)

    # Matched-precision reference: f32 layer 1 (bf16 x), bf16-MXU layers 2/3, f32 accumulation.
    xb = x_f32.astype(jnp.bfloat16).astype(jnp.float32)
    h1 = jnp.maximum(
        jnp.dot(xb, params["w1"], precision=jax.lax.Precision.HIGHEST) + params["b1"], 0.0)
    h2 = jnp.maximum(
        jnp.dot(h1.astype(jnp.bfloat16), params["w2"].astype(jnp.bfloat16),
                preferred_element_type=jnp.float32) + params["b2"], 0.0)
    ref = jnp.dot(h2.astype(jnp.bfloat16), params["w3"].astype(jnp.bfloat16).T,
                  preferred_element_type=jnp.float32) + params["b3"]
    assert jnp.allclose(out, ref, atol=5e-3, rtol=5e-3)

    # Loose check against the pure-f32 PyTorch-equivalent forward pass.
    h1f = jnp.maximum(x_f32 @ params["w1"] + params["b1"], 0.0)
    h2f = jnp.maximum(h1f @ params["w2"] + params["b2"], 0.0)
    reff = h2f @ params["w3"].T + params["b3"]
    assert jnp.allclose(out, reff, atol=1e-1, rtol=1e-1)

    print("KERNEL_OK")
</pallas_src>

<mosaic_0001>
module attributes {stable_mosaic.version = 11 : i64} {
  func.func @housing_mlp_kernel(%arg0: i32, %arg1: memref<256x16xbf16, #tpu.memory_space<vmem>>, %arg2: memref<16x128xf32, #tpu.memory_space<vmem>>, %arg3: memref<1x128xf32, #tpu.memory_space<vmem>>, %arg4: memref<128x64xbf16, #tpu.memory_space<vmem>>, %arg5: memref<1x64xf32, #tpu.memory_space<vmem>>, %arg6: memref<1x64xbf16, #tpu.memory_space<vmem>>, %arg7: memref<1x1xf32, #tpu.memory_space<smem>>, %arg8: memref<1x256xf32, #tpu.memory_space<vmem>>) attributes {dimension_semantics = [#tpu.dimension_semantics<parallel>], iteration_bounds = array<i64: 1>, scalar_prefetch = 0 : i64, scratch_operands = 0 : i64, tpu.core_type = #tpu.core_type<tc>, window_params = [{transform_indices = @transform_0, window_bounds = array<i64: 256, 16>}, {pipeline_mode = #tpu.pipeline_mode<synchronous>, transform_indices = @transform_1, window_bounds = array<i64: 16, 128>}, {pipeline_mode = #tpu.pipeline_mode<synchronous>, transform_indices = @transform_2, window_bounds = array<i64: 1, 128>}, {pipeline_mode = #tpu.pipeline_mode<synchronous>, transform_indices = @transform_3, window_bounds = array<i64: 128, 64>}, {pipeline_mode = #tpu.pipeline_mode<synchronous>, transform_indices = @transform_4, window_bounds = array<i64: 1, 64>}, {pipeline_mode = #tpu.pipeline_mode<synchronous>, transform_indices = @transform_5, window_bounds = array<i64: 1, 64>}, {transform_indices = @transform_6, window_bounds = array<i64: 1, 1>}, {transform_indices = @transform_7, window_bounds = array<i64: 1, 256>}]} {
    %c0 = arith.constant 0 : index
    %c0_0 = arith.constant 0 : index
    %0 = vector.load %arg1[%c0, %c0_0] : memref<256x16xbf16, #tpu.memory_space<vmem>>, vector<256x16xbf16>
    %1 = arith.extf %0 : vector<256x16xbf16> to vector<256x16xf32>
    %c0_1 = arith.constant 0 : index
    %c0_2 = arith.constant 0 : index
    %2 = vector.load %arg2[%c0_1, %c0_2] : memref<16x128xf32, #tpu.memory_space<vmem>>, vector<16x128xf32>
    %3 = vector.extract_strided_slice %1 {offsets = [0, 0], sizes = [256, 1], strides = [1, 1]} : vector<256x16xf32> to vector<256x1xf32>
    %4 = vector.extract_strided_slice %2 {offsets = [0, 0], sizes = [1, 128], strides = [1, 1]} : vector<16x128xf32> to vector<1x128xf32>
    %5 = vector.broadcast %3 : vector<256x1xf32> to vector<256x128xf32>
    %6 = vector.broadcast %4 : vector<1x128xf32> to vector<256x128xf32>
    %7 = arith.mulf %5, %6 : vector<256x128xf32>
    %8 = vector.extract_strided_slice %1 {offsets = [0, 1], sizes = [256, 1], strides = [1, 1]} : vector<256x16xf32> to vector<256x1xf32>
    %9 = vector.extract_strided_slice %2 {offsets = [1, 0], sizes = [1, 128], strides = [1, 1]} : vector<16x128xf32> to vector<1x128xf32>
    %10 = vector.broadcast %8 : vector<256x1xf32> to vector<256x128xf32>
    %11 = vector.broadcast %9 : vector<1x128xf32> to vector<256x128xf32>
    %12 = arith.mulf %10, %11 : vector<256x128xf32>
    %13 = arith.addf %7, %12 : vector<256x128xf32>
    %14 = vector.extract_strided_slice %1 {offsets = [0, 2], sizes = [256, 1], strides = [1, 1]} : vector<256x16xf32> to vector<256x1xf32>
    %15 = vector.extract_strided_slice %2 {offsets = [2, 0], sizes = [1, 128], strides = [1, 1]} : vector<16x128xf32> to vector<1x128xf32>
    %16 = vector.broadcast %14 : vector<256x1xf32> to vector<256x128xf32>
    %17 = vector.broadcast %15 : vector<1x128xf32> to vector<256x128xf32>
    %18 = arith.mulf %16, %17 : vector<256x128xf32>
    %19 = arith.addf %13, %18 : vector<256x128xf32>
    %20 = vector.extract_strided_slice %1 {offsets = [0, 3], sizes = [256, 1], strides = [1, 1]} : vector<256x16xf32> to vector<256x1xf32>
    %21 = vector.extract_strided_slice %2 {offsets = [3, 0], sizes = [1, 128], strides = [1, 1]} : vector<16x128xf32> to vector<1x128xf32>
    %22 = vector.broadcast %20 : vector<256x1xf32> to vector<256x128xf32>
    %23 = vector.broadcast %21 : vector<1x128xf32> to vector<256x128xf32>
    %24 = arith.mulf %22, %23 : vector<256x128xf32>
    %25 = arith.addf %19, %24 : vector<256x128xf32>
    %26 = vector.extract_strided_slice %1 {offsets = [0, 4], sizes = [256, 1], strides = [1, 1]} : vector<256x16xf32> to vector<256x1xf32>
    %27 = vector.extract_strided_slice %2 {offsets = [4, 0], sizes = [1, 128], strides = [1, 1]} : vector<16x128xf32> to vector<1x128xf32>
    %28 = vector.broadcast %26 : vector<256x1xf32> to vector<256x128xf32>
    %29 = vector.broadcast %27 : vector<1x128xf32> to vector<256x128xf32>
    %30 = arith.mulf %28, %29 : vector<256x128xf32>
    %31 = arith.addf %25, %30 : vector<256x128xf32>
    %32 = vector.extract_strided_slice %1 {offsets = [0, 5], sizes = [256, 1], strides = [1, 1]} : vector<256x16xf32> to vector<256x1xf32>
    %33 = vector.extract_strided_slice %2 {offsets = [5, 0], sizes = [1, 128], strides = [1, 1]} : vector<16x128xf32> to vector<1x128xf32>
    %34 = vector.broadcast %32 : vector<256x1xf32> to vector<256x128xf32>
    %35 = vector.broadcast %33 : vector<1x128xf32> to vector<256x128xf32>
    %36 = arith.mulf %34, %35 : vector<256x128xf32>
    %37 = arith.addf %31, %36 : vector<256x128xf32>
    %38 = vector.extract_strided_slice %1 {offsets = [0, 6], sizes = [256, 1], strides = [1, 1]} : vector<256x16xf32> to vector<256x1xf32>
    %39 = vector.extract_strided_slice %2 {offsets = [6, 0], sizes = [1, 128], strides = [1, 1]} : vector<16x128xf32> to vector<1x128xf32>
    %40 = vector.broadcast %38 : vector<256x1xf32> to vector<256x128xf32>
    %41 = vector.broadcast %39 : vector<1x128xf32> to vector<256x128xf32>
    %42 = arith.mulf %40, %41 : vector<256x128xf32>
    %43 = arith.addf %37, %42 : vector<256x128xf32>
    %44 = vector.extract_strided_slice %1 {offsets = [0, 7], sizes = [256, 1], strides = [1, 1]} : vector<256x16xf32> to vector<256x1xf32>
    %45 = vector.extract_strided_slice %2 {offsets = [7, 0], sizes = [1, 128], strides = [1, 1]} : vector<16x128xf32> to vector<1x128xf32>
    %46 = vector.broadcast %44 : vector<256x1xf32> to vector<256x128xf32>
    %47 = vector.broadcast %45 : vector<1x128xf32> to vector<256x128xf32>
    %48 = arith.mulf %46, %47 : vector<256x128xf32>
    %49 = arith.addf %43, %48 : vector<256x128xf32>
    %50 = vector.extract_strided_slice %1 {offsets = [0, 8], sizes = [256, 1], strides = [1, 1]} : vector<256x16xf32> to vector<256x1xf32>
    %51 = vector.extract_strided_slice %2 {offsets = [8, 0], sizes = [1, 128], strides = [1, 1]} : vector<16x128xf32> to vector<1x128xf32>
    %52 = vector.broadcast %50 : vector<256x1xf32> to vector<256x128xf32>
    %53 = vector.broadcast %51 : vector<1x128xf32> to vector<256x128xf32>
    %54 = arith.mulf %52, %53 : vector<256x128xf32>
    %55 = arith.addf %49, %54 : vector<256x128xf32>
    %56 = vector.extract_strided_slice %1 {offsets = [0, 9], sizes = [256, 1], strides = [1, 1]} : vector<256x16xf32> to vector<256x1xf32>
    %57 = vector.extract_strided_slice %2 {offsets = [9, 0], sizes = [1, 128], strides = [1, 1]} : vector<16x128xf32> to vector<1x128xf32>
    %58 = vector.broadcast %56 : vector<256x1xf32> to vector<256x128xf32>
    %59 = vector.broadcast %57 : vector<1x128xf32> to vector<256x128xf32>
    %60 = arith.mulf %58, %59 : vector<256x128xf32>
    %61 = arith.addf %55, %60 : vector<256x128xf32>
    %62 = vector.extract_strided_slice %1 {offsets = [0, 10], sizes = [256, 1], strides = [1, 1]} : vector<256x16xf32> to vector<256x1xf32>
    %63 = vector.extract_strided_slice %2 {offsets = [10, 0], sizes = [1, 128], strides = [1, 1]} : vector<16x128xf32> to vector<1x128xf32>
    %64 = vector.broadcast %62 : vector<256x1xf32> to vector<256x128xf32>
    %65 = vector.broadcast %63 : vector<1x128xf32> to vector<256x128xf32>
    %66 = arith.mulf %64, %65 : vector<256x128xf32>
    %67 = arith.addf %61, %66 : vector<256x128xf32>
    %68 = vector.extract_strided_slice %1 {offsets = [0, 11], sizes = [256, 1], strides = [1, 1]} : vector<256x16xf32> to vector<256x1xf32>
    %69 = vector.extract_strided_slice %2 {offsets = [11, 0], sizes = [1, 128], strides = [1, 1]} : vector<16x128xf32> to vector<1x128xf32>
    %70 = vector.broadcast %68 : vector<256x1xf32> to vector<256x128xf32>
    %71 = vector.broadcast %69 : vector<1x128xf32> to vector<256x128xf32>
    %72 = arith.mulf %70, %71 : vector<256x128xf32>
    %73 = arith.addf %67, %72 : vector<256x128xf32>
    %74 = vector.extract_strided_slice %1 {offsets = [0, 12], sizes = [256, 1], strides = [1, 1]} : vector<256x16xf32> to vector<256x1xf32>
    %75 = vector.extract_strided_slice %2 {offsets = [12, 0], sizes = [1, 128], strides = [1, 1]} : vector<16x128xf32> to vector<1x128xf32>
    %76 = vector.broadcast %74 : vector<256x1xf32> to vector<256x128xf32>
    %77 = vector.broadcast %75 : vector<1x128xf32> to vector<256x128xf32>
    %78 = arith.mulf %76, %77 : vector<256x128xf32>
    %79 = arith.addf %73, %78 : vector<256x128xf32>
    %80 = vector.extract_strided_slice %1 {offsets = [0, 13], sizes = [256, 1], strides = [1, 1]} : vector<256x16xf32> to vector<256x1xf32>
    %81 = vector.extract_strided_slice %2 {offsets = [13, 0], sizes = [1, 128], strides = [1, 1]} : vector<16x128xf32> to vector<1x128xf32>
    %82 = vector.broadcast %80 : vector<256x1xf32> to vector<256x128xf32>
    %83 = vector.broadcast %81 : vector<1x128xf32> to vector<256x128xf32>
    %84 = arith.mulf %82, %83 : vector<256x128xf32>
    %85 = arith.addf %79, %84 : vector<256x128xf32>
    %86 = vector.extract_strided_slice %1 {offsets = [0, 14], sizes = [256, 1], strides = [1, 1]} : vector<256x16xf32> to vector<256x1xf32>
    %87 = vector.extract_strided_slice %2 {offsets = [14, 0], sizes = [1, 128], strides = [1, 1]} : vector<16x128xf32> to vector<1x128xf32>
    %88 = vector.broadcast %86 : vector<256x1xf32> to vector<256x128xf32>
    %89 = vector.broadcast %87 : vector<1x128xf32> to vector<256x128xf32>
    %90 = arith.mulf %88, %89 : vector<256x128xf32>
    %91 = arith.addf %85, %90 : vector<256x128xf32>
    %92 = vector.extract_strided_slice %1 {offsets = [0, 15], sizes = [256, 1], strides = [1, 1]} : vector<256x16xf32> to vector<256x1xf32>
    %93 = vector.extract_strided_slice %2 {offsets = [15, 0], sizes = [1, 128], strides = [1, 1]} : vector<16x128xf32> to vector<1x128xf32>
    %94 = vector.broadcast %92 : vector<256x1xf32> to vector<256x128xf32>
    %95 = vector.broadcast %93 : vector<1x128xf32> to vector<256x128xf32>
    %96 = arith.mulf %94, %95 : vector<256x128xf32>
    %97 = arith.addf %91, %96 : vector<256x128xf32>
    %c0_3 = arith.constant 0 : index
    %c0_4 = arith.constant 0 : index
    %98 = vector.load %arg3[%c0_3, %c0_4] : memref<1x128xf32, #tpu.memory_space<vmem>>, vector<1x128xf32>
    %99 = vector.broadcast %98 : vector<1x128xf32> to vector<256x128xf32>
    %100 = arith.addf %97, %99 : vector<256x128xf32>
    %cst = arith.constant 0.000000e+00 : f32
    %101 = vector.broadcast %cst : f32 to vector<256x128xf32>
    %102 = arith.maximumf %100, %101 : vector<256x128xf32>
    %103 = arith.truncf %102 : vector<256x128xf32> to vector<256x128xbf16>
    %c0_5 = arith.constant 0 : index
    %c0_6 = arith.constant 0 : index
    %104 = vector.load %arg4[%c0_5, %c0_6] : memref<128x64xbf16, #tpu.memory_space<vmem>>, vector<128x64xbf16>
    %cst_7 = arith.constant dense<0.000000e+00> : vector<256x64xf32>
    %105 = tpu.matmul %103, %104, %cst_7 {dimension_numbers = #tpu.dot_dimension_numbers<[1], [0], [0], [1], [0, 0, 1, 1], [], []>} : vector<256x128xbf16>, vector<128x64xbf16>, vector<256x64xf32> -> vector<256x64xf32>
    %c0_8 = arith.constant 0 : index
    %c0_9 = arith.constant 0 : index
    %106 = vector.load %arg5[%c0_8, %c0_9] : memref<1x64xf32, #tpu.memory_space<vmem>>, vector<1x64xf32>
    %107 = vector.broadcast %106 : vector<1x64xf32> to vector<256x64xf32>
    %108 = arith.addf %105, %107 : vector<256x64xf32>
    %cst_10 = arith.constant 0.000000e+00 : f32
    %109 = vector.broadcast %cst_10 : f32 to vector<256x64xf32>
    %110 = arith.maximumf %108, %109 : vector<256x64xf32>
    %c0_11 = arith.constant 0 : index
    %c0_12 = arith.constant 0 : index
    %111 = vector.load %arg6[%c0_11, %c0_12] : memref<1x64xbf16, #tpu.memory_space<vmem>>, vector<1x64xbf16>
    %112 = arith.truncf %110 : vector<256x64xf32> to vector<256x64xbf16>
    %cst_13 = arith.constant dense<0.000000e+00> : vector<1x256xf32>
    %113 = tpu.matmul %111, %112, %cst_13 {dimension_numbers = #tpu.dot_dimension_numbers<[1], [1], [0], [0], [0, 0, 1, 0], [], []>} : vector<1x64xbf16>, vector<256x64xbf16>, vector<1x256xf32> -> vector<1x256xf32>
    %c0_14 = arith.constant 0 : index
    %c0_15 = arith.constant 0 : index
    %114 = memref.load %arg7[%c0_14, %c0_15] : memref<1x1xf32, #tpu.memory_space<smem>>
    %115 = vector.broadcast %114 : f32 to vector<1x256xf32>
    %116 = arith.addf %113, %115 : vector<1x256xf32>
    %c0_16 = arith.constant 0 : index
    %c0_17 = arith.constant 0 : index
    %117 = vector.load %arg8[%c0_16, %c0_17] : memref<1x256xf32, #tpu.memory_space<vmem>>, vector<1x256xf32>
    tpu.vector_store %arg8[%c0_16, %c0_17], %116 {strides = array<i32>} : memref<1x256xf32, #tpu.memory_space<vmem>>, vector<1x256xf32>,
    return
  }
  func.func @transform_0(%arg0: i32) -> (i32, i32) {
    %c0_i32 = arith.constant 0 : i32
    %c0_i32_0 = arith.constant 0 : i32
    return %arg0, %c0_i32 : i32, i32
  }
  func.func @transform_1(%arg0: i32) -> (i32, i32) {
    %c0_i32 = arith.constant 0 : i32
    %c0_i32_0 = arith.constant 0 : i32
    %c0_i32_1 = arith.constant 0 : i32
    return %c0_i32, %c0_i32_0 : i32, i32
  }
  func.func @transform_2(%arg0: i32) -> (i32, i32) {
    %c0_i32 = arith.constant 0 : i32
    %c0_i32_0 = arith.constant 0 : i32
    %c0_i32_1 = arith.constant 0 : i32
    return %c0_i32, %c0_i32_0 : i32, i32
  }
  func.func @transform_3(%arg0: i32) -> (i32, i32) {
    %c0_i32 = arith.constant 0 : i32
    %c0_i32_0 = arith.constant 0 : i32
    %c0_i32_1 = arith.constant 0 : i32
    return %c0_i32, %c0_i32_0 : i32, i32
  }
  func.func @transform_4(%arg0: i32) -> (i32, i32) {
    %c0_i32 = arith.constant 0 : i32
    %c0_i32_0 = arith.constant 0 : i32
    %c0_i32_1 = arith.constant 0 : i32
    return %c0_i32, %c0_i32_0 : i32, i32
  }
  func.func @transform_5(%arg0: i32) -> (i32, i32) {
    %c0_i32 = arith.constant 0 : i32
    %c0_i32_0 = arith.constant 0 : i32
    %c0_i32_1 = arith.constant 0 : i32
    return %c0_i32, %c0_i32_0 : i32, i32
  }
  func.func @transform_6(%arg0: i32) -> (i32, i32) {
    %c0_i32 = arith.constant 0 : i32
    %c0_i32_0 = arith.constant 0 : i32
    %c0_i32_1 = arith.constant 0 : i32
    return %c0_i32, %c0_i32_0 : i32, i32
  }
  func.func @transform_7(%arg0: i32) -> (i32, i32) {
    %c0_i32 = arith.constant 0 : i32
    %c0_i32_0 = arith.constant 0 : i32
    return %c0_i32, %arg0 : i32, i32
  }
}

</mosaic_0001>

<llo_original>
// kernel: tpu_custom_call.1
$region0: #{tpu_custom_call.1}
  #allocation0 [shape = 'u32[]', space=smem, size = 0x4, offset = 0x4, fixed_abs, tag = 'smem constant byte address 0x4 - core index']
  #allocation1 [shape = 'u32[144,128]{1,0:T(1,128)}', space=vmem, size = 0x12000, scoped, tag = 'internal scratch']
  #allocation2 [shape = 'f32[1,1]{1,0:T(1,128)S(6)}', space=smem, size = 0x200, scoped, tag = 'scoped memory for tpu_custom_call.1']
  %s0 = inlined_call_operand.vmem [shape: bf16[256,16], index: 0, kind: input, shape index: {}]
  %s1 = inlined_call_operand.vmem [shape: f32[16,128], index: 1, kind: input, shape index: {}]
  %s2 = inlined_call_operand.vmem [shape: f32[1,128], index: 2, kind: input, shape index: {}]
  %s3 = inlined_call_operand.vmem [shape: bf16[128,64], index: 3, kind: input, shape index: {}]
  %s4 = inlined_call_operand.vmem [shape: f32[1,64], index: 4, kind: input, shape index: {}]
  %s5 = inlined_call_operand.vmem [shape: bf16[1,64], index: 5, kind: input, shape index: {}]
  %s6 = inlined_call_operand.<no memory space> [shape: f32[1,1], index: 6, kind: input, shape index: {}]
  %s7 = inlined_call_operand.hbm [shape: f32[1,256], index: 7, kind: output, shape index: {}]
  %s8 = sld [smem:[#allocation0]]
  $region38: #{tpu_custom_call.1} parent=0
    _
  %s10 = ssub.s32 1, %s8
  %s11 = scalar_select 0, %s10, %s8
  %12 = sst [smem:[#allocation2]] %s6
  $region1: #{tpu_custom_call.1} parent=0
    #allocation3 [shape = 'u8[1024]{0}', space=vmem, size = 0x400, scoped, tag = 'output window, operand 0, single buffered']
    #allocation4 [shape = 's32[1]{0}', space=sflag, size = 0x4, scoped, tag = 'scoped memory for tpu_custom_call.1']
    %13 = vsyncpa [#allocation4], 0
    // Predicated region
    $region2: #{tpu_custom_call.1} parent=1 // pred_check
      _
    $region3: #{tpu_custom_call.1} parent=1 // pred_check_branch
      %15 = sbr.rel (0) target = $region5
    $region4: #{tpu_custom_call.1} parent=1 // pred_region
      _
    $region5: #{tpu_custom_call.1} parent=1 // pred_fallthru
      _
    // Predicated region
    $region6: #{tpu_custom_call.1} parent=1 // pred_check
      _
    $region7: #{tpu_custom_call.1} parent=1 // pred_check_branch
      %17 = sbr.rel (0) target = $region9
    $region8: #{tpu_custom_call.1} parent=1 // pred_region
      _
    $region9: #{tpu_custom_call.1} parent=1 // pred_fallthru
      _
    // Predicated region
    $region10: #{tpu_custom_call.1} parent=1 // pred_check
      _
    $region11: #{tpu_custom_call.1} parent=1 // pred_check_branch
      %19 = sbr.rel (0) target = $region13
    $region12: #{tpu_custom_call.1} parent=1 // pred_region
      _
    $region13: #{tpu_custom_call.1} parent=1 // pred_fallthru
      _
    // Predicated region
    $region14: #{tpu_custom_call.1} parent=1 // pred_check
      _
    $region15: #{tpu_custom_call.1} parent=1 // pred_check_branch
      %21 = sbr.rel (0) target = $region17
    $region16: #{tpu_custom_call.1} parent=1 // pred_region
      _
    $region17: #{tpu_custom_call.1} parent=1 // pred_fallthru
      _
    // Predicated region
    $region18: #{tpu_custom_call.1} parent=1 // pred_check
      _
    $region19: #{tpu_custom_call.1} parent=1 // pred_check_branch
      %23 = sbr.rel (0) target = $region21
    $region20: #{tpu_custom_call.1} parent=1 // pred_region
      _
    $region21: #{tpu_custom_call.1} parent=1 // pred_fallthru
      _
    // Predicated region
    $region22: #{tpu_custom_call.1} parent=1 // pred_check
      _
    $region23: #{tpu_custom_call.1} parent=1 // pred_check_branch
      %25 = sbr.rel (0) target = $region25
    $region24: #{tpu_custom_call.1} parent=1 // pred_region
      _
    $region25: #{tpu_custom_call.1} parent=1 // pred_fallthru
      _
    // Predicated region
    $region26: #{tpu_custom_call.1} parent=1 // pred_check
      _
    $region27: #{tpu_custom_call.1} parent=1 // pred_check_branch
      %27 = sbr.rel (0) target = $region29
    $region28: #{tpu_custom_call.1} parent=1 // pred_region
      _
    $region29: #{tpu_custom_call.1} parent=1 // pred_fallthru
      _
    %v29 = vld [vmem:[%s0] sm:$0xf]
    %v30 = vld [vmem:[%s0 + $0x4] sm:$0xf]
    %v31 = vld [vmem:[%s0 + $0x8] sm:$0xf]
    %v32 = vld [vmem:[%s0 + $0xc] sm:$0xf]
    %v33 = vld [vmem:[%s0 + $0x10] sm:$0xf]
    %v34 = vld [vmem:[%s0 + $0x14] sm:$0xf]
    %v35 = vld [vmem:[%s0 + $0x18] sm:$0xf]
    %v36 = vld [vmem:[%s0 + $0x1c] sm:$0xf]
    %v37 = vld [vmem:[%s0 + $0x20] sm:$0xf]
    %v38 = vld [vmem:[%s0 + $0x24] sm:$0xf]
    %v39 = vld [vmem:[%s0 + $0x28] sm:$0xf]
    %v40 = vld [vmem:[%s0 + $0x2c] sm:$0xf]
    %v41 = vld [vmem:[%s0 + $0x30] sm:$0xf]
    %v42 = vld [vmem:[%s0 + $0x34] sm:$0xf]
    %v43 = vld [vmem:[%s0 + $0x38] sm:$0xf]
    %v44 = vld [vmem:[%s0 + $0x3c] sm:$0xf]
    %v45 = vld [vmem:[%s0 + $0x40] sm:$0xf]
    %v46 = vld [vmem:[%s0 + $0x44] sm:$0xf]
    %v47 = vld [vmem:[%s0 + $0x48] sm:$0xf]
    %v48 = vld [vmem:[%s0 + $0x4c] sm:$0xf]
    %v49 = vld [vmem:[%s0 + $0x50] sm:$0xf]
    %v50 = vld [vmem:[%s0 + $0x54] sm:$0xf]
    %v51 = vld [vmem:[%s0 + $0x58] sm:$0xf]
    %v52 = vld [vmem:[%s0 + $0x5c] sm:$0xf]
    %v53 = vld [vmem:[%s0 + $0x60] sm:$0xf]
    %v54 = vld [vmem:[%s0 + $0x64] sm:$0xf]
    %v55 = vld [vmem:[%s0 + $0x68] sm:$0xf]
    %v56 = vld [vmem:[%s0 + $0x6c] sm:$0xf]
    %v57 = vld [vmem:[%s0 + $0x70] sm:$0xf]
    %v58 = vld [vmem:[%s0 + $0x74] sm:$0xf]
    %v59 = vld [vmem:[%s0 + $0x78] sm:$0xf]
    %v60 = vld [vmem:[%s0 + $0x7c] sm:$0xf]
    %v61 = vunpack.c.l.bf16 %v29
    %v62 = vunpack.c.l.bf16 %v30
    %v63 = vunpack.c.l.bf16 %v31
    %v64 = vunpack.c.l.bf16 %v32
    %v65 = vunpack.c.l.bf16 %v33
    %v66 = vunpack.c.l.bf16 %v34
    %v67 = vunpack.c.l.bf16 %v35
    %v68 = vunpack.c.l.bf16 %v36
    %v69 = vunpack.c.l.bf16 %v37
    %v70 = vunpack.c.l.bf16 %v38
    %v71 = vunpack.c.l.bf16 %v39
    %v72 = vunpack.c.l.bf16 %v40
    %v73 = vunpack.c.l.bf16 %v41
    %v74 = vunpack.c.l.bf16 %v42
    %v75 = vunpack.c.l.bf16 %v43
    %v76 = vunpack.c.l.bf16 %v44
    %v77 = vunpack.c.l.bf16 %v45
    %v78 = vunpack.c.l.bf16 %v46
    %v79 = vunpack.c.l.bf16 %v47
    %v80 = vunpack.c.l.bf16 %v48
    %v81 = vunpack.c.l.bf16 %v49
    %v82 = vunpack.c.l.bf16 %v50
    %v83 = vunpack.c.l.bf16 %v51
    %v84 = vunpack.c.l.bf16 %v52
    %v85 = vunpack.c.l.bf16 %v53
    %v86 = vunpack.c.l.bf16 %v54
    %v87 = vunpack.c.l.bf16 %v55
    %v88 = vunpack.c.l.bf16 %v56
    %v89 = vunpack.c.l.bf16 %v57
    %v90 = vunpack.c.l.bf16 %v58
    %v91 = vunpack.c.l.bf16 %v59
    %v92 = vunpack.c.l.bf16 %v60
    %v93 = vld [vmem:[%s1] sm:$0xff]
    %v94 = vld [vmem:[%s1 + $0x8] sm:$0xff]
    %96 = vset.pattern.permute.xlu0 0
    %97 = vperm.xlu0 %96, %v61
    %v98 = vpop.permute.xlu0 %97
    %101 = vset.pattern.permute.xlu0 0
    %102 = vperm.xlu0 %101, %v62
    %v103 = vpop.permute.xlu0 %102
    %106 = vset.pattern.permute.xlu0 0
    %107 = vperm.xlu0 %106, %v63
    %v108 = vpop.permute.xlu0 %107
    %111 = vset.pattern.permute.xlu0 0
    %112 = vperm.xlu0 %111, %v64
    %v113 = vpop.permute.xlu0 %112
    %116 = vset.pattern.permute.xlu0 0
    %117 = vperm.xlu0 %116, %v65
    %v118 = vpop.permute.xlu0 %117
    %121 = vset.pattern.permute.xlu0 0
    %122 = vperm.xlu0 %121, %v66
    %v123 = vpop.permute.xlu0 %122
    %126 = vset.pattern.permute.xlu0 0
    %127 = vperm.xlu0 %126, %v67
    %v128 = vpop.permute.xlu0 %127
    %131 = vset.pattern.permute.xlu0 0
    %132 = vperm.xlu0 %131, %v68
    %v133 = vpop.permute.xlu0 %132
    %136 = vset.pattern.permute.xlu0 0
    %137 = vperm.xlu0 %136, %v69
    %v138 = vpop.permute.xlu0 %137
    %141 = vset.pattern.permute.xlu0 0
    %142 = vperm.xlu0 %141, %v70
    %v143 = vpop.permute.xlu0 %142
    %146 = vset.pattern.permute.xlu0 0
    %147 = vperm.xlu0 %146, %v71
    %v148 = vpop.permute.xlu0 %147
    %151 = vset.pattern.permute.xlu0 0
    %152 = vperm.xlu0 %151, %v72
    %v153 = vpop.permute.xlu0 %152
    %156 = vset.pattern.permute.xlu0 0
    %157 = vperm.xlu0 %156, %v73
    %v158 = vpop.permute.xlu0 %157
    %161 = vset.pattern.permute.xlu0 0
    %162 = vperm.xlu0 %161, %v74
    %v163 = vpop.permute.xlu0 %162
    %166 = vset.pattern.permute.xlu0 0
    %167 = vperm.xlu0 %166, %v75
    %v168 = vpop.permute.xlu0 %167
    %171 = vset.pattern.permute.xlu0 0
    %172 = vperm.xlu0 %171, %v76
    %v173 = vpop.permute.xlu0 %172
    %176 = vset.pattern.permute.xlu0 0
    %177 = vperm.xlu0 %176, %v77
    %v178 = vpop.permute.xlu0 %177
    %181 = vset.pattern.permute.xlu0 0
    %182 = vperm.xlu0 %181, %v78
    %v183 = vpop.permute.xlu0 %182
    %186 = vset.pattern.permute.xlu0 0
    %187 = vperm.xlu0 %186, %v79
    %v188 = vpop.permute.xlu0 %187
    %191 = vset.pattern.permute.xlu0 0
    %192 = vperm.xlu0 %191, %v80
    %v193 = vpop.permute.xlu0 %192
    %196 = vset.pattern.permute.xlu0 0
    %197 = vperm.xlu0 %196, %v81
    %v198 = vpop.permute.xlu0 %197
    %201 = vset.pattern.permute.xlu0 0
    %202 = vperm.xlu0 %201, %v82
    %v203 = vpop.permute.xlu0 %202
    %206 = vset.pattern.permute.xlu0 0
    %207 = vperm.xlu0 %206, %v83
    %v208 = vpop.permute.xlu0 %207
    %211 = vset.pattern.permute.xlu0 0
    %212 = vperm.xlu0 %211, %v84
    %v213 = vpop.permute.xlu0 %212
    %216 = vset.pattern.permute.xlu0 0
    %217 = vperm.xlu0 %216, %v85
    %v218 = vpop.permute.xlu0 %217
    %221 = vset.pattern.permute.xlu0 0
    %222 = vperm.xlu0 %221, %v86
    %v223 = vpop.permute.xlu0 %222
    %226 = vset.pattern.permute.xlu0 0
    %227 = vperm.xlu0 %226, %v87
    %v228 = vpop.permute.xlu0 %227
    %231 = vset.pattern.permute.xlu0 0
    %232 = vperm.xlu0 %231, %v88
    %v233 = vpop.permute.xlu0 %232
    %236 = vset.pattern.permute.xlu0 0
    %237 = vperm.xlu0 %236, %v89
    %v238 = vpop.permute.xlu0 %237
    %241 = vset.pattern.permute.xlu0 0
    %242 = vperm.xlu0 %241, %v90
    %v243 = vpop.permute.xlu0 %242
    %246 = vset.pattern.permute.xlu0 0
    %247 = vperm.xlu0 %246, %v91
    %v248 = vpop.permute.xlu0 %247
    %251 = vset.pattern.permute.xlu0 0
    %252 = vperm.xlu0 %251, %v92
    %v253 = vpop.permute.xlu0 %252
    %v255 = vlaneseq
    %v256 = vshrl.u32 %v255, 7
    %v257 = vsub.s32 0, %v256
    %v258 = vrot.slane %v93, %v257
    %v259 = vmul.f32 %v98, %v258
    %v260 = vmul.f32 %v103, %v258
    %v261 = vmul.f32 %v108, %v258
    %v262 = vmul.f32 %v113, %v258
    %v263 = vmul.f32 %v118, %v258
    %v264 = vmul.f32 %v123, %v258
    %v265 = vmul.f32 %v128, %v258
    %v266 = vmul.f32 %v133, %v258
    %v267 = vmul.f32 %v138, %v258
    %v268 = vmul.f32 %v143, %v258
    %v269 = vmul.f32 %v148, %v258
    %v270 = vmul.f32 %v153, %v258
    %v271 = vmul.f32 %v158, %v258
    %v272 = vmul.f32 %v163, %v258
    %v273 = vmul.f32 %v168, %v258
    %v274 = vmul.f32 %v173, %v258
    %v275 = vmul.f32 %v178, %v258
    %v276 = vmul.f32 %v183, %v258
    %v277 = vmul.f32 %v188, %v258
    %v278 = vmul.f32 %v193, %v258
    %v279 = vmul.f32 %v198, %v258
    %v280 = vmul.f32 %v203, %v258
    %v281 = vmul.f32 %v208, %v258
    %v282 = vmul.f32 %v213, %v258
    %v283 = vmul.f32 %v218, %v258
    %v284 = vmul.f32 %v223, %v258
    %v285 = vmul.f32 %v228, %v258
    %v286 = vmul.f32 %v233, %v258
    %v287 = vmul.f32 %v238, %v258
    %v288 = vmul.f32 %v243, %v258
    %v289 = vmul.f32 %v248, %v258
    %v290 = vmul.f32 %v253, %v258
    %291 = vset.pattern.permute.xlu0 1
    %292 = vperm.xlu0 %291, %v61
    %v293 = vpop.permute.xlu0 %292
    %295 = vset.pattern.permute.xlu0 1
    %296 = vperm.xlu0 %295, %v62
    %v297 = vpop.permute.xlu0 %296
    %299 = vset.pattern.permute.xlu0 1
    %300 = vperm.xlu0 %299, %v63
    %v301 = vpop.permute.xlu0 %300
    %303 = vset.pattern.permute.xlu0 1
    %304 = vperm.xlu0 %303, %v64
    %v305 = vpop.permute.xlu0 %304
    %307 = vset.pattern.permute.xlu0 1
    %308 = vperm.xlu0 %307, %v65
    %v309 = vpop.permute.xlu0 %308
    %311 = vset.pattern.permute.xlu0 1
    %312 = vperm.xlu0 %311, %v66
    %v313 = vpop.permute.xlu0 %312
    %315 = vset.pattern.permute.xlu0 1
    %316 = vperm.xlu0 %315, %v67
    %v317 = vpop.permute.xlu0 %316
    %319 = vset.pattern.permute.xlu0 1
    %320 = vperm.xlu0 %319, %v68
    %v321 = vpop.permute.xlu0 %320
    %323 = vset.pattern.permute.xlu0 1
    %324 = vperm.xlu0 %323, %v69
    %v325 = vpop.permute.xlu0 %324
    %327 = vset.pattern.permute.xlu0 1
    %328 = vperm.xlu0 %327, %v70
    %v329 = vpop.permute.xlu0 %328
    %331 = vset.pattern.permute.xlu0 1
    %332 = vperm.xlu0 %331, %v71
    %v333 = vpop.permute.xlu0 %332
    %335 = vset.pattern.permute.xlu0 1
    %336 = vperm.xlu0 %335, %v72
    %v337 = vpop.permute.xlu0 %336
    %339 = vset.pattern.permute.xlu0 1
    %340 = vperm.xlu0 %339, %v73
    %v341 = vpop.permute.xlu0 %340
    %343 = vset.pattern.permute.xlu0 1
    %344 = vperm.xlu0 %343, %v74
    %v345 = vpop.permute.xlu0 %344
    %347 = vset.pattern.permute.xlu0 1
    %348 = vperm.xlu0 %347, %v75
    %v349 = vpop.permute.xlu0 %348
    %351 = vset.pattern.permute.xlu0 1
    %352 = vperm.xlu0 %351, %v76
    %v353 = vpop.permute.xlu0 %352
    %355 = vset.pattern.permute.xlu0 1
    %356 = vperm.xlu0 %355, %v77
    %v357 = vpop.permute.xlu0 %356
    %359 = vset.pattern.permute.xlu0 1
    %360 = vperm.xlu0 %359, %v78
    %v361 = vpop.permute.xlu0 %360
    %363 = vset.pattern.permute.xlu0 1
    %364 = vperm.xlu0 %363, %v79
    %v365 = vpop.permute.xlu0 %364
    %367 = vset.pattern.permute.xlu0 1
    %368 = vperm.xlu0 %367, %v80
    %v369 = vpop.permute.xlu0 %368
    %371 = vset.pattern.permute.xlu0 1
    %372 = vperm.xlu0 %371, %v81
    %v373 = vpop.permute.xlu0 %372
    %375 = vset.pattern.permute.xlu0 1
    %376 = vperm.xlu0 %375, %v82
    %v377 = vpop.permute.xlu0 %376
    %379 = vset.pattern.permute.xlu0 1
    %380 = vperm.xlu0 %379, %v83
    %v381 = vpop.permute.xlu0 %380
    %383 = vset.pattern.permute.xlu0 1
    %384 = vperm.xlu0 %383, %v84
    %v385 = vpop.permute.xlu0 %384
    %387 = vset.pattern.permute.xlu0 1
    %388 = vperm.xlu0 %387, %v85
    %v389 = vpop.permute.xlu0 %388
    %391 = vset.pattern.permute.xlu0 1
    %392 = vperm.xlu0 %391, %v86
    %v393 = vpop.permute.xlu0 %392
    %395 = vset.pattern.permute.xlu0 1
    %396 = vperm.xlu0 %395, %v87
    %v397 = vpop.permute.xlu0 %396
    %399 = vset.pattern.permute.xlu0 1
    %400 = vperm.xlu0 %399, %v88
    %v401 = vpop.permute.xlu0 %400
    %403 = vset.pattern.permute.xlu0 1
    %404 = vperm.xlu0 %403, %v89
    %v405 = vpop.permute.xlu0 %404
    %407 = vset.pattern.permute.xlu0 1
    %408 = vperm.xlu0 %407, %v90
    %v409 = vpop.permute.xlu0 %408
    %411 = vset.pattern.permute.xlu0 1
    %412 = vperm.xlu0 %411, %v91
    %v413 = vpop.permute.xlu0 %412
    %415 = vset.pattern.permute.xlu0 1
    %416 = vperm.xlu0 %415, %v92
    %v417 = vpop.permute.xlu0 %416
    %v419 = vlaneseq
    %v420 = vshrl.u32 %v419, 7
    %v421 = vsub.s32 1, %v420
    %v422 = vrot.slane %v93, %v421
    %v423 = vmul.f32 %v293, %v422
    %v424 = vmul.f32 %v297, %v422
    %v425 = vmul.f32 %v301, %v422
    %v426 = vmul.f32 %v305, %v422
    %v427 = vmul.f32 %v309, %v422
    %v428 = vmul.f32 %v313, %v422
    %v429 = vmul.f32 %v317, %v422
    %v430 = vmul.f32 %v321, %v422
    %v431 = vmul.f32 %v325, %v422
    %v432 = vmul.f32 %v329, %v422
    %v433 = vmul.f32 %v333, %v422
    %v434 = vmul.f32 %v337, %v422
    %v435 = vmul.f32 %v341, %v422
    %v436 = vmul.f32 %v345, %v422
    %v437 = vmul.f32 %v349, %v422
    %v438 = vmul.f32 %v353, %v422
    %v439 = vmul.f32 %v357, %v422
    %v440 = vmul.f32 %v361, %v422
    %v441 = vmul.f32 %v365, %v422
    %v442 = vmul.f32 %v369, %v422
    %v443 = vmul.f32 %v373, %v422
    %v444 = vmul.f32 %v377, %v422
    %v445 = vmul.f32 %v381, %v422
    %v446 = vmul.f32 %v385, %v422
    %v447 = vmul.f32 %v389, %v422
    %v448 = vmul.f32 %v393, %v422
    %v449 = vmul.f32 %v397, %v422
    %v450 = vmul.f32 %v401, %v422
    %v451 = vmul.f32 %v405, %v422
    %v452 = vmul.f32 %v409, %v422
    %v453 = vmul.f32 %v413, %v422
    %v454 = vmul.f32 %v417, %v422
    %v455 = vadd.f32 %v259, %v423
    %v456 = vadd.f32 %v260, %v424
    %v457 = vadd.f32 %v261, %v425
    %v458 = vadd.f32 %v262, %v426
    %v459 = vadd.f32 %v263, %v427
    %v460 = vadd.f32 %v264, %v428
    %v461 = vadd.f32 %v265, %v429
    %v462 = vadd.f32 %v266, %v430
    %v463 = vadd.f32 %v267, %v431
    %v464 = vadd.f32 %v268, %v432
    %v465 = vadd.f32 %v269, %v433
    %v466 = vadd.f32 %v270, %v434
    %v467 = vadd.f32 %v271, %v435
    %v468 = vadd.f32 %v272, %v436
    %v469 = vadd.f32 %v273, %v437
    %v470 = vadd.f32 %v274, %v438
    %v471 = vadd.f32 %v275, %v439
    %v472 = vadd.f32 %v276, %v440
    %v473 = vadd.f32 %v277, %v441
    %v474 = vadd.f32 %v278, %v442
    %v475 = vadd.f32 %v279, %v443
    %v476 = vadd.f32 %v280, %v444
    %v477 = vadd.f32 %v281, %v445
    %v478 = vadd.f32 %v282, %v446
    %v479 = vadd.f32 %v283, %v447
    %v480 = vadd.f32 %v284, %v448
    %v481 = vadd.f32 %v285, %v449
    %v482 = vadd.f32 %v286, %v450
    %v483 = vadd.f32 %v287, %v451
    %v484 = vadd.f32 %v288, %v452
    %v485 = vadd.f32 %v289, %v453
    %v486 = vadd.f32 %v290, %v454
    %487 = vset.pattern.permute.xlu0 2
    %488 = vperm.xlu0 %487, %v61
    %v489 = vpop.permute.xlu0 %488
    %491 = vset.pattern.permute.xlu0 2
    %492 = vperm.xlu0 %491, %v62
    %v493 = vpop.permute.xlu0 %492
    %495 = vset.pattern.permute.xlu0 2
    %496 = vperm.xlu0 %495, %v63
    %v497 = vpop.permute.xlu0 %496
    %499 = vset.pattern.permute.xlu0 2
    %500 = vperm.xlu0 %499, %v64
    %v501 = vpop.permute.xlu0 %500
    %503 = vset.pattern.permute.xlu0 2
    %504 = vperm.xlu0 %503, %v65
    %v505 = vpop.permute.xlu0 %504
    %507 = vset.pattern.permute.xlu0 2
    %508 = vperm.xlu0 %507, %v66
    %v509 = vpop.permute.xlu0 %508
    %511 = vset.pattern.permute.xlu0 2
    %512 = vperm.xlu0 %511, %v67
    %v513 = vpop.permute.xlu0 %512
    %515 = vset.pattern.permute.xlu0 2
    %516 = vperm.xlu0 %515, %v68
    %v517 = vpop.permute.xlu0 %516
    %519 = vset.pattern.permute.xlu0 2
    %520 = vperm.xlu0 %519, %v69
    %v521 = vpop.permute.xlu0 %520
    %523 = vset.pattern.permute.xlu0 2
    %524 = vperm.xlu0 %523, %v70
    %v525 = vpop.permute.xlu0 %524
    %527 = vset.pattern.permute.xlu0 2
    %528 = vperm.xlu0 %527, %v71
    %v529 = vpop.permute.xlu0 %528
    %531 = vset.pattern.permute.xlu0 2
    %532 = vperm.xlu0 %531, %v72
    %v533 = vpop.permute.xlu0 %532
    %535 = vset.pattern.permute.xlu0 2
    %536 = vperm.xlu0 %535, %v73
    %v537 = vpop.permute.xlu0 %536
    %539 = vset.pattern.permute.xlu0 2
    %540 = vperm.xlu0 %539, %v74
    %v541 = vpop.permute.xlu0 %540
    %543 = vset.pattern.permute.xlu0 2
    %544 = vperm.xlu0 %543, %v75
    %v545 = vpop.permute.xlu0 %544
    %547 = vset.pattern.permute.xlu0 2
    %548 = vperm.xlu0 %547, %v76
    %v549 = vpop.permute.xlu0 %548
    %551 = vset.pattern.permute.xlu0 2
    %552 = vperm.xlu0 %551, %v77
    %v553 = vpop.permute.xlu0 %552
    %555 = vset.pattern.permute.xlu0 2
    %556 = vperm.xlu0 %555, %v78
    %v557 = vpop.permute.xlu0 %556
    %559 = vset.pattern.permute.xlu0 2
    %560 = vperm.xlu0 %559, %v79
    %v561 = vpop.permute.xlu0 %560
    %563 = vset.pattern.permute.xlu0 2
    %564 = vperm.xlu0 %563, %v80
    %v565 = vpop.permute.xlu0 %564
    %567 = vset.pattern.permute.xlu0 2
    %568 = vperm.xlu0 %567, %v81
    %v569 = vpop.permute.xlu0 %568
    %571 = vset.pattern.permute.xlu0 2
    %572 = vperm.xlu0 %571, %v82
    %v573 = vpop.permute.xlu0 %572
    %575 = vset.pattern.permute.xlu0 2
    %576 = vperm.xlu0 %575, %v83
    %v577 = vpop.permute.xlu0 %576
    %579 = vset.pattern.permute.xlu0 2
    %580 = vperm.xlu0 %579, %v84
    %v581 = vpop.permute.xlu0 %580
    %583 = vset.pattern.permute.xlu0 2
    %584 = vperm.xlu0 %583, %v85
    %v585 = vpop.permute.xlu0 %584
    %587 = vset.pattern.permute.xlu0 2
    %588 = vperm.xlu0 %587, %v86
    %v589 = vpop.permute.xlu0 %588
    %591 = vset.pattern.permute.xlu0 2
    %592 = vperm.xlu0 %591, %v87
    %v593 = vpop.permute.xlu0 %592
    %595 = vset.pattern.permute.xlu0 2
    %596 = vperm.xlu0 %595, %v88
    %v597 = vpop.permute.xlu0 %596
    %599 = vset.pattern.permute.xlu0 2
    %600 = vperm.xlu0 %599, %v89
    %v601 = vpop.permute.xlu0 %600
    %603 = vset.pattern.permute.xlu0 2
    %604 = vperm.xlu0 %603, %v90
    %v605 = vpop.permute.xlu0 %604
    %607 = vset.pattern.permute.xlu0 2
    %608 = vperm.xlu0 %607, %v91
    %v609 = vpop.permute.xlu0 %608
    %611 = vset.pattern.permute.xlu0 2
    %612 = vperm.xlu0 %611, %v92
    %v613 = vpop.permute.xlu0 %612
    %v615 = vlaneseq
    %v616 = vshrl.u32 %v615, 7
    %v617 = vsub.s32 2, %v616
    %v618 = vrot.slane %v93, %v617
    %v619 = vmul.f32 %v489, %v618
    %v620 = vmul.f32 %v493, %v618
    %v621 = vmul.f32 %v497, %v618
    %v622 = vmul.f32 %v501, %v618
    %v623 = vmul.f32 %v505, %v618
    %v624 = vmul.f32 %v509, %v618
    %v625 = vmul.f32 %v513, %v618
    %v626 = vmul.f32 %v517, %v618
    %v627 = vmul.f32 %v521, %v618
    %v628 = vmul.f32 %v525, %v618
    %v629 = vmul.f32 %v529, %v618
    %v630 = vmul.f32 %v533, %v618
    %v631 = vmul.f32 %v537, %v618
    %v632 = vmul.f32 %v541, %v618
    %v633 = vmul.f32 %v545, %v618
    %v634 = vmul.f32 %v549, %v618
    %v635 = vmul.f32 %v553, %v618
    %v636 = vmul.f32 %v557, %v618
    %v637 = vmul.f32 %v561, %v618
    %v638 = vmul.f32 %v565, %v618
    %v639 = vmul.f32 %v569, %v618
    %v640 = vmul.f32 %v573, %v618
    %v641 = vmul.f32 %v577, %v618
    %v642 = vmul.f32 %v581, %v618
    %v643 = vmul.f32 %v585, %v618
    %v644 = vmul.f32 %v589, %v618
    %v645 = vmul.f32 %v593, %v618
    %v646 = vmul.f32 %v597, %v618
    %v647 = vmul.f32 %v601, %v618
    %v648 = vmul.f32 %v605, %v618
    %v649 = vmul.f32 %v609, %v618
    %v650 = vmul.f32 %v613, %v618
    %v651 = vadd.f32 %v455, %v619
    %v652 = vadd.f32 %v456, %v620
    %v653 = vadd.f32 %v457, %v621
    %v654 = vadd.f32 %v458, %v622
    %v655 = vadd.f32 %v459, %v623
    %v656 = vadd.f32 %v460, %v624
    %v657 = vadd.f32 %v461, %v625
    %v658 = vadd.f32 %v462, %v626
    %v659 = vadd.f32 %v463, %v627
    %v660 = vadd.f32 %v464, %v628
    %v661 = vadd.f32 %v465, %v629
    %v662 = vadd.f32 %v466, %v630
    %v663 = vadd.f32 %v467, %v631
    %v664 = vadd.f32 %v468, %v632
    %v665 = vadd.f32 %v469, %v633
    %v666 = vadd.f32 %v470, %v634
    %v667 = vadd.f32 %v471, %v635
    %v668 = vadd.f32 %v472, %v636
    %v669 = vadd.f32 %v473, %v637
    %v670 = vadd.f32 %v474, %v638
    %v671 = vadd.f32 %v475, %v639
    %v672 = vadd.f32 %v476, %v640
    %v673 = vadd.f32 %v477, %v641
    %v674 = vadd.f32 %v478, %v642
    %v675 = vadd.f32 %v479, %v643
    %v676 = vadd.f32 %v480, %v644
    %v677 = vadd.f32 %v481, %v645
    %v678 = vadd.f32 %v482, %v646
    %v679 = vadd.f32 %v483, %v647
    %v680 = vadd.f32 %v484, %v648
    %v681 = vadd.f32 %v485, %v649
    %v682 = vadd.f32 %v486, %v650
    %683 = vset.pattern.permute.xlu0 3
    %684 = vperm.xlu0 %683, %v61
    %v685 = vpop.permute.xlu0 %684
    %687 = vset.pattern.permute.xlu0 3
    %688 = vperm.xlu0 %687, %v62
    %v689 = vpop.permute.xlu0 %688
    %691 = vset.pattern.permute.xlu0 3
    %692 = vperm.xlu0 %691, %v63
    %v693 = vpop.permute.xlu0 %692
    %695 = vset.pattern.permute.xlu0 3
    %696 = vperm.xlu0 %695, %v64
    %v697 = vpop.permute.xlu0 %696
    %699 = vset.pattern.permute.xlu0 3
    %700 = vperm.xlu0 %699, %v65
    %v701 = vpop.permute.xlu0 %700
    %703 = vset.pattern.permute.xlu0 3
    %704 = vperm.xlu0 %703, %v66
    %v705 = vpop.permute.xlu0 %704
    %707 = vset.pattern.permute.xlu0 3
    %708 = vperm.xlu0 %707, %v67
    %v709 = vpop.permute.xlu0 %708
    %711 = vset.pattern.permute.xlu0 3
    %712 = vperm.xlu0 %711, %v68
    %v713 = vpop.permute.xlu0 %712
    %715 = vset.pattern.permute.xlu0 3
    %716 = vperm.xlu0 %715, %v69
    %v717 = vpop.permute.xlu0 %716
    %719 = vset.pattern.permute.xlu0 3
    %720 = vperm.xlu0 %719, %v70
    %v721 = vpop.permute.xlu0 %720
    %723 = vset.pattern.permute.xlu0 3
    %724 = vperm.xlu0 %723, %v71
    %v725 = vpop.permute.xlu0 %724
    %727 = vset.pattern.permute.xlu0 3
    %728 = vperm.xlu0 %727, %v72
    %v729 = vpop.permute.xlu0 %728
    %731 = vset.pattern.permute.xlu0 3
    %732 = vperm.xlu0 %731, %v73
    %v733 = vpop.permute.xlu0 %732
    %735 = vset.pattern.permute.xlu0 3
    %736 = vperm.xlu0 %735, %v74
    %v737 = vpop.permute.xlu0 %736
    %739 = vset.pattern.permute.xlu0 3
    %740 = vperm.xlu0 %739, %v75
    %v741 = vpop.permute.xlu0 %740
    %743 = vset.pattern.permute.xlu0 3
    %744 = vperm.xlu0 %743, %v76
    %v745 = vpop.permute.xlu0 %744
    %747 = vset.pattern.permute.xlu0 3
    %748 = vperm.xlu0 %747, %v77
    %v749 = vpop.permute.xlu0 %748
    %751 = vset.pattern.permute.xlu0 3
    %752 = vperm.xlu0 %751, %v78
    %v753 = vpop.permute.xlu0 %752
    %755 = vset.pattern.permute.xlu0 3
    %756 = vperm.xlu0 %755, %v79
    %v757 = vpop.permute.xlu0 %756
    %759 = vset.pattern.permute.xlu0 3
    %760 = vperm.xlu0 %759, %v80
    %v761 = vpop.permute.xlu0 %760
    %763 = vset.pattern.permute.xlu0 3
    %764 = vperm.xlu0 %763, %v81
    %v765 = vpop.permute.xlu0 %764
    %767 = vset.pattern.permute.xlu0 3
    %768 = vperm.xlu0 %767, %v82
    %v769 = vpop.permute.xlu0 %768
    %771 = vset.pattern.permute.xlu0 3
    %772 = vperm.xlu0 %771, %v83
    %v773 = vpop.permute.xlu0 %772
    %775 = vset.pattern.permute.xlu0 3
    %776 = vperm.xlu0 %775, %v84
    %v777 = vpop.permute.xlu0 %776
    %779 = vset.pattern.permute.xlu0 3
    %780 = vperm.xlu0 %779, %v85
    %v781 = vpop.permute.xlu0 %780
    %783 = vset.pattern.permute.xlu0 3
    %784 = vperm.xlu0 %783, %v86
    %v785 = vpop.permute.xlu0 %784
    %787 = vset.pattern.permute.xlu0 3
    %788 = vperm.xlu0 %787, %v87
    %v789 = vpop.permute.xlu0 %788
    %791 = vset.pattern.permute.xlu0 3
    %792 = vperm.xlu0 %791, %v88
    %v793 = vpop.permute.xlu0 %792
    %795 = vset.pattern.permute.xlu0 3
    %796 = vperm.xlu0 %795, %v89
    %v797 = vpop.permute.xlu0 %796
    %799 = vset.pattern.permute.xlu0 3
    %800 = vperm.xlu0 %799, %v90
    %v801 = vpop.permute.xlu0 %800
    %803 = vset.pattern.permute.xlu0 3
    %804 = vperm.xlu0 %803, %v91
    %v805 = vpop.permute.xlu0 %804
    %807 = vset.pattern.permute.xlu0 3
    %808 = vperm.xlu0 %807, %v92
    %v809 = vpop.permute.xlu0 %808
    %v811 = vlaneseq
    %v812 = vshrl.u32 %v811, 7
    %v813 = vsub.s32 3, %v812
    %v814 = vrot.slane %v93, %v813
    %v815 = vmul.f32 %v685, %v814
    %v816 = vmul.f32 %v689, %v814
    %v817 = vmul.f32 %v693, %v814
    %v818 = vmul.f32 %v697, %v814
    %v819 = vmul.f32 %v701, %v814
    %v820 = vmul.f32 %v705, %v814
    %v821 = vmul.f32 %v709, %v814
    %v822 = vmul.f32 %v713, %v814
    %v823 = vmul.f32 %v717, %v814
    %v824 = vmul.f32 %v721, %v814
    %v825 = vmul.f32 %v725, %v814
    %v826 = vmul.f32 %v729, %v814
    %v827 = vmul.f32 %v733, %v814
    %v828 = vmul.f32 %v737, %v814
    %v829 = vmul.f32 %v741, %v814
    %v830 = vmul.f32 %v745, %v814
    %v831 = vmul.f32 %v749, %v814
    %v832 = vmul.f32 %v753, %v814
    %v833 = vmul.f32 %v757, %v814
    %v834 = vmul.f32 %v761, %v814
    %v835 = vmul.f32 %v765, %v814
    %v836 = vmul.f32 %v769, %v814
    %v837 = vmul.f32 %v773, %v814
    %v838 = vmul.f32 %v777, %v814
    %v839 = vmul.f32 %v781, %v814
    %v840 = vmul.f32 %v785, %v814
    %v841 = vmul.f32 %v789, %v814
    %v842 = vmul.f32 %v793, %v814
    %v843 = vmul.f32 %v797, %v814
    %v844 = vmul.f32 %v801, %v814
    %v845 = vmul.f32 %v805, %v814
    %v846 = vmul.f32 %v809, %v814
    %v847 = vadd.f32 %v651, %v815
    %v848 = vadd.f32 %v652, %v816
    %v849 = vadd.f32 %v653, %v817
    %v850 = vadd.f32 %v654, %v818
    %v851 = vadd.f32 %v655, %v819
    %v852 = vadd.f32 %v656, %v820
    %v853 = vadd.f32 %v657, %v821
    %v854 = vadd.f32 %v658, %v822
    %v855 = vadd.f32 %v659, %v823
    %v856 = vadd.f32 %v660, %v824
    %v857 = vadd.f32 %v661, %v825
    %v858 = vadd.f32 %v662, %v826
    %v859 = vadd.f32 %v663, %v827
    %v860 = vadd.f32 %v664, %v828
    %v861 = vadd.f32 %v665, %v829
    %v862 = vadd.f32 %v666, %v830
    %v863 = vadd.f32 %v667, %v831
    %v864 = vadd.f32 %v668, %v832
    %v865 = vadd.f32 %v669, %v833
    %v866 = vadd.f32 %v670, %v834
    %v867 = vadd.f32 %v671, %v835
    %v868 = vadd.f32 %v672, %v836
    %v869 = vadd.f32 %v673, %v837
    %v870 = vadd.f32 %v674, %v838
    %v871 = vadd.f32 %v675, %v839
    %v872 = vadd.f32 %v676, %v840
    %v873 = vadd.f32 %v677, %v841
    %v874 = vadd.f32 %v678, %v842
    %v875 = vadd.f32 %v679, %v843
    %v876 = vadd.f32 %v680, %v844
    %v877 = vadd.f32 %v681, %v845
    %v878 = vadd.f32 %v682, %v846
    %879 = vset.pattern.permute.xlu0 4
    %880 = vperm.xlu0 %879, %v61
    %v881 = vpop.permute.xlu0 %880
    %883 = vset.pattern.permute.xlu0 4
    %884 = vperm.xlu0 %883, %v62
    %v885 = vpop.permute.xlu0 %884
    %887 = vset.pattern.permute.xlu0 4
    %888 = vperm.xlu0 %887, %v63
    %v889 = vpop.permute.xlu0 %888
    %891 = vset.pattern.permute.xlu0 4
    %892 = vperm.xlu0 %891, %v64
    %v893 = vpop.permute.xlu0 %892
    %895 = vset.pattern.permute.xlu0 4
    %896 = vperm.xlu0 %895, %v65
    %v897 = vpop.permute.xlu0 %896
    %899 = vset.pattern.permute.xlu0 4
    %900 = vperm.xlu0 %899, %v66
    %v901 = vpop.permute.xlu0 %900
    %903 = vset.pattern.permute.xlu0 4
    %904 = vperm.xlu0 %903, %v67
    %v905 = vpop.permute.xlu0 %904
    %907 = vset.pattern.permute.xlu0 4
    %908 = vperm.xlu0 %907, %v68
    %v909 = vpop.permute.xlu0 %908
    %911 = vset.pattern.permute.xlu0 4
    %912 = vperm.xlu0 %911, %v69
    %v913 = vpop.permute.xlu0 %912
    %915 = vset.pattern.permute.xlu0 4
    %916 = vperm.xlu0 %915, %v70
    %v917 = vpop.permute.xlu0 %916
    %919 = vset.pattern.permute.xlu0 4
    %920 = vperm.xlu0 %919, %v71
    %v921 = vpop.permute.xlu0 %920
    %923 = vset.pattern.permute.xlu0 4
    %924 = vperm.xlu0 %923, %v72
    %v925 = vpop.permute.xlu0 %924
    %927 = vset.pattern.permute.xlu0 4
    %928 = vperm.xlu0 %927, %v73
    %v929 = vpop.permute.xlu0 %928
    %931 = vset.pattern.permute.xlu0 4
    %932 = vperm.xlu0 %931, %v74
    %v933 = vpop.permute.xlu0 %932
    %935 = vset.pattern.permute.xlu0 4
    %936 = vperm.xlu0 %935, %v75
    %v937 = vpop.permute.xlu0 %936
    %939 = vset.pattern.permute.xlu0 4
    %940 = vperm.xlu0 %939, %v76
    %v941 = vpop.permute.xlu0 %940
    %943 = vset.pattern.permute.xlu0 4
    %944 = vperm.xlu0 %943, %v77
    %v945 = vpop.permute.xlu0 %944
    %947 = vset.pattern.permute.xlu0 4
    %948 = vperm.xlu0 %947, %v78
    %v949 = vpop.permute.xlu0 %948
    %951 = vset.pattern.permute.xlu0 4
    %952 = vperm.xlu0 %951, %v79
    %v953 = vpop.permute.xlu0 %952
    %955 = vset.pattern.permute.xlu0 4
    %956 = vperm.xlu0 %955, %v80
    %v957 = vpop.permute.xlu0 %956
    %959 = vset.pattern.permute.xlu0 4
    %960 = vperm.xlu0 %959, %v81
    %v961 = vpop.permute.xlu0 %960
    %963 = vset.pattern.permute.xlu0 4
    %964 = vperm.xlu0 %963, %v82
    %v965 = vpop.permute.xlu0 %964
    %967 = vset.pattern.permute.xlu0 4
    %968 = vperm.xlu0 %967, %v83
    %v969 = vpop.permute.xlu0 %968
    %971 = vset.pattern.permute.xlu0 4
    %972 = vperm.xlu0 %971, %v84
    %v973 = vpop.permute.xlu0 %972
    %975 = vset.pattern.permute.xlu0 4
    %976 = vperm.xlu0 %975, %v85
    %v977 = vpop.permute.xlu0 %976
    %979 = vset.pattern.permute.xlu0 4
    %980 = vperm.xlu0 %979, %v86
    %v981 = vpop.permute.xlu0 %980
    %983 = vset.pattern.permute.xlu0 4
    %984 = vperm.xlu0 %983, %v87
    %v985 = vpop.permute.xlu0 %984
    %987 = vset.pattern.permute.xlu0 4
    %988 = vperm.xlu0 %987, %v88
    %v989 = vpop.permute.xlu0 %988
    %991 = vset.pattern.permute.xlu0 4
    %992 = vperm.xlu0 %991, %v89
    %v993 = vpop.permute.xlu0 %992
    %995 = vset.pattern.permute.xlu0 4
    %996 = vperm.xlu0 %995, %v90
    %v997 = vpop.permute.xlu0 %996
    %999 = vset.pattern.permute.xlu0 4
    %1000 = vperm.xlu0 %999, %v91
    %v1001 = vpop.permute.xlu0 %1000
    %1003 = vset.pattern.permute.xlu0 4
    %1004 = vperm.xlu0 %1003, %v92
    %v1005 = vpop.permute.xlu0 %1004
    %v1007 = vlaneseq
    %v1008 = vshrl.u32 %v1007, 7
    %v1009 = vsub.s32 4, %v1008
    %v1010 = vrot.slane %v93, %v1009
    %v1011 = vmul.f32 %v881, %v1010
    %v1012 = vmul.f32 %v885, %v1010
    %v1013 = vmul.f32 %v889, %v1010
    %v1014 = vmul.f32 %v893, %v1010
    %v1015 = vmul.f32 %v897, %v1010
    %v1016 = vmul.f32 %v901, %v1010
    %v1017 = vmul.f32 %v905, %v1010
    %v1018 = vmul.f32 %v909, %v1010
    %v1019 = vmul.f32 %v913, %v1010
    %v1020 = vmul.f32 %v917, %v1010
    %v1021 = vmul.f32 %v921, %v1010
    %v1022 = vmul.f32 %v925, %v1010
    %v1023 = vmul.f32 %v929, %v1010
    %v1024 = vmul.f32 %v933, %v1010
    %v1025 = vmul.f32 %v937, %v1010
    %v1026 = vmul.f32 %v941, %v1010
    %v1027 = vmul.f32 %v945, %v1010
    %v1028 = vmul.f32 %v949, %v1010
    %v1029 = vmul.f32 %v953, %v1010
    %v1030 = vmul.f32 %v957, %v1010
    %v1031 = vmul.f32 %v961, %v1010
    %v1032 = vmul.f32 %v965, %v1010
    %v1033 = vmul.f32 %v969, %v1010
    %v1034 = vmul.f32 %v973, %v1010
    %v1035 = vmul.f32 %v977, %v1010
    %v1036 = vmul.f32 %v981, %v1010
    %v1037 = vmul.f32 %v985, %v1010
    %v1038 = vmul.f32 %v989, %v1010
    %v1039 = vmul.f32 %v993, %v1010
    %v1040 = vmul.f32 %v997, %v1010
    %v1041 = vmul.f32 %v1001, %v1010
    %v1042 = vmul.f32 %v1005, %v1010
    %v1043 = vadd.f32 %v847, %v1011
    %v1044 = vadd.f32 %v848, %v1012
    %v1045 = vadd.f32 %v849, %v1013
    %v1046 = vadd.f32 %v850, %v1014
    %v1047 = vadd.f32 %v851, %v1015
    %v1048 = vadd.f32 %v852, %v1016
    %v1049 = vadd.f32 %v853, %v1017
    %v1050 = vadd.f32 %v854, %v1018
    %v1051 = vadd.f32 %v855, %v1019
    %v1052 = vadd.f32 %v856, %v1020
    %v1053 = vadd.f32 %v857, %v1021
    %v1054 = vadd.f32 %v858, %v1022
    %v1055 = vadd.f32 %v859, %v1023
    %v1056 = vadd.f32 %v860, %v1024
    %v1057 = vadd.f32 %v861, %v1025
    %v1058 = vadd.f32 %v862, %v1026
    %v1059 = vadd.f32 %v863, %v1027
    %v1060 = vadd.f32 %v864, %v1028
    %v1061 = vadd.f32 %v865, %v1029
    %v1062 = vadd.f32 %v866, %v1030
    %v1063 = vadd.f32 %v867, %v1031
    %v1064 = vadd.f32 %v868, %v1032
    %v1065 = vadd.f32 %v869, %v1033
    %v1066 = vadd.f32 %v870, %v1034
    %v1067 = vadd.f32 %v871, %v1035
    %v1068 = vadd.f32 %v872, %v1036
    %v1069 = vadd.f32 %v873, %v1037
    %v1070 = vadd.f32 %v874, %v1038
    %v1071 = vadd.f32 %v875, %v1039
    %v1072 = vadd.f32 %v876, %v1040
    %v1073 = vadd.f32 %v877, %v1041
    %v1074 = vadd.f32 %v878, %v1042
    %1075 = vset.pattern.permute.xlu0 5
    %1076 = vperm.xlu0 %1075, %v61
    %v1077 = vpop.permute.xlu0 %1076
    %1079 = vset.pattern.permute.xlu0 5
    %1080 = vperm.xlu0 %1079, %v62
    %v1081 = vpop.permute.xlu0 %1080
    %1083 = vset.pattern.permute.xlu0 5
    %1084 = vperm.xlu0 %1083, %v63
    %v1085 = vpop.permute.xlu0 %1084
    %1087 = vset.pattern.permute.xlu0 5
    %1088 = vperm.xlu0 %1087, %v64
    %v1089 = vpop.permute.xlu0 %1088
    %1091 = vset.pattern.permute.xlu0 5
    %1092 = vperm.xlu0 %1091, %v65
    %v1093 = vpop.permute.xlu0 %1092
    %1095 = vset.pattern.permute.xlu0 5
    %1096 = vperm.xlu0 %1095, %v66
    %v1097 = vpop.permute.xlu0 %1096
    %1099 = vset.pattern.permute.xlu0 5
    %1100 = vperm.xlu0 %1099, %v67
    %v1101 = vpop.permute.xlu0 %1100
    %1103 = vset.pattern.permute.xlu0 5
    %1104 = vperm.xlu0 %1103, %v68
    %v1105 = vpop.permute.xlu0 %1104
    %1107 = vset.pattern.permute.xlu0 5
    %1108 = vperm.xlu0 %1107, %v69
    %v1109 = vpop.permute.xlu0 %1108
    %1111 = vset.pattern.permute.xlu0 5
    %1112 = vperm.xlu0 %1111, %v70
    %v1113 = vpop.permute.xlu0 %1112
    %1115 = vset.pattern.permute.xlu0 5
    %1116 = vperm.xlu0 %1115, %v71
    %v1117 = vpop.permute.xlu0 %1116
    %1119 = vset.pattern.permute.xlu0 5
    %1120 = vperm.xlu0 %1119, %v72
    %v1121 = vpop.permute.xlu0 %1120
    %1123 = vset.pattern.permute.xlu0 5
    %1124 = vperm.xlu0 %1123, %v73
    %v1125 = vpop.permute.xlu0 %1124
    %1127 = vset.pattern.permute.xlu0 5
    %1128 = vperm.xlu0 %1127, %v74
    %v1129 = vpop.permute.xlu0 %1128
    %1131 = vset.pattern.permute.xlu0 5
    %1132 = vperm.xlu0 %1131, %v75
    %v1133 = vpop.permute.xlu0 %1132
    %1135 = vset.pattern.permute.xlu0 5
    %1136 = vperm.xlu0 %1135, %v76
    %v1137 = vpop.permute.xlu0 %1136
    %1139 = vset.pattern.permute.xlu0 5
    %1140 = vperm.xlu0 %1139, %v77
    %v1141 = vpop.permute.xlu0 %1140
    %1143 = vset.pattern.permute.xlu0 5
    %1144 = vperm.xlu0 %1143, %v78
    %v1145 = vpop.permute.xlu0 %1144
    %1147 = vset.pattern.permute.xlu0 5
    %1148 = vperm.xlu0 %1147, %v79
    %v1149 = vpop.permute.xlu0 %1148
    %1151 = vset.pattern.permute.xlu0 5
    %1152 = vperm.xlu0 %1151, %v80
    %v1153 = vpop.permute.xlu0 %1152
    %1155 = vset.pattern.permute.xlu0 5
    %1156 = vperm.xlu0 %1155, %v81
    %v1157 = vpop.permute.xlu0 %1156
    %1159 = vset.pattern.permute.xlu0 5
    %1160 = vperm.xlu0 %1159, %v82
    %v1161 = vpop.permute.xlu0 %1160
    %1163 = vset.pattern.permute.xlu0 5
    %1164 = vperm.xlu0 %1163, %v83
    %v1165 = vpop.permute.xlu0 %1164
    %1167 = vset.pattern.permute.xlu0 5
    %1168 = vperm.xlu0 %1167, %v84
    %v1169 = vpop.permute.xlu0 %1168
    %1171 = vset.pattern.permute.xlu0 5
    %1172 = vperm.xlu0 %1171, %v85
    %v1173 = vpop.permute.xlu0 %1172
    %1175 = vset.pattern.permute.xlu0 5
    %1176 = vperm.xlu0 %1175, %v86
    %v1177 = vpop.permute.xlu0 %1176
    %1179 = vset.pattern.permute.xlu0 5
    %1180 = vperm.xlu0 %1179, %v87
    %v1181 = vpop.permute.xlu0 %1180
    %1183 = vset.pattern.permute.xlu0 5
    %1184 = vperm.xlu0 %1183, %v88
    %v1185 = vpop.permute.xlu0 %1184
    %1187 = vset.pattern.permute.xlu0 5
    %1188 = vperm.xlu0 %1187, %v89
    %v1189 = vpop.permute.xlu0 %1188
    %1191 = vset.pattern.permute.xlu0 5
    %1192 = vperm.xlu0 %1191, %v90
    %v1193 = vpop.permute.xlu0 %1192
    %1195 = vset.pattern.permute.xlu0 5
    %1196 = vperm.xlu0 %1195, %v91
    %v1197 = vpop.permute.xlu0 %1196
    %1199 = vset.pattern.permute.xlu0 5
    %1200 = vperm.xlu0 %1199, %v92
    %v1201 = vpop.permute.xlu0 %1200
    %v1203 = vlaneseq
    %v1204 = vshrl.u32 %v1203, 7
    %v1205 = vsub.s32 5, %v1204
    %v1206 = vrot.slane %v93, %v1205
    %v1207 = vmul.f32 %v1077, %v1206
    %v1208 = vmul.f32 %v1081, %v1206
    %v1209 = vmul.f32 %v1085, %v1206
    %v1210 = vmul.f32 %v1089, %v1206
    %v1211 = vmul.f32 %v1093, %v1206
    %v1212 = vmul.f32 %v1097, %v1206
    %v1213 = vmul.f32 %v1101, %v1206
    %v1214 = vmul.f32 %v1105, %v1206
    %v1215 = vmul.f32 %v1109, %v1206
    %v1216 = vmul.f32 %v1113, %v1206
    %v1217 = vmul.f32 %v1117, %v1206
    %v1218 = vmul.f32 %v1121, %v1206
    %v1219 = vmul.f32 %v1125, %v1206
    %v1220 = vmul.f32 %v1129, %v1206
    %v1221 = vmul.f32 %v1133, %v1206
    %v1222 = vmul.f32 %v1137, %v1206
    %v1223 = vmul.f32 %v1141, %v1206
    %v1224 = vmul.f32 %v1145, %v1206
    %v1225 = vmul.f32 %v1149, %v1206
    %v1226 = vmul.f32 %v1153, %v1206
    %v1227 = vmul.f32 %v1157, %v1206
    %v1228 = vmul.f32 %v1161, %v1206
    %v1229 = vmul.f32 %v1165, %v1206
    %v1230 = vmul.f32 %v1169, %v1206
    %v1231 = vmul.f32 %v1173, %v1206
    %v1232 = vmul.f32 %v1177, %v1206
    %v1233 = vmul.f32 %v1181, %v1206
    %v1234 = vmul.f32 %v1185, %v1206
    %v1235 = vmul.f32 %v1189, %v1206
    %v1236 = vmul.f32 %v1193, %v1206
    %v1237 = vmul.f32 %v1197, %v1206
    %v1238 = vmul.f32 %v1201, %v1206
    %v1239 = vadd.f32 %v1043, %v1207
    %v1240 = vadd.f32 %v1044, %v1208
    %v1241 = vadd.f32 %v1045, %v1209
    %v1242 = vadd.f32 %v1046, %v1210
    %v1243 = vadd.f32 %v1047, %v1211
    %v1244 = vadd.f32 %v1048, %v1212
    %v1245 = vadd.f32 %v1049, %v1213
    %v1246 = vadd.f32 %v1050, %v1214
    %v1247 = vadd.f32 %v1051, %v1215
    %v1248 = vadd.f32 %v1052, %v1216
    %v1249 = vadd.f32 %v1053, %v1217
    %v1250 = vadd.f32 %v1054, %v1218
    %v1251 = vadd.f32 %v1055, %v1219
    %v1252 = vadd.f32 %v1056, %v1220
    %v1253 = vadd.f32 %v1057, %v1221
    %v1254 = vadd.f32 %v1058, %v1222
    %v1255 = vadd.f32 %v1059, %v1223
    %v1256 = vadd.f32 %v1060, %v1224
    %v1257 = vadd.f32 %v1061, %v1225
    %v1258 = vadd.f32 %v1062, %v1226
    %v1259 = vadd.f32 %v1063, %v1227
    %v1260 = vadd.f32 %v1064, %v1228
    %v1261 = vadd.f32 %v1065, %v1229
    %v1262 = vadd.f32 %v1066, %v1230
    %v1263 = vadd.f32 %v1067, %v1231
    %v1264 = vadd.f32 %v1068, %v1232
    %v1265 = vadd.f32 %v1069, %v1233
    %v1266 = vadd.f32 %v1070, %v1234
    %v1267 = vadd.f32 %v1071, %v1235
    %v1268 = vadd.f32 %v1072, %v1236
    %v1269 = vadd.f32 %v1073, %v1237
    %v1270 = vadd.f32 %v1074, %v1238
    %1271 = vset.pattern.permute.xlu0 6
    %1272 = vperm.xlu0 %1271, %v61
    %v1273 = vpop.permute.xlu0 %1272
    %1275 = vset.pattern.permute.xlu0 6
    %1276 = vperm.xlu0 %1275, %v62
    %v1277 = vpop.permute.xlu0 %1276
    %1279 = vset.pattern.permute.xlu0 6
    %1280 = vperm.xlu0 %1279, %v63
    %v1281 = vpop.permute.xlu0 %1280
    %1283 = vset.pattern.permute.xlu0 6
    %1284 = vperm.xlu0 %1283, %v64
    %v1285 = vpop.permute.xlu0 %1284
    %1287 = vset.pattern.permute.xlu0 6
    %1288 = vperm.xlu0 %1287, %v65
    %v1289 = vpop.permute.xlu0 %1288
    %1291 = vset.pattern.permute.xlu0 6
    %1292 = vperm.xlu0 %1291, %v66
    %v1293 = vpop.permute.xlu0 %1292
    %1295 = vset.pattern.permute.xlu0 6
    %1296 = vperm.xlu0 %1295, %v67
    %v1297 = vpop.permute.xlu0 %1296
    %1299 = vset.pattern.permute.xlu0 6
    %1300 = vperm.xlu0 %1299, %v68
    %v1301 = vpop.permute.xlu0 %1300
    %1303 = vset.pattern.permute.xlu0 6
    %1304 = vperm.xlu0 %1303, %v69
    %v1305 = vpop.permute.xlu0 %1304
    %1307 = vset.pattern.permute.xlu0 6
    %1308 = vperm.xlu0 %1307, %v70
    %v1309 = vpop.permute.xlu0 %1308
    %1311 = vset.pattern.permute.xlu0 6
    %1312 = vperm.xlu0 %1311, %v71
    %v1313 = vpop.permute.xlu0 %1312
    %1315 = vset.pattern.permute.xlu0 6
    %1316 = vperm.xlu0 %1315, %v72
    %v1317 = vpop.permute.xlu0 %1316
    %1319 = vset.pattern.permute.xlu0 6
    %1320 = vperm.xlu0 %1319, %v73
    %v1321 = vpop.permute.xlu0 %1320
    %1323 = vset.pattern.permute.xlu0 6
    %1324 = vperm.xlu0 %1323, %v74
    %v1325 = vpop.permute.xlu0 %1324
    %1327 = vset.pattern.permute.xlu0 6
    %1328 = vperm.xlu0 %1327, %v75
    %v1329 = vpop.permute.xlu0 %1328
    %1331 = vset.pattern.permute.xlu0 6
    %1332 = vperm.xlu0 %1331, %v76
    %v1333 = vpop.permute.xlu0 %1332
    %1335 = vset.pattern.permute.xlu0 6
    %1336 = vperm.xlu0 %1335, %v77
    %v1337 = vpop.permute.xlu0 %1336
    %1339 = vset.pattern.permute.xlu0 6
    %1340 = vperm.xlu0 %1339, %v78
    %v1341 = vpop.permute.xlu0 %1340
    %1343 = vset.pattern.permute.xlu0 6
    %1344 = vperm.xlu0 %1343, %v79
    %v1345 = vpop.permute.xlu0 %1344
    %1347 = vset.pattern.permute.xlu0 6
    %1348 = vperm.xlu0 %1347, %v80
    %v1349 = vpop.permute.xlu0 %1348
    %1351 = vset.pattern.permute.xlu0 6
    %1352 = vperm.xlu0 %1351, %v81
    %v1353 = vpop.permute.xlu0 %1352
    %1355 = vset.pattern.permute.xlu0 6
    %1356 = vperm.xlu0 %1355, %v82
    %v1357 = vpop.permute.xlu0 %1356
    %1359 = vset.pattern.permute.xlu0 6
    %1360 = vperm.xlu0 %1359, %v83
    %v1361 = vpop.permute.xlu0 %1360
    %1363 = vset.pattern.permute.xlu0 6
    %1364 = vperm.xlu0 %1363, %v84
    %v1365 = vpop.permute.xlu0 %1364
    %1367 = vset.pattern.permute.xlu0 6
    %1368 = vperm.xlu0 %1367, %v85
    %v1369 = vpop.permute.xlu0 %1368
    %1371 = vset.pattern.permute.xlu0 6
    %1372 = vperm.xlu0 %1371, %v86
    %v1373 = vpop.permute.xlu0 %1372
    %1375 = vset.pattern.permute.xlu0 6
    %1376 = vperm.xlu0 %1375, %v87
    %v1377 = vpop.permute.xlu0 %1376
    %1379 = vset.pattern.permute.xlu0 6
    %1380 = vperm.xlu0 %1379, %v88
    %v1381 = vpop.permute.xlu0 %1380
    %1383 = vset.pattern.permute.xlu0 6
    %1384 = vperm.xlu0 %1383, %v89
    %v1385 = vpop.permute.xlu0 %1384
    %1387 = vset.pattern.permute.xlu0 6
    %1388 = vperm.xlu0 %1387, %v90
    %v1389 = vpop.permute.xlu0 %1388
    %1391 = vset.pattern.permute.xlu0 6
    %1392 = vperm.xlu0 %1391, %v91
    %v1393 = vpop.permute.xlu0 %1392
    %1395 = vset.pattern.permute.xlu0 6
    %1396 = vperm.xlu0 %1395, %v92
    %v1397 = vpop.permute.xlu0 %1396
    %v1399 = vlaneseq
    %v1400 = vshrl.u32 %v1399, 7
    %v1401 = vsub.s32 6, %v1400
    %v1402 = vrot.slane %v93, %v1401
    %v1403 = vmul.f32 %v1273, %v1402
    %v1404 = vmul.f32 %v1277, %v1402
    %v1405 = vmul.f32 %v1281, %v1402
    %v1406 = vmul.f32 %v1285, %v1402
    %v1407 = vmul.f32 %v1289, %v1402
    %v1408 = vmul.f32 %v1293, %v1402
    %v1409 = vmul.f32 %v1297, %v1402
    %v1410 = vmul.f32 %v1301, %v1402
    %v1411 = vmul.f32 %v1305, %v1402
    %v1412 = vmul.f32 %v1309, %v1402
    %v1413 = vmul.f32 %v1313, %v1402
    %v1414 = vmul.f32 %v1317, %v1402
    %v1415 = vmul.f32 %v1321, %v1402
    %v1416 = vmul.f32 %v1325, %v1402
    %v1417 = vmul.f32 %v1329, %v1402
    %v1418 = vmul.f32 %v1333, %v1402
    %v1419 = vmul.f32 %v1337, %v1402
    %v1420 = vmul.f32 %v1341, %v1402
    %v1421 = vmul.f32 %v1345, %v1402
    %v1422 = vmul.f32 %v1349, %v1402
    %v1423 = vmul.f32 %v1353, %v1402
    %v1424 = vmul.f32 %v1357, %v1402
    %v1425 = vmul.f32 %v1361, %v1402
    %v1426 = vmul.f32 %v1365, %v1402
    %v1427 = vmul.f32 %v1369, %v1402
    %v1428 = vmul.f32 %v1373, %v1402
    %v1429 = vmul.f32 %v1377, %v1402
    %v1430 = vmul.f32 %v1381, %v1402
    %v1431 = vmul.f32 %v1385, %v1402
    %v1432 = vmul.f32 %v1389, %v1402
    %v1433 = vmul.f32 %v1393, %v1402
    %v1434 = vmul.f32 %v1397, %v1402
    %v1435 = vadd.f32 %v1239, %v1403
    %v1436 = vadd.f32 %v1240, %v1404
    %v1437 = vadd.f32 %v1241, %v1405
    %v1438 = vadd.f32 %v1242, %v1406
    %v1439 = vadd.f32 %v1243, %v1407
    %v1440 = vadd.f32 %v1244, %v1408
    %v1441 = vadd.f32 %v1245, %v1409
    %v1442 = vadd.f32 %v1246, %v1410
    %v1443 = vadd.f32 %v1247, %v1411
    %v1444 = vadd.f32 %v1248, %v1412
    %v1445 = vadd.f32 %v1249, %v1413
    %v1446 = vadd.f32 %v1250, %v1414
    %v1447 = vadd.f32 %v1251, %v1415
    %v1448 = vadd.f32 %v1252, %v1416
    %v1449 = vadd.f32 %v1253, %v1417
    %v1450 = vadd.f32 %v1254, %v1418
    %v1451 = vadd.f32 %v1255, %v1419
    %v1452 = vadd.f32 %v1256, %v1420
    %v1453 = vadd.f32 %v1257, %v1421
    %v1454 = vadd.f32 %v1258, %v1422
    %v1455 = vadd.f32 %v1259, %v1423
    %v1456 = vadd.f32 %v1260, %v1424
    %v1457 = vadd.f32 %v1261, %v1425
    %v1458 = vadd.f32 %v1262, %v1426
    %v1459 = vadd.f32 %v1263, %v1427
    %v1460 = vadd.f32 %v1264, %v1428
    %v1461 = vadd.f32 %v1265, %v1429
    %v1462 = vadd.f32 %v1266, %v1430
    %v1463 = vadd.f32 %v1267, %v1431
    %v1464 = vadd.f32 %v1268, %v1432
    %v1465 = vadd.f32 %v1269, %v1433
    %v1466 = vadd.f32 %v1270, %v1434
    %1467 = vset.pattern.permute.xlu0 7
    %1468 = vperm.xlu0 %1467, %v61
    %v1469 = vpop.permute.xlu0 %1468
    %1471 = vset.pattern.permute.xlu0 7
    %1472 = vperm.xlu0 %1471, %v62
    %v1473 = vpop.permute.xlu0 %1472
    %1475 = vset.pattern.permute.xlu0 7
    %1476 = vperm.xlu0 %1475, %v63
    %v1477 = vpop.permute.xlu0 %1476
    %1479 = vset.pattern.permute.xlu0 7
    %1480 = vperm.xlu0 %1479, %v64
    %v1481 = vpop.permute.xlu0 %1480
    %1483 = vset.pattern.permute.xlu0 7
    %1484 = vperm.xlu0 %1483, %v65
    %v1485 = vpop.permute.xlu0 %1484
    %1487 = vset.pattern.permute.xlu0 7
    %1488 = vperm.xlu0 %1487, %v66
    %v1489 = vpop.permute.xlu0 %1488
    %1491 = vset.pattern.permute.xlu0 7
    %1492 = vperm.xlu0 %1491, %v67
    %v1493 = vpop.permute.xlu0 %1492
    %1495 = vset.pattern.permute.xlu0 7
    %1496 = vperm.xlu0 %1495, %v68
    %v1497 = vpop.permute.xlu0 %1496
    %1499 = vset.pattern.permute.xlu0 7
    %1500 = vperm.xlu0 %1499, %v69
    %v1501 = vpop.permute.xlu0 %1500
    %1503 = vset.pattern.permute.xlu0 7
    %1504 = vperm.xlu0 %1503, %v70
    %v1505 = vpop.permute.xlu0 %1504
    %1507 = vset.pattern.permute.xlu0 7
    %1508 = vperm.xlu0 %1507, %v71
    %v1509 = vpop.permute.xlu0 %1508
    %1511 = vset.pattern.permute.xlu0 7
    %1512 = vperm.xlu0 %1511, %v72
    %v1513 = vpop.permute.xlu0 %1512
    %1515 = vset.pattern.permute.xlu0 7
    %1516 = vperm.xlu0 %1515, %v73
    %v1517 = vpop.permute.xlu0 %1516
    %1519 = vset.pattern.permute.xlu0 7
    %1520 = vperm.xlu0 %1519, %v74
    %v1521 = vpop.permute.xlu0 %1520
    %1523 = vset.pattern.permute.xlu0 7
    %1524 = vperm.xlu0 %1523, %v75
    %v1525 = vpop.permute.xlu0 %1524
    %1527 = vset.pattern.permute.xlu0 7
    %1528 = vperm.xlu0 %1527, %v76
    %v1529 = vpop.permute.xlu0 %1528
    %1531 = vset.pattern.permute.xlu0 7
    %1532 = vperm.xlu0 %1531, %v77
    %v1533 = vpop.permute.xlu0 %1532
    %1535 = vset.pattern.permute.xlu0 7
    %1536 = vperm.xlu0 %1535, %v78
    %v1537 = vpop.permute.xlu0 %1536
    %1539 = vset.pattern.permute.xlu0 7
    %1540 = vperm.xlu0 %1539, %v79
    %v1541 = vpop.permute.xlu0 %1540
    %1543 = vset.pattern.permute.xlu0 7
    %1544 = vperm.xlu0 %1543, %v80
    %v1545 = vpop.permute.xlu0 %1544
    %1547 = vset.pattern.permute.xlu0 7
    %1548 = vperm.xlu0 %1547, %v81
    %v1549 = vpop.permute.xlu0 %1548
    %1551 = vset.pattern.permute.xlu0 7
    %1552 = vperm.xlu0 %1551, %v82
    %v1553 = vpop.permute.xlu0 %1552
    %1555 = vset.pattern.permute.xlu0 7
    %1556 = vperm.xlu0 %1555, %v83
    %v1557 = vpop.permute.xlu0 %1556
    %1559 = vset.pattern.permute.xlu0 7
    %1560 = vperm.xlu0 %1559, %v84
    %v1561 = vpop.permute.xlu0 %1560
    %1563 = vset.pattern.permute.xlu0 7
    %1564 = vperm.xlu0 %1563, %v85
    %v1565 = vpop.permute.xlu0 %1564
    %1567 = vset.pattern.permute.xlu0 7
    %1568 = vperm.xlu0 %1567, %v86
    %v1569 = vpop.permute.xlu0 %1568
    %1571 = vset.pattern.permute.xlu0 7
    %1572 = vperm.xlu0 %1571, %v87
    %v1573 = vpop.permute.xlu0 %1572
    %1575 = vset.pattern.permute.xlu0 7
    %1576 = vperm.xlu0 %1575, %v88
    %v1577 = vpop.permute.xlu0 %1576
    %1579 = vset.pattern.permute.xlu0 7
    %1580 = vperm.xlu0 %1579, %v89
    %v1581 = vpop.permute.xlu0 %1580
    %1583 = vset.pattern.permute.xlu0 7
    %1584 = vperm.xlu0 %1583, %v90
    %v1585 = vpop.permute.xlu0 %1584
    %1587 = vset.pattern.permute.xlu0 7
    %1588 = vperm.xlu0 %1587, %v91
    %v1589 = vpop.permute.xlu0 %1588
    %1591 = vset.pattern.permute.xlu0 7
    %1592 = vperm.xlu0 %1591, %v92
    %v1593 = vpop.permute.xlu0 %1592
    %v1595 = vlaneseq
    %v1596 = vshrl.u32 %v1595, 7
    %v1597 = vsub.s32 7, %v1596
    %v1598 = vrot.slane %v93, %v1597
    %v1599 = vmul.f32 %v1469, %v1598
    %v1600 = vmul.f32 %v1473, %v1598
    %v1601 = vmul.f32 %v1477, %v1598
    %v1602 = vmul.f32 %v1481, %v1598
    %v1603 = vmul.f32 %v1485, %v1598
    %v1604 = vmul.f32 %v1489, %v1598
    %v1605 = vmul.f32 %v1493, %v1598
    %v1606 = vmul.f32 %v1497, %v1598
    %v1607 = vmul.f32 %v1501, %v1598
    %v1608 = vmul.f32 %v1505, %v1598
    %v1609 = vmul.f32 %v1509, %v1598
    %v1610 = vmul.f32 %v1513, %v1598
    %v1611 = vmul.f32 %v1517, %v1598
    %v1612 = vmul.f32 %v1521, %v1598
    %v1613 = vmul.f32 %v1525, %v1598
    %v1614 = vmul.f32 %v1529, %v1598
    %v1615 = vmul.f32 %v1533, %v1598
    %v1616 = vmul.f32 %v1537, %v1598
    %v1617 = vmul.f32 %v1541, %v1598
    %v1618 = vmul.f32 %v1545, %v1598
    %v1619 = vmul.f32 %v1549, %v1598
    %v1620 = vmul.f32 %v1553, %v1598
    %v1621 = vmul.f32 %v1557, %v1598
    %v1622 = vmul.f32 %v1561, %v1598
    %v1623 = vmul.f32 %v1565, %v1598
    %v1624 = vmul.f32 %v1569, %v1598
    %v1625 = vmul.f32 %v1573, %v1598
    %v1626 = vmul.f32 %v1577, %v1598
    %v1627 = vmul.f32 %v1581, %v1598
    %v1628 = vmul.f32 %v1585, %v1598
    %v1629 = vmul.f32 %v1589, %v1598
    %v1630 = vmul.f32 %v1593, %v1598
    %v1631 = vadd.f32 %v1435, %v1599
    %v1632 = vadd.f32 %v1436, %v1600
    %v1633 = vadd.f32 %v1437, %v1601
    %v1634 = vadd.f32 %v1438, %v1602
    %v1635 = vadd.f32 %v1439, %v1603
    %v1636 = vadd.f32 %v1440, %v1604
    %v1637 = vadd.f32 %v1441, %v1605
    %v1638 = vadd.f32 %v1442, %v1606
    %v1639 = vadd.f32 %v1443, %v1607
    %v1640 = vadd.f32 %v1444, %v1608
    %v1641 = vadd.f32 %v1445, %v1609
    %v1642 = vadd.f32 %v1446, %v1610
    %v1643 = vadd.f32 %v1447, %v1611
    %v1644 = vadd.f32 %v1448, %v1612
    %v1645 = vadd.f32 %v1449, %v1613
    %v1646 = vadd.f32 %v1450, %v1614
    %v1647 = vadd.f32 %v1451, %v1615
    %v1648 = vadd.f32 %v1452, %v1616
    %v1649 = vadd.f32 %v1453, %v1617
    %v1650 = vadd.f32 %v1454, %v1618
    %v1651 = vadd.f32 %v1455, %v1619
    %v1652 = vadd.f32 %v1456, %v1620
    %v1653 = vadd.f32 %v1457, %v1621
    %v1654 = vadd.f32 %v1458, %v1622
    %v1655 = vadd.f32 %v1459, %v1623
    %v1656 = vadd.f32 %v1460, %v1624
    %v1657 = vadd.f32 %v1461, %v1625
    %v1658 = vadd.f32 %v1462, %v1626
    %v1659 = vadd.f32 %v1463, %v1627
    %v1660 = vadd.f32 %v1464, %v1628
    %v1661 = vadd.f32 %v1465, %v1629
    %v1662 = vadd.f32 %v1466, %v1630
    %1663 = vset.pattern.permute.xlu0 8
    %1664 = vperm.xlu0 %1663, %v61
    %v1665 = vpop.permute.xlu0 %1664
    %1667 = vset.pattern.permute.xlu0 8
    %1668 = vperm.xlu0 %1667, %v62
    %v1669 = vpop.permute.xlu0 %1668
    %1671 = vset.pattern.permute.xlu0 8
    %1672 = vperm.xlu0 %1671, %v63
    %v1673 = vpop.permute.xlu0 %1672
    %1675 = vset.pattern.permute.xlu0 8
    %1676 = vperm.xlu0 %1675, %v64
    %v1677 = vpop.permute.xlu0 %1676
    %1679 = vset.pattern.permute.xlu0 8
    %1680 = vperm.xlu0 %1679, %v65
    %v1681 = vpop.permute.xlu0 %1680
    %1683 = vset.pattern.permute.xlu0 8
    %1684 = vperm.xlu0 %1683, %v66
    %v1685 = vpop.permute.xlu0 %1684
    %1687 = vset.pattern.permute.xlu0 8
    %1688 = vperm.xlu0 %1687, %v67
    %v1689 = vpop.permute.xlu0 %1688
    %1691 = vset.pattern.permute.xlu0 8
    %1692 = vperm.xlu0 %1691, %v68
    %v1693 = vpop.permute.xlu0 %1692
    %1695 = vset.pattern.permute.xlu0 8
    %1696 = vperm.xlu0 %1695, %v69
    %v1697 = vpop.permute.xlu0 %1696
    %1699 = vset.pattern.permute.xlu0 8
    %1700 = vperm.xlu0 %1699, %v70
    %v1701 = vpop.permute.xlu0 %1700
    %1703 = vset.pattern.permute.xlu0 8
    %1704 = vperm.xlu0 %1703, %v71
    %v1705 = vpop.permute.xlu0 %1704
    %1707 = vset.pattern.permute.xlu0 8
    %1708 = vperm.xlu0 %1707, %v72
    %v1709 = vpop.permute.xlu0 %1708
    %1711 = vset.pattern.permute.xlu0 8
    %1712 = vperm.xlu0 %1711, %v73
    %v1713 = vpop.permute.xlu0 %1712
    %1715 = vset.pattern.permute.xlu0 8
    %1716 = vperm.xlu0 %1715, %v74
    %v1717 = vpop.permute.xlu0 %1716
    %1719 = vset.pattern.permute.xlu0 8
    %1720 = vperm.xlu0 %1719, %v75
    %v1721 = vpop.permute.xlu0 %1720
    %1723 = vset.pattern.permute.xlu0 8
    %1724 = vperm.xlu0 %1723, %v76
    %v1725 = vpop.permute.xlu0 %1724
    %1727 = vset.pattern.permute.xlu0 8
    %1728 = vperm.xlu0 %1727, %v77
    %v1729 = vpop.permute.xlu0 %1728
    %1731 = vset.pattern.permute.xlu0 8
    %1732 = vperm.xlu0 %1731, %v78
    %v1733 = vpop.permute.xlu0 %1732
    %1735 = vset.pattern.permute.xlu0 8
    %1736 = vperm.xlu0 %1735, %v79
    %v1737 = vpop.permute.xlu0 %1736
    %1739 = vset.pattern.permute.xlu0 8
    %1740 = vperm.xlu0 %1739, %v80
    %v1741 = vpop.permute.xlu0 %1740
    %1743 = vset.pattern.permute.xlu0 8
    %1744 = vperm.xlu0 %1743, %v81
    %v1745 = vpop.permute.xlu0 %1744
    %1747 = vset.pattern.permute.xlu0 8
    %1748 = vperm.xlu0 %1747, %v82
    %v1749 = vpop.permute.xlu0 %1748
    %1751 = vset.pattern.permute.xlu0 8
    %1752 = vperm.xlu0 %1751, %v83
    %v1753 = vpop.permute.xlu0 %1752
    %1755 = vset.pattern.permute.xlu0 8
    %1756 = vperm.xlu0 %1755, %v84
    %v1757 = vpop.permute.xlu0 %1756
    %1759 = vset.pattern.permute.xlu0 8
    %1760 = vperm.xlu0 %1759, %v85
    %v1761 = vpop.permute.xlu0 %1760
    %1763 = vset.pattern.permute.xlu0 8
    %1764 = vperm.xlu0 %1763, %v86
    %v1765 = vpop.permute.xlu0 %1764
    %1767 = vset.pattern.permute.xlu0 8
    %1768 = vperm.xlu0 %1767, %v87
    %v1769 = vpop.permute.xlu0 %1768
    %1771 = vset.pattern.permute.xlu0 8
    %1772 = vperm.xlu0 %1771, %v88
    %v1773 = vpop.permute.xlu0 %1772
    %1775 = vset.pattern.permute.xlu0 8
    %1776 = vperm.xlu0 %1775, %v89
    %v1777 = vpop.permute.xlu0 %1776
    %1779 = vset.pattern.permute.xlu0 8
    %1780 = vperm.xlu0 %1779, %v90
    %v1781 = vpop.permute.xlu0 %1780
    %1783 = vset.pattern.permute.xlu0 8
    %1784 = vperm.xlu0 %1783, %v91
    %v1785 = vpop.permute.xlu0 %1784
    %1787 = vset.pattern.permute.xlu0 8
    %1788 = vperm.xlu0 %1787, %v92
    %v1789 = vpop.permute.xlu0 %1788
    %v1791 = vlaneseq
    %v1792 = vshrl.u32 %v1791, 7
    %v1793 = vsub.s32 0, %v1792
    %v1794 = vrot.slane %v94, %v1793
    %v1795 = vmul.f32 %v1665, %v1794
    %v1796 = vmul.f32 %v1669, %v1794
    %v1797 = vmul.f32 %v1673, %v1794
    %v1798 = vmul.f32 %v1677, %v1794
    %v1799 = vmul.f32 %v1681, %v1794
    %v1800 = vmul.f32 %v1685, %v1794
    %v1801 = vmul.f32 %v1689, %v1794
    %v1802 = vmul.f32 %v1693, %v1794
    %v1803 = vmul.f32 %v1697, %v1794
    %v1804 = vmul.f32 %v1701, %v1794
    %v1805 = vmul.f32 %v1705, %v1794
    %v1806 = vmul.f32 %v1709, %v1794
    %v1807 = vmul.f32 %v1713, %v1794
    %v1808 = vmul.f32 %v1717, %v1794
    %v1809 = vmul.f32 %v1721, %v1794
    %v1810 = vmul.f32 %v1725, %v1794
    %v1811 = vmul.f32 %v1729, %v1794
    %v1812 = vmul.f32 %v1733, %v1794
    %v1813 = vmul.f32 %v1737, %v1794
    %v1814 = vmul.f32 %v1741, %v1794
    %v1815 = vmul.f32 %v1745, %v1794
    %v1816 = vmul.f32 %v1749, %v1794
    %v1817 = vmul.f32 %v1753, %v1794
    %v1818 = vmul.f32 %v1757, %v1794
    %v1819 = vmul.f32 %v1761, %v1794
    %v1820 = vmul.f32 %v1765, %v1794
    %v1821 = vmul.f32 %v1769, %v1794
    %v1822 = vmul.f32 %v1773, %v1794
    %v1823 = vmul.f32 %v1777, %v1794
    %v1824 = vmul.f32 %v1781, %v1794
    %v1825 = vmul.f32 %v1785, %v1794
    %v1826 = vmul.f32 %v1789, %v1794
    %v1827 = vadd.f32 %v1631, %v1795
    %v1828 = vadd.f32 %v1632, %v1796
    %v1829 = vadd.f32 %v1633, %v1797
    %v1830 = vadd.f32 %v1634, %v1798
    %v1831 = vadd.f32 %v1635, %v1799
    %v1832 = vadd.f32 %v1636, %v1800
    %v1833 = vadd.f32 %v1637, %v1801
    %v1834 = vadd.f32 %v1638, %v1802
    %v1835 = vadd.f32 %v1639, %v1803
    %v1836 = vadd.f32 %v1640, %v1804
    %v1837 = vadd.f32 %v1641, %v1805
    %v1838 = vadd.f32 %v1642, %v1806
    %v1839 = vadd.f32 %v1643, %v1807
    %v1840 = vadd.f32 %v1644, %v1808
    %v1841 = vadd.f32 %v1645, %v1809
    %v1842 = vadd.f32 %v1646, %v1810
    %v1843 = vadd.f32 %v1647, %v1811
    %v1844 = vadd.f32 %v1648, %v1812
    %v1845 = vadd.f32 %v1649, %v1813
    %v1846 = vadd.f32 %v1650, %v1814
    %v1847 = vadd.f32 %v1651, %v1815
    %v1848 = vadd.f32 %v1652, %v1816
    %v1849 = vadd.f32 %v1653, %v1817
    %v1850 = vadd.f32 %v1654, %v1818
    %v1851 = vadd.f32 %v1655, %v1819
    %v1852 = vadd.f32 %v1656, %v1820
    %v1853 = vadd.f32 %v1657, %v1821
    %v1854 = vadd.f32 %v1658, %v1822
    %v1855 = vadd.f32 %v1659, %v1823
    %v1856 = vadd.f32 %v1660, %v1824
    %v1857 = vadd.f32 %v1661, %v1825
    %v1858 = vadd.f32 %v1662, %v1826
    %1859 = vset.pattern.permute.xlu0 9
    %1860 = vperm.xlu0 %1859, %v61
    %v1861 = vpop.permute.xlu0 %1860
    %1863 = vset.pattern.permute.xlu0 9
    %1864 = vperm.xlu0 %1863, %v62
    %v1865 = vpop.permute.xlu0 %1864
    %1867 = vset.pattern.permute.xlu0 9
    %1868 = vperm.xlu0 %1867, %v63
    %v1869 = vpop.permute.xlu0 %1868
    %1871 = vset.pattern.permute.xlu0 9
    %1872 = vperm.xlu0 %1871, %v64
    %v1873 = vpop.permute.xlu0 %1872
    %1875 = vset.pattern.permute.xlu0 9
    %1876 = vperm.xlu0 %1875, %v65
    %v1877 = vpop.permute.xlu0 %1876
    %1879 = vset.pattern.permute.xlu0 9
    %1880 = vperm.xlu0 %1879, %v66
    %v1881 = vpop.permute.xlu0 %1880
    %1883 = vset.pattern.permute.xlu0 9
    %1884 = vperm.xlu0 %1883, %v67
    %v1885 = vpop.permute.xlu0 %1884
    %1887 = vset.pattern.permute.xlu0 9
    %1888 = vperm.xlu0 %1887, %v68
    %v1889 = vpop.permute.xlu0 %1888
    %1891 = vset.pattern.permute.xlu0 9
    %1892 = vperm.xlu0 %1891, %v69
    %v1893 = vpop.permute.xlu0 %1892
    %1895 = vset.pattern.permute.xlu0 9
    %1896 = vperm.xlu0 %1895, %v70
    %v1897 = vpop.permute.xlu0 %1896
    %1899 = vset.pattern.permute.xlu0 9
    %1900 = vperm.xlu0 %1899, %v71
    %v1901 = vpop.permute.xlu0 %1900
    %1903 = vset.pattern.permute.xlu0 9
    %1904 = vperm.xlu0 %1903, %v72
    %v1905 = vpop.permute.xlu0 %1904
    %1907 = vset.pattern.permute.xlu0 9
    %1908 = vperm.xlu0 %1907, %v73
    %v1909 = vpop.permute.xlu0 %1908
    %1911 = vset.pattern.permute.xlu0 9
    %1912 = vperm.xlu0 %1911, %v74
    %v1913 = vpop.permute.xlu0 %1912
    %1915 = vset.pattern.permute.xlu0 9
    %1916 = vperm.xlu0 %1915, %v75
    %v1917 = vpop.permute.xlu0 %1916
    %1919 = vset.pattern.permute.xlu0 9
    %1920 = vperm.xlu0 %1919, %v76
    %v1921 = vpop.permute.xlu0 %1920
    %1923 = vset.pattern.permute.xlu0 9
    %1924 = vperm.xlu0 %1923, %v77
    %v1925 = vpop.permute.xlu0 %1924
    %1927 = vset.pattern.permute.xlu0 9
    %1928 = vperm.xlu0 %1927, %v78
    %v1929 = vpop.permute.xlu0 %1928
    %1931 = vset.pattern.permute.xlu0 9
    %1932 = vperm.xlu0 %1931, %v79
    %v1933 = vpop.permute.xlu0 %1932
    %1935 = vset.pattern.permute.xlu0 9
    %1936 = vperm.xlu0 %1935, %v80
    %v1937 = vpop.permute.xlu0 %1936
    %1939 = vset.pattern.permute.xlu0 9
    %1940 = vperm.xlu0 %1939, %v81
    %v1941 = vpop.permute.xlu0 %1940
    %1943 = vset.pattern.permute.xlu0 9
    %1944 = vperm.xlu0 %1943, %v82
    %v1945 = vpop.permute.xlu0 %1944
    %1947 = vset.pattern.permute.xlu0 9
    %1948 = vperm.xlu0 %1947, %v83
    %v1949 = vpop.permute.xlu0 %1948
    %1951 = vset.pattern.permute.xlu0 9
    %1952 = vperm.xlu0 %1951, %v84
    %v1953 = vpop.permute.xlu0 %1952
    %1955 = vset.pattern.permute.xlu0 9
    %1956 = vperm.xlu0 %1955, %v85
    %v1957 = vpop.permute.xlu0 %1956
    %1959 = vset.pattern.permute.xlu0 9
    %1960 = vperm.xlu0 %1959, %v86
    %v1961 = vpop.permute.xlu0 %1960
    %1963 = vset.pattern.permute.xlu0 9
    %1964 = vperm.xlu0 %1963, %v87
    %v1965 = vpop.permute.xlu0 %1964
    %1967 = vset.pattern.permute.xlu0 9
    %1968 = vperm.xlu0 %1967, %v88
    %v1969 = vpop.permute.xlu0 %1968
    %1971 = vset.pattern.permute.xlu0 9
    %1972 = vperm.xlu0 %1971, %v89
    %v1973 = vpop.permute.xlu0 %1972
    %1975 = vset.pattern.permute.xlu0 9
    %1976 = vperm.xlu0 %1975, %v90
    %v1977 = vpop.permute.xlu0 %1976
    %1979 = vset.pattern.permute.xlu0 9
    %1980 = vperm.xlu0 %1979, %v91
    %v1981 = vpop.permute.xlu0 %1980
    %1983 = vset.pattern.permute.xlu0 9
    %1984 = vperm.xlu0 %1983, %v92
    %v1985 = vpop.permute.xlu0 %1984
    %v1987 = vlaneseq
    %v1988 = vshrl.u32 %v1987, 7
    %v1989 = vsub.s32 1, %v1988
    %v1990 = vrot.slane %v94, %v1989
    %v1991 = vmul.f32 %v1861, %v1990
    %v1992 = vmul.f32 %v1865, %v1990
    %v1993 = vmul.f32 %v1869, %v1990
    %v1994 = vmul.f32 %v1873, %v1990
    %v1995 = vmul.f32 %v1877, %v1990
    %v1996 = vmul.f32 %v1881, %v1990
    %v1997 = vmul.f32 %v1885, %v1990
    %v1998 = vmul.f32 %v1889, %v1990
    %v1999 = vmul.f32 %v1893, %v1990
    %v2000 = vmul.f32 %v1897, %v1990
    %v2001 = vmul.f32 %v1901, %v1990
    %v2002 = vmul.f32 %v1905, %v1990
    %v2003 = vmul.f32 %v1909, %v1990
    %v2004 = vmul.f32 %v1913, %v1990
    %v2005 = vmul.f32 %v1917, %v1990
    %v2006 = vmul.f32 %v1921, %v1990
    %v2007 = vmul.f32 %v1925, %v1990
    %v2008 = vmul.f32 %v1929, %v1990
    %v2009 = vmul.f32 %v1933, %v1990
    %v2010 = vmul.f32 %v1937, %v1990
    %v2011 = vmul.f32 %v1941, %v1990
    %v2012 = vmul.f32 %v1945, %v1990
    %v2013 = vmul.f32 %v1949, %v1990
    %v2014 = vmul.f32 %v1953, %v1990
    %v2015 = vmul.f32 %v1957, %v1990
    %v2016 = vmul.f32 %v1961, %v1990
    %v2017 = vmul.f32 %v1965, %v1990
    %v2018 = vmul.f32 %v1969, %v1990
    %v2019 = vmul.f32 %v1973, %v1990
    %v2020 = vmul.f32 %v1977, %v1990
    %v2021 = vmul.f32 %v1981, %v1990
    %v2022 = vmul.f32 %v1985, %v1990
    %v2023 = vadd.f32 %v1827, %v1991
    %v2024 = vadd.f32 %v1828, %v1992
    %v2025 = vadd.f32 %v1829, %v1993
    %v2026 = vadd.f32 %v1830, %v1994
    %v2027 = vadd.f32 %v1831, %v1995
    %v2028 = vadd.f32 %v1832, %v1996
    %v2029 = vadd.f32 %v1833, %v1997
    %v2030 = vadd.f32 %v1834, %v1998
    %v2031 = vadd.f32 %v1835, %v1999
    %v2032 = vadd.f32 %v1836, %v2000
    %v2033 = vadd.f32 %v1837, %v2001
    %v2034 = vadd.f32 %v1838, %v2002
    %v2035 = vadd.f32 %v1839, %v2003
    %v2036 = vadd.f32 %v1840, %v2004
    %v2037 = vadd.f32 %v1841, %v2005
    %v2038 = vadd.f32 %v1842, %v2006
    %v2039 = vadd.f32 %v1843, %v2007
    %v2040 = vadd.f32 %v1844, %v2008
    %v2041 = vadd.f32 %v1845, %v2009
    %v2042 = vadd.f32 %v1846, %v2010
    %v2043 = vadd.f32 %v1847, %v2011
    %v2044 = vadd.f32 %v1848, %v2012
    %v2045 = vadd.f32 %v1849, %v2013
    %v2046 = vadd.f32 %v1850, %v2014
    %v2047 = vadd.f32 %v1851, %v2015
    %v2048 = vadd.f32 %v1852, %v2016
    %v2049 = vadd.f32 %v1853, %v2017
    %v2050 = vadd.f32 %v1854, %v2018
    %v2051 = vadd.f32 %v1855, %v2019
    %v2052 = vadd.f32 %v1856, %v2020
    %v2053 = vadd.f32 %v1857, %v2021
    %v2054 = vadd.f32 %v1858, %v2022
    %2055 = vset.pattern.permute.xlu0 10
    %2056 = vperm.xlu0 %2055, %v61
    %v2057 = vpop.permute.xlu0 %2056
    %2059 = vset.pattern.permute.xlu0 10
    %2060 = vperm.xlu0 %2059, %v62
    %v2061 = vpop.permute.xlu0 %2060
    %2063 = vset.pattern.permute.xlu0 10
    %2064 = vperm.xlu0 %2063, %v63
    %v2065 = vpop.permute.xlu0 %2064
    %2067 = vset.pattern.permute.xlu0 10
    %2068 = vperm.xlu0 %2067, %v64
    %v2069 = vpop.permute.xlu0 %2068
    %2071 = vset.pattern.permute.xlu0 10
    %2072 = vperm.xlu0 %2071, %v65
    %v2073 = vpop.permute.xlu0 %2072
    %2075 = vset.pattern.permute.xlu0 10
    %2076 = vperm.xlu0 %2075, %v66
    %v2077 = vpop.permute.xlu0 %2076
    %2079 = vset.pattern.permute.xlu0 10
    %2080 = vperm.xlu0 %2079, %v67
    %v2081 = vpop.permute.xlu0 %2080
    %2083 = vset.pattern.permute.xlu0 10
    %2084 = vperm.xlu0 %2083, %v68
    %v2085 = vpop.permute.xlu0 %2084
    %2087 = vset.pattern.permute.xlu0 10
    %2088 = vperm.xlu0 %2087, %v69
    %v2089 = vpop.permute.xlu0 %2088
    %2091 = vset.pattern.permute.xlu0 10
    %2092 = vperm.xlu0 %2091, %v70
    %v2093 = vpop.permute.xlu0 %2092
    %2095 = vset.pattern.permute.xlu0 10
    %2096 = vperm.xlu0 %2095, %v71
    %v2097 = vpop.permute.xlu0 %2096
    %2099 = vset.pattern.permute.xlu0 10
    %2100 = vperm.xlu0 %2099, %v72
    %v2101 = vpop.permute.xlu0 %2100
    %2103 = vset.pattern.permute.xlu0 10
    %2104 = vperm.xlu0 %2103, %v73
    %v2105 = vpop.permute.xlu0 %2104
    %2107 = vset.pattern.permute.xlu0 10
    %2108 = vperm.xlu0 %2107, %v74
    %v2109 = vpop.permute.xlu0 %2108
    %2111 = vset.pattern.permute.xlu0 10
    %2112 = vperm.xlu0 %2111, %v75
    %v2113 = vpop.permute.xlu0 %2112
    %2115 = vset.pattern.permute.xlu0 10
    %2116 = vperm.xlu0 %2115, %v76
    %v2117 = vpop.permute.xlu0 %2116
    %2119 = vset.pattern.permute.xlu0 10
    %2120 = vperm.xlu0 %2119, %v77
    %v2121 = vpop.permute.xlu0 %2120
    %2123 = vset.pattern.permute.xlu0 10
    %2124 = vperm.xlu0 %2123, %v78
    %v2125 = vpop.permute.xlu0 %2124
    %2127 = vset.pattern.permute.xlu0 10
    %2128 = vperm.xlu0 %2127, %v79
    %v2129 = vpop.permute.xlu0 %2128
    %2131 = vset.pattern.permute.xlu0 10
    %2132 = vperm.xlu0 %2131, %v80
    %v2133 = vpop.permute.xlu0 %2132
    %2135 = vset.pattern.permute.xlu0 10
    %2136 = vperm.xlu0 %2135, %v81
    %v2137 = vpop.permute.xlu0 %2136
    %2139 = vset.pattern.permute.xlu0 10
    %2140 = vperm.xlu0 %2139, %v82
    %v2141 = vpop.permute.xlu0 %2140
    %2143 = vset.pattern.permute.xlu0 10
    %2144 = vperm.xlu0 %2143, %v83
    %v2145 = vpop.permute.xlu0 %2144
    %2147 = vset.pattern.permute.xlu0 10
    %2148 = vperm.xlu0 %2147, %v84
    %v2149 = vpop.permute.xlu0 %2148
    %2151 = vset.pattern.permute.xlu0 10
    %2152 = vperm.xlu0 %2151, %v85
    %v2153 = vpop.permute.xlu0 %2152
    %2155 = vset.pattern.permute.xlu0 10
    %2156 = vperm.xlu0 %2155, %v86
    %v2157 = vpop.permute.xlu0 %2156
    %2159 = vset.pattern.permute.xlu0 10
    %2160 = vperm.xlu0 %2159, %v87
    %v2161 = vpop.permute.xlu0 %2160
    %2163 = vset.pattern.permute.xlu0 10
    %2164 = vperm.xlu0 %2163, %v88
    %v2165 = vpop.permute.xlu0 %2164
    %2167 = vset.pattern.permute.xlu0 10
    %2168 = vperm.xlu0 %2167, %v89
    %v2169 = vpop.permute.xlu0 %2168
    %2171 = vset.pattern.permute.xlu0 10
    %2172 = vperm.xlu0 %2171, %v90
    %v2173 = vpop.permute.xlu0 %2172
    %2175 = vset.pattern.permute.xlu0 10
    %2176 = vperm.xlu0 %2175, %v91
    %v2177 = vpop.permute.xlu0 %2176
    %2179 = vset.pattern.permute.xlu0 10
    %2180 = vperm.xlu0 %2179, %v92
    %v2181 = vpop.permute.xlu0 %2180
    %v2183 = vlaneseq
    %v2184 = vshrl.u32 %v2183, 7
    %v2185 = vsub.s32 2, %v2184
    %v2186 = vrot.slane %v94, %v2185
    %v2187 = vmul.f32 %v2057, %v2186
    %v2188 = vmul.f32 %v2061, %v2186
    %v2189 = vmul.f32 %v2065, %v2186
    %v2190 = vmul.f32 %v2069, %v2186
    %v2191 = vmul.f32 %v2073, %v2186
    %v2192 = vmul.f32 %v2077, %v2186
    %v2193 = vmul.f32 %v2081, %v2186
    %v2194 = vmul.f32 %v2085, %v2186
    %v2195 = vmul.f32 %v2089, %v2186
    %v2196 = vmul.f32 %v2093, %v2186
    %v2197 = vmul.f32 %v2097, %v2186
    %v2198 = vmul.f32 %v2101, %v2186
    %v2199 = vmul.f32 %v2105, %v2186
    %v2200 = vmul.f32 %v2109, %v2186
    %v2201 = vmul.f32 %v2113, %v2186
    %v2202 = vmul.f32 %v2117, %v2186
    %v2203 = vmul.f32 %v2121, %v2186
    %v2204 = vmul.f32 %v2125, %v2186
    %v2205 = vmul.f32 %v2129, %v2186
    %v2206 = vmul.f32 %v2133, %v2186
    %v2207 = vmul.f32 %v2137, %v2186
    %v2208 = vmul.f32 %v2141, %v2186
    %v2209 = vmul.f32 %v2145, %v2186
    %v2210 = vmul.f32 %v2149, %v2186
    %v2211 = vmul.f32 %v2153, %v2186
    %v2212 = vmul.f32 %v2157, %v2186
    %v2213 = vmul.f32 %v2161, %v2186
    %v2214 = vmul.f32 %v2165, %v2186
    %v2215 = vmul.f32 %v2169, %v2186
    %v2216 = vmul.f32 %v2173, %v2186
    %v2217 = vmul.f32 %v2177, %v2186
    %v2218 = vmul.f32 %v2181, %v2186
    %v2219 = vadd.f32 %v2023, %v2187
    %v2220 = vadd.f32 %v2024, %v2188
    %v2221 = vadd.f32 %v2025, %v2189
    %v2222 = vadd.f32 %v2026, %v2190
    %v2223 = vadd.f32 %v2027, %v2191
    %v2224 = vadd.f32 %v2028, %v2192
    %v2225 = vadd.f32 %v2029, %v2193
    %v2226 = vadd.f32 %v2030, %v2194
    %v2227 = vadd.f32 %v2031, %v2195
    %v2228 = vadd.f32 %v2032, %v2196
    %v2229 = vadd.f32 %v2033, %v2197
    %v2230 = vadd.f32 %v2034, %v2198
    %v2231 = vadd.f32 %v2035, %v2199
    %v2232 = vadd.f32 %v2036, %v2200
    %v2233 = vadd.f32 %v2037, %v2201
    %v2234 = vadd.f32 %v2038, %v2202
    %v2235 = vadd.f32 %v2039, %v2203
    %v2236 = vadd.f32 %v2040, %v2204
    %v2237 = vadd.f32 %v2041, %v2205
    %v2238 = vadd.f32 %v2042, %v2206
    %v2239 = vadd.f32 %v2043, %v2207
    %v2240 = vadd.f32 %v2044, %v2208
    %v2241 = vadd.f32 %v2045, %v2209
    %v2242 = vadd.f32 %v2046, %v2210
    %v2243 = vadd.f32 %v2047, %v2211
    %v2244 = vadd.f32 %v2048, %v2212
    %v2245 = vadd.f32 %v2049, %v2213
    %v2246 = vadd.f32 %v2050, %v2214
    %v2247 = vadd.f32 %v2051, %v2215
    %v2248 = vadd.f32 %v2052, %v2216
    %v2249 = vadd.f32 %v2053, %v2217
    %v2250 = vadd.f32 %v2054, %v2218
    %2251 = vset.pattern.permute.xlu0 11
    %2252 = vperm.xlu0 %2251, %v61
    %v2253 = vpop.permute.xlu0 %2252
    %2255 = vset.pattern.permute.xlu0 11
    %2256 = vperm.xlu0 %2255, %v62
    %v2257 = vpop.permute.xlu0 %2256
    %2259 = vset.pattern.permute.xlu0 11
    %2260 = vperm.xlu0 %2259, %v63
    %v2261 = vpop.permute.xlu0 %2260
    %2263 = vset.pattern.permute.xlu0 11
    %2264 = vperm.xlu0 %2263, %v64
    %v2265 = vpop.permute.xlu0 %2264
    %2267 = vset.pattern.permute.xlu0 11
    %2268 = vperm.xlu0 %2267, %v65
    %v2269 = vpop.permute.xlu0 %2268
    %2271 = vset.pattern.permute.xlu0 11
    %2272 = vperm.xlu0 %2271, %v66
    %v2273 = vpop.permute.xlu0 %2272
    %2275 = vset.pattern.permute.xlu0 11
    %2276 = vperm.xlu0 %2275, %v67
    %v2277 = vpop.permute.xlu0 %2276
    %2279 = vset.pattern.permute.xlu0 11
    %2280 = vperm.xlu0 %2279, %v68
    %v2281 = vpop.permute.xlu0 %2280
    %2283 = vset.pattern.permute.xlu0 11
    %2284 = vperm.xlu0 %2283, %v69
    %v2285 = vpop.permute.xlu0 %2284
    %2287 = vset.pattern.permute.xlu0 11
    %2288 = vperm.xlu0 %2287, %v70
    %v2289 = vpop.permute.xlu0 %2288
    %2291 = vset.pattern.permute.xlu0 11
    %2292 = vperm.xlu0 %2291, %v71
    %v2293 = vpop.permute.xlu0 %2292
    %2295 = vset.pattern.permute.xlu0 11
    %2296 = vperm.xlu0 %2295, %v72
    %v2297 = vpop.permute.xlu0 %2296
    %2299 = vset.pattern.permute.xlu0 11
    %2300 = vperm.xlu0 %2299, %v73
    %v2301 = vpop.permute.xlu0 %2300
    %2303 = vset.pattern.permute.xlu0 11
    %2304 = vperm.xlu0 %2303, %v74
    %v2305 = vpop.permute.xlu0 %2304
    %2307 = vset.pattern.permute.xlu0 11
    %2308 = vperm.xlu0 %2307, %v75
    %v2309 = vpop.permute.xlu0 %2308
    %2311 = vset.pattern.permute.xlu0 11
    %2312 = vperm.xlu0 %2311, %v76
    %v2313 = vpop.permute.xlu0 %2312
    %2315 = vset.pattern.permute.xlu0 11
    %2316 = vperm.xlu0 %2315, %v77
    %v2317 = vpop.permute.xlu0 %2316
    %2319 = vset.pattern.permute.xlu0 11
    %2320 = vperm.xlu0 %2319, %v78
    %v2321 = vpop.permute.xlu0 %2320
    %2323 = vset.pattern.permute.xlu0 11
    %2324 = vperm.xlu0 %2323, %v79
    %v2325 = vpop.permute.xlu0 %2324
    %2327 = vset.pattern.permute.xlu0 11
    %2328 = vperm.xlu0 %2327, %v80
    %v2329 = vpop.permute.xlu0 %2328
    %2331 = vset.pattern.permute.xlu0 11
    %2332 = vperm.xlu0 %2331, %v81
    %v2333 = vpop.permute.xlu0 %2332
    %2335 = vset.pattern.permute.xlu0 11
    %2336 = vperm.xlu0 %2335, %v82
    %v2337 = vpop.permute.xlu0 %2336
    %2339 = vset.pattern.permute.xlu0 11
    %2340 = vperm.xlu0 %2339, %v83
    %v2341 = vpop.permute.xlu0 %2340
    %2343 = vset.pattern.permute.xlu0 11
    %2344 = vperm.xlu0 %2343, %v84
    %v2345 = vpop.permute.xlu0 %2344
    %2347 = vset.pattern.permute.xlu0 11
    %2348 = vperm.xlu0 %2347, %v85
    %v2349 = vpop.permute.xlu0 %2348
    %2351 = vset.pattern.permute.xlu0 11
    %2352 = vperm.xlu0 %2351, %v86
    %v2353 = vpop.permute.xlu0 %2352
    %2355 = vset.pattern.permute.xlu0 11
    %2356 = vperm.xlu0 %2355, %v87
    %v2357 = vpop.permute.xlu0 %2356
    %2359 = vset.pattern.permute.xlu0 11
    %2360 = vperm.xlu0 %2359, %v88
    %v2361 = vpop.permute.xlu0 %2360
    %2363 = vset.pattern.permute.xlu0 11
    %2364 = vperm.xlu0 %2363, %v89
    %v2365 = vpop.permute.xlu0 %2364
    %2367 = vset.pattern.permute.xlu0 11
    %2368 = vperm.xlu0 %2367, %v90
    %v2369 = vpop.permute.xlu0 %2368
    %2371 = vset.pattern.permute.xlu0 11
    %2372 = vperm.xlu0 %2371, %v91
    %v2373 = vpop.permute.xlu0 %2372
    %2375 = vset.pattern.permute.xlu0 11
    %2376 = vperm.xlu0 %2375, %v92
    %v2377 = vpop.permute.xlu0 %2376
    %v2379 = vlaneseq
    %v2380 = vshrl.u32 %v2379, 7
    %v2381 = vsub.s32 3, %v2380
    %v2382 = vrot.slane %v94, %v2381
    %v2383 = vmul.f32 %v2253, %v2382
    %v2384 = vmul.f32 %v2257, %v2382
    %v2385 = vmul.f32 %v2261, %v2382
    %v2386 = vmul.f32 %v2265, %v2382
    %v2387 = vmul.f32 %v2269, %v2382
    %v2388 = vmul.f32 %v2273, %v2382
    %v2389 = vmul.f32 %v2277, %v2382
    %v2390 = vmul.f32 %v2281, %v2382
    %v2391 = vmul.f32 %v2285, %v2382
    %v2392 = vmul.f32 %v2289, %v2382
    %v2393 = vmul.f32 %v2293, %v2382
    %v2394 = vmul.f32 %v2297, %v2382
    %v2395 = vmul.f32 %v2301, %v2382
    %v2396 = vmul.f32 %v2305, %v2382
    %v2397 = vmul.f32 %v2309, %v2382
    %v2398 = vmul.f32 %v2313, %v2382
    %v2399 = vmul.f32 %v2317, %v2382
    %v2400 = vmul.f32 %v2321, %v2382
    %v2401 = vmul.f32 %v2325, %v2382
    %v2402 = vmul.f32 %v2329, %v2382
    %v2403 = vmul.f32 %v2333, %v2382
    %v2404 = vmul.f32 %v2337, %v2382
    %v2405 = vmul.f32 %v2341, %v2382
    %v2406 = vmul.f32 %v2345, %v2382
    %v2407 = vmul.f32 %v2349, %v2382
    %v2408 = vmul.f32 %v2353, %v2382
    %v2409 = vmul.f32 %v2357, %v2382
    %v2410 = vmul.f32 %v2361, %v2382
    %v2411 = vmul.f32 %v2365, %v2382
    %v2412 = vmul.f32 %v2369, %v2382
    %v2413 = vmul.f32 %v2373, %v2382
    %v2414 = vmul.f32 %v2377, %v2382
    %v2415 = vadd.f32 %v2219, %v2383
    %v2416 = vadd.f32 %v2220, %v2384
    %v2417 = vadd.f32 %v2221, %v2385
    %v2418 = vadd.f32 %v2222, %v2386
    %v2419 = vadd.f32 %v2223, %v2387
    %v2420 = vadd.f32 %v2224, %v2388
    %v2421 = vadd.f32 %v2225, %v2389
    %v2422 = vadd.f32 %v2226, %v2390
    %v2423 = vadd.f32 %v2227, %v2391
    %v2424 = vadd.f32 %v2228, %v2392
    %v2425 = vadd.f32 %v2229, %v2393
    %v2426 = vadd.f32 %v2230, %v2394
    %v2427 = vadd.f32 %v2231, %v2395
    %v2428 = vadd.f32 %v2232, %v2396
    %v2429 = vadd.f32 %v2233, %v2397
    %v2430 = vadd.f32 %v2234, %v2398
    %v2431 = vadd.f32 %v2235, %v2399
    %v2432 = vadd.f32 %v2236, %v2400
    %v2433 = vadd.f32 %v2237, %v2401
    %v2434 = vadd.f32 %v2238, %v2402
    %v2435 = vadd.f32 %v2239, %v2403
    %v2436 = vadd.f32 %v2240, %v2404
    %v2437 = vadd.f32 %v2241, %v2405
    %v2438 = vadd.f32 %v2242, %v2406
    %v2439 = vadd.f32 %v2243, %v2407
    %v2440 = vadd.f32 %v2244, %v2408
    %v2441 = vadd.f32 %v2245, %v2409
    %v2442 = vadd.f32 %v2246, %v2410
    %v2443 = vadd.f32 %v2247, %v2411
    %v2444 = vadd.f32 %v2248, %v2412
    %v2445 = vadd.f32 %v2249, %v2413
    %v2446 = vadd.f32 %v2250, %v2414
    %2447 = vset.pattern.permute.xlu0 12
    %2448 = vperm.xlu0 %2447, %v61
    %v2449 = vpop.permute.xlu0 %2448
    %2451 = vset.pattern.permute.xlu0 12
    %2452 = vperm.xlu0 %2451, %v62
    %v2453 = vpop.permute.xlu0 %2452
    %2455 = vset.pattern.permute.xlu0 12
    %2456 = vperm.xlu0 %2455, %v63
    %v2457 = vpop.permute.xlu0 %2456
    %2459 = vset.pattern.permute.xlu0 12
    %2460 = vperm.xlu0 %2459, %v64
    %v2461 = vpop.permute.xlu0 %2460
    %2463 = vset.pattern.permute.xlu0 12
    %2464 = vperm.xlu0 %2463, %v65
    %v2465 = vpop.permute.xlu0 %2464
    %2467 = vset.pattern.permute.xlu0 12
    %2468 = vperm.xlu0 %2467, %v66
    %v2469 = vpop.permute.xlu0 %2468
    %2471 = vset.pattern.permute.xlu0 12
    %2472 = vperm.xlu0 %2471, %v67
    %v2473 = vpop.permute.xlu0 %2472
    %2475 = vset.pattern.permute.xlu0 12
    %2476 = vperm.xlu0 %2475, %v68
    %v2477 = vpop.permute.xlu0 %2476
    %2479 = vset.pattern.permute.xlu0 12
    %2480 = vperm.xlu0 %2479, %v69
    %v2481 = vpop.permute.xlu0 %2480
    %2483 = vset.pattern.permute.xlu0 12
    %2484 = vperm.xlu0 %2483, %v70
    %v2485 = vpop.permute.xlu0 %2484
    %2487 = vset.pattern.permute.xlu0 12
    %2488 = vperm.xlu0 %2487, %v71
    %v2489 = vpop.permute.xlu0 %2488
    %2491 = vset.pattern.permute.xlu0 12
    %2492 = vperm.xlu0 %2491, %v72
    %v2493 = vpop.permute.xlu0 %2492
    %2495 = vset.pattern.permute.xlu0 12
    %2496 = vperm.xlu0 %2495, %v73
    %v2497 = vpop.permute.xlu0 %2496
    %2499 = vset.pattern.permute.xlu0 12
    %2500 = vperm.xlu0 %2499, %v74
    %v2501 = vpop.permute.xlu0 %2500
    %2503 = vset.pattern.permute.xlu0 12
    %2504 = vperm.xlu0 %2503, %v75
    %v2505 = vpop.permute.xlu0 %2504
    %2507 = vset.pattern.permute.xlu0 12
    %2508 = vperm.xlu0 %2507, %v76
    %v2509 = vpop.permute.xlu0 %2508
    %2511 = vset.pattern.permute.xlu0 12
    %2512 = vperm.xlu0 %2511, %v77
    %v2513 = vpop.permute.xlu0 %2512
    %2515 = vset.pattern.permute.xlu0 12
    %2516 = vperm.xlu0 %2515, %v78
    %v2517 = vpop.permute.xlu0 %2516
    %2519 = vset.pattern.permute.xlu0 12
    %2520 = vperm.xlu0 %2519, %v79
    %v2521 = vpop.permute.xlu0 %2520
    %2523 = vset.pattern.permute.xlu0 12
    %2524 = vperm.xlu0 %2523, %v80
    %v2525 = vpop.permute.xlu0 %2524
    %2527 = vset.pattern.permute.xlu0 12
    %2528 = vperm.xlu0 %2527, %v81
    %v2529 = vpop.permute.xlu0 %2528
    %2531 = vset.pattern.permute.xlu0 12
    %2532 = vperm.xlu0 %2531, %v82
    %v2533 = vpop.permute.xlu0 %2532
    %2535 = vset.pattern.permute.xlu0 12
    %2536 = vperm.xlu0 %2535, %v83
    %v2537 = vpop.permute.xlu0 %2536
    %2539 = vset.pattern.permute.xlu0 12
    %2540 = vperm.xlu0 %2539, %v84
    %v2541 = vpop.permute.xlu0 %2540
    %2543 = vset.pattern.permute.xlu0 12
    %2544 = vperm.xlu0 %2543, %v85
    %v2545 = vpop.permute.xlu0 %2544
    %2547 = vset.pattern.permute.xlu0 12
    %2548 = vperm.xlu0 %2547, %v86
    %v2549 = vpop.permute.xlu0 %2548
    %2551 = vset.pattern.permute.xlu0 12
    %2552 = vperm.xlu0 %2551, %v87
    %v2553 = vpop.permute.xlu0 %2552
    %2555 = vset.pattern.permute.xlu0 12
    %2556 = vperm.xlu0 %2555, %v88
    %v2557 = vpop.permute.xlu0 %2556
    %2559 = vset.pattern.permute.xlu0 12
    %2560 = vperm.xlu0 %2559, %v89
    %v2561 = vpop.permute.xlu0 %2560
    %2563 = vset.pattern.permute.xlu0 12
    %2564 = vperm.xlu0 %2563, %v90
    %v2565 = vpop.permute.xlu0 %2564
    %2567 = vset.pattern.permute.xlu0 12
    %2568 = vperm.xlu0 %2567, %v91
    %v2569 = vpop.permute.xlu0 %2568
    %2571 = vset.pattern.permute.xlu0 12
    %2572 = vperm.xlu0 %2571, %v92
    %v2573 = vpop.permute.xlu0 %2572
    %v2575 = vlaneseq
    %v2576 = vshrl.u32 %v2575, 7
    %v2577 = vsub.s32 4, %v2576
    %v2578 = vrot.slane %v94, %v2577
    %v2579 = vmul.f32 %v2449, %v2578
    %v2580 = vmul.f32 %v2453, %v2578
    %v2581 = vmul.f32 %v2457, %v2578
    %v2582 = vmul.f32 %v2461, %v2578
    %v2583 = vmul.f32 %v2465, %v2578
    %v2584 = vmul.f32 %v2469, %v2578
    %v2585 = vmul.f32 %v2473, %v2578
    %v2586 = vmul.f32 %v2477, %v2578
    %v2587 = vmul.f32 %v2481, %v2578
    %v2588 = vmul.f32 %v2485, %v2578
    %v2589 = vmul.f32 %v2489, %v2578
    %v2590 = vmul.f32 %v2493, %v2578
    %v2591 = vmul.f32 %v2497, %v2578
    %v2592 = vmul.f32 %v2501, %v2578
    %v2593 = vmul.f32 %v2505, %v2578
    %v2594 = vmul.f32 %v2509, %v2578
    %v2595 = vmul.f32 %v2513, %v2578
    %v2596 = vmul.f32 %v2517, %v2578
    %v2597 = vmul.f32 %v2521, %v2578
    %v2598 = vmul.f32 %v2525, %v2578
    %v2599 = vmul.f32 %v2529, %v2578
    %v2600 = vmul.f32 %v2533, %v2578
    %v2601 = vmul.f32 %v2537, %v2578
    %v2602 = vmul.f32 %v2541, %v2578
    %v2603 = vmul.f32 %v2545, %v2578
    %v2604 = vmul.f32 %v2549, %v2578
    %v2605 = vmul.f32 %v2553, %v2578
    %v2606 = vmul.f32 %v2557, %v2578
    %v2607 = vmul.f32 %v2561, %v2578
    %v2608 = vmul.f32 %v2565, %v2578
    %v2609 = vmul.f32 %v2569, %v2578
    %v2610 = vmul.f32 %v2573, %v2578
    %v2611 = vadd.f32 %v2415, %v2579
    %v2612 = vadd.f32 %v2416, %v2580
    %v2613 = vadd.f32 %v2417, %v2581
    %v2614 = vadd.f32 %v2418, %v2582
    %v2615 = vadd.f32 %v2419, %v2583
    %v2616 = vadd.f32 %v2420, %v2584
    %v2617 = vadd.f32 %v2421, %v2585
    %v2618 = vadd.f32 %v2422, %v2586
    %v2619 = vadd.f32 %v2423, %v2587
    %v2620 = vadd.f32 %v2424, %v2588
    %v2621 = vadd.f32 %v2425, %v2589
    %v2622 = vadd.f32 %v2426, %v2590
    %v2623 = vadd.f32 %v2427, %v2591
    %v2624 = vadd.f32 %v2428, %v2592
    %v2625 = vadd.f32 %v2429, %v2593
    %v2626 = vadd.f32 %v2430, %v2594
    %v2627 = vadd.f32 %v2431, %v2595
    %v2628 = vadd.f32 %v2432, %v2596
    %v2629 = vadd.f32 %v2433, %v2597
    %v2630 = vadd.f32 %v2434, %v2598
    %v2631 = vadd.f32 %v2435, %v2599
    %v2632 = vadd.f32 %v2436, %v2600
    %v2633 = vadd.f32 %v2437, %v2601
    %v2634 = vadd.f32 %v2438, %v2602
    %v2635 = vadd.f32 %v2439, %v2603
    %v2636 = vadd.f32 %v2440, %v2604
    %v2637 = vadd.f32 %v2441, %v2605
    %v2638 = vadd.f32 %v2442, %v2606
    %v2639 = vadd.f32 %v2443, %v2607
    %v2640 = vadd.f32 %v2444, %v2608
    %v2641 = vadd.f32 %v2445, %v2609
    %v2642 = vadd.f32 %v2446, %v2610
    %2643 = vset.pattern.permute.xlu0 13
    %2644 = vperm.xlu0 %2643, %v61
    %v2645 = vpop.permute.xlu0 %2644
    %2647 = vset.pattern.permute.xlu0 13
    %2648 = vperm.xlu0 %2647, %v62
    %v2649 = vpop.permute.xlu0 %2648
    %2651 = vset.pattern.permute.xlu0 13
    %2652 = vperm.xlu0 %2651, %v63
    %v2653 = vpop.permute.xlu0 %2652
    %2655 = vset.pattern.permute.xlu0 13
    %2656 = vperm.xlu0 %2655, %v64
    %v2657 = vpop.permute.xlu0 %2656
    %2659 = vset.pattern.permute.xlu0 13
    %2660 = vperm.xlu0 %2659, %v65
    %v2661 = vpop.permute.xlu0 %2660
    %2663 = vset.pattern.permute.xlu0 13
    %2664 = vperm.xlu0 %2663, %v66
    %v2665 = vpop.permute.xlu0 %2664
    %2667 = vset.pattern.permute.xlu0 13
    %2668 = vperm.xlu0 %2667, %v67
    %v2669 = vpop.permute.xlu0 %2668
    %2671 = vset.pattern.permute.xlu0 13
    %2672 = vperm.xlu0 %2671, %v68
    %v2673 = vpop.permute.xlu0 %2672
    %2675 = vset.pattern.permute.xlu0 13
    %2676 = vperm.xlu0 %2675, %v69
    %v2677 = vpop.permute.xlu0 %2676
    %2679 = vset.pattern.permute.xlu0 13
    %2680 = vperm.xlu0 %2679, %v70
    %v2681 = vpop.permute.xlu0 %2680
    %2683 = vset.pattern.permute.xlu0 13
    %2684 = vperm.xlu0 %2683, %v71
    %v2685 = vpop.permute.xlu0 %2684
    %2687 = vset.pattern.permute.xlu0 13
    %2688 = vperm.xlu0 %2687, %v72
    %v2689 = vpop.permute.xlu0 %2688
    %2691 = vset.pattern.permute.xlu0 13
    %2692 = vperm.xlu0 %2691, %v73
    %v2693 = vpop.permute.xlu0 %2692
    %2695 = vset.pattern.permute.xlu0 13
    %2696 = vperm.xlu0 %2695, %v74
    %v2697 = vpop.permute.xlu0 %2696
    %2699 = vset.pattern.permute.xlu0 13
    %2700 = vperm.xlu0 %2699, %v75
    %v2701 = vpop.permute.xlu0 %2700
    %2703 = vset.pattern.permute.xlu0 13
    %2704 = vperm.xlu0 %2703, %v76
    %v2705 = vpop.permute.xlu0 %2704
    %2707 = vset.pattern.permute.xlu0 13
    %2708 = vperm.xlu0 %2707, %v77
    %v2709 = vpop.permute.xlu0 %2708
    %2711 = vset.pattern.permute.xlu0 13
    %2712 = vperm.xlu0 %2711, %v78
    %v2713 = vpop.permute.xlu0 %2712
    %2715 = vset.pattern.permute.xlu0 13
    %2716 = vperm.xlu0 %2715, %v79
    %v2717 = vpop.permute.xlu0 %2716
    %2719 = vset.pattern.permute.xlu0 13
    %2720 = vperm.xlu0 %2719, %v80
    %v2721 = vpop.permute.xlu0 %2720
    %2723 = vset.pattern.permute.xlu0 13
    %2724 = vperm.xlu0 %2723, %v81
    %v2725 = vpop.permute.xlu0 %2724
    %2727 = vset.pattern.permute.xlu0 13
    %2728 = vperm.xlu0 %2727, %v82
    %v2729 = vpop.permute.xlu0 %2728
    %2731 = vset.pattern.permute.xlu0 13
    %2732 = vperm.xlu0 %2731, %v83
    %v2733 = vpop.permute.xlu0 %2732
    %2735 = vset.pattern.permute.xlu0 13
    %2736 = vperm.xlu0 %2735, %v84
    %v2737 = vpop.permute.xlu0 %2736
    %2739 = vset.pattern.permute.xlu0 13
    %2740 = vperm.xlu0 %2739, %v85
    %v2741 = vpop.permute.xlu0 %2740
    %2743 = vset.pattern.permute.xlu0 13
    %2744 = vperm.xlu0 %2743, %v86
    %v2745 = vpop.permute.xlu0 %2744
    %2747 = vset.pattern.permute.xlu0 13
    %2748 = vperm.xlu0 %2747, %v87
    %v2749 = vpop.permute.xlu0 %2748
    %2751 = vset.pattern.permute.xlu0 13
    %2752 = vperm.xlu0 %2751, %v88
    %v2753 = vpop.permute.xlu0 %2752
    %2755 = vset.pattern.permute.xlu0 13
    %2756 = vperm.xlu0 %2755, %v89
    %v2757 = vpop.permute.xlu0 %2756
    %2759 = vset.pattern.permute.xlu0 13
    %2760 = vperm.xlu0 %2759, %v90
    %v2761 = vpop.permute.xlu0 %2760
    %2763 = vset.pattern.permute.xlu0 13
    %2764 = vperm.xlu0 %2763, %v91
    %v2765 = vpop.permute.xlu0 %2764
    %2767 = vset.pattern.permute.xlu0 13
    %2768 = vperm.xlu0 %2767, %v92
    %v2769 = vpop.permute.xlu0 %2768
    %v2771 = vlaneseq
    %v2772 = vshrl.u32 %v2771, 7
    %v2773 = vsub.s32 5, %v2772
    %v2774 = vrot.slane %v94, %v2773
    %v2775 = vmul.f32 %v2645, %v2774
    %v2776 = vmul.f32 %v2649, %v2774
    %v2777 = vmul.f32 %v2653, %v2774
    %v2778 = vmul.f32 %v2657, %v2774
    %v2779 = vmul.f32 %v2661, %v2774
    %v2780 = vmul.f32 %v2665, %v2774
    %v2781 = vmul.f32 %v2669, %v2774
    %v2782 = vmul.f32 %v2673, %v2774
    %v2783 = vmul.f32 %v2677, %v2774
    %v2784 = vmul.f32 %v2681, %v2774
    %v2785 = vmul.f32 %v2685, %v2774
    %v2786 = vmul.f32 %v2689, %v2774
    %v2787 = vmul.f32 %v2693, %v2774
    %v2788 = vmul.f32 %v2697, %v2774
    %v2789 = vmul.f32 %v2701, %v2774
    %v2790 = vmul.f32 %v2705, %v2774
    %v2791 = vmul.f32 %v2709, %v2774
    %v2792 = vmul.f32 %v2713, %v2774
    %v2793 = vmul.f32 %v2717, %v2774
    %v2794 = vmul.f32 %v2721, %v2774
    %v2795 = vmul.f32 %v2725, %v2774
    %v2796 = vmul.f32 %v2729, %v2774
    %v2797 = vmul.f32 %v2733, %v2774
    %v2798 = vmul.f32 %v2737, %v2774
    %v2799 = vmul.f32 %v2741, %v2774
    %v2800 = vmul.f32 %v2745, %v2774
    %v2801 = vmul.f32 %v2749, %v2774
    %v2802 = vmul.f32 %v2753, %v2774
    %v2803 = vmul.f32 %v2757, %v2774
    %v2804 = vmul.f32 %v2761, %v2774
    %v2805 = vmul.f32 %v2765, %v2774
    %v2806 = vmul.f32 %v2769, %v2774
    %v2807 = vadd.f32 %v2611, %v2775
    %v2808 = vadd.f32 %v2612, %v2776
    %v2809 = vadd.f32 %v2613, %v2777
    %v2810 = vadd.f32 %v2614, %v2778
    %v2811 = vadd.f32 %v2615, %v2779
    %v2812 = vadd.f32 %v2616, %v2780
    %v2813 = vadd.f32 %v2617, %v2781
    %v2814 = vadd.f32 %v2618, %v2782
    %v2815 = vadd.f32 %v2619, %v2783
    %v2816 = vadd.f32 %v2620, %v2784
    %v2817 = vadd.f32 %v2621, %v2785
    %v2818 = vadd.f32 %v2622, %v2786
    %v2819 = vadd.f32 %v2623, %v2787
    %v2820 = vadd.f32 %v2624, %v2788
    %v2821 = vadd.f32 %v2625, %v2789
    %v2822 = vadd.f32 %v2626, %v2790
    %v2823 = vadd.f32 %v2627, %v2791
    %v2824 = vadd.f32 %v2628, %v2792
    %v2825 = vadd.f32 %v2629, %v2793
    %v2826 = vadd.f32 %v2630, %v2794
    %v2827 = vadd.f32 %v2631, %v2795
    %v2828 = vadd.f32 %v2632, %v2796
    %v2829 = vadd.f32 %v2633, %v2797
    %v2830 = vadd.f32 %v2634, %v2798
    %v2831 = vadd.f32 %v2635, %v2799
    %v2832 = vadd.f32 %v2636, %v2800
    %v2833 = vadd.f32 %v2637, %v2801
    %v2834 = vadd.f32 %v2638, %v2802
    %v2835 = vadd.f32 %v2639, %v2803
    %v2836 = vadd.f32 %v2640, %v2804
    %v2837 = vadd.f32 %v2641, %v2805
    %v2838 = vadd.f32 %v2642, %v2806
    %2839 = vset.pattern.permute.xlu0 14
    %2840 = vperm.xlu0 %2839, %v61
    %v2841 = vpop.permute.xlu0 %2840
    %2843 = vset.pattern.permute.xlu0 14
    %2844 = vperm.xlu0 %2843, %v62
    %v2845 = vpop.permute.xlu0 %2844
    %2847 = vset.pattern.permute.xlu0 14
    %2848 = vperm.xlu0 %2847, %v63
    %v2849 = vpop.permute.xlu0 %2848
    %2851 = vset.pattern.permute.xlu0 14
    %2852 = vperm.xlu0 %2851, %v64
    %v2853 = vpop.permute.xlu0 %2852
    %2855 = vset.pattern.permute.xlu0 14
    %2856 = vperm.xlu0 %2855, %v65
    %v2857 = vpop.permute.xlu0 %2856
    %2859 = vset.pattern.permute.xlu0 14
    %2860 = vperm.xlu0 %2859, %v66
    %v2861 = vpop.permute.xlu0 %2860
    %2863 = vset.pattern.permute.xlu0 14
    %2864 = vperm.xlu0 %2863, %v67
    %v2865 = vpop.permute.xlu0 %2864
    %2867 = vset.pattern.permute.xlu0 14
    %2868 = vperm.xlu0 %2867, %v68
    %v2869 = vpop.permute.xlu0 %2868
    %2871 = vset.pattern.permute.xlu0 14
    %2872 = vperm.xlu0 %2871, %v69
    %v2873 = vpop.permute.xlu0 %2872
    %2875 = vset.pattern.permute.xlu0 14
    %2876 = vperm.xlu0 %2875, %v70
    %v2877 = vpop.permute.xlu0 %2876
    %2879 = vset.pattern.permute.xlu0 14
    %2880 = vperm.xlu0 %2879, %v71
    %v2881 = vpop.permute.xlu0 %2880
    %2883 = vset.pattern.permute.xlu0 14
    %2884 = vperm.xlu0 %2883, %v72
    %v2885 = vpop.permute.xlu0 %2884
    %2887 = vset.pattern.permute.xlu0 14
    %2888 = vperm.xlu0 %2887, %v73
    %v2889 = vpop.permute.xlu0 %2888
    %2891 = vset.pattern.permute.xlu0 14
    %2892 = vperm.xlu0 %2891, %v74
    %v2893 = vpop.permute.xlu0 %2892
    %2895 = vset.pattern.permute.xlu0 14
    %2896 = vperm.xlu0 %2895, %v75
    %v2897 = vpop.permute.xlu0 %2896
    %2899 = vset.pattern.permute.xlu0 14
    %2900 = vperm.xlu0 %2899, %v76
    %v2901 = vpop.permute.xlu0 %2900
    %2903 = vset.pattern.permute.xlu0 14
    %2904 = vperm.xlu0 %2903, %v77
    %v2905 = vpop.permute.xlu0 %2904
    %2907 = vset.pattern.permute.xlu0 14
    %2908 = vperm.xlu0 %2907, %v78
    %v2909 = vpop.permute.xlu0 %2908
    %2911 = vset.pattern.permute.xlu0 14
    %2912 = vperm.xlu0 %2911, %v79
    %v2913 = vpop.permute.xlu0 %2912
    %2915 = vset.pattern.permute.xlu0 14
    %2916 = vperm.xlu0 %2915, %v80
    %v2917 = vpop.permute.xlu0 %2916
    %2919 = vset.pattern.permute.xlu0 14
    %2920 = vperm.xlu0 %2919, %v81
    %v2921 = vpop.permute.xlu0 %2920
    %2923 = vset.pattern.permute.xlu0 14
    %2924 = vperm.xlu0 %2923, %v82
    %v2925 = vpop.permute.xlu0 %2924
    %2927 = vset.pattern.permute.xlu0 14
    %2928 = vperm.xlu0 %2927, %v83
    %v2929 = vpop.permute.xlu0 %2928
    %2931 = vset.pattern.permute.xlu0 14
    %2932 = vperm.xlu0 %2931, %v84
    %v2933 = vpop.permute.xlu0 %2932
    %2935 = vset.pattern.permute.xlu0 14
    %2936 = vperm.xlu0 %2935, %v85
    %v2937 = vpop.permute.xlu0 %2936
    %2939 = vset.pattern.permute.xlu0 14
    %2940 = vperm.xlu0 %2939, %v86
    %v2941 = vpop.permute.xlu0 %2940
    %2943 = vset.pattern.permute.xlu0 14
    %2944 = vperm.xlu0 %2943, %v87
    %v2945 = vpop.permute.xlu0 %2944
    %2947 = vset.pattern.permute.xlu0 14
    %2948 = vperm.xlu0 %2947, %v88
    %v2949 = vpop.permute.xlu0 %2948
    %2951 = vset.pattern.permute.xlu0 14
    %2952 = vperm.xlu0 %2951, %v89
    %v2953 = vpop.permute.xlu0 %2952
    %2955 = vset.pattern.permute.xlu0 14
    %2956 = vperm.xlu0 %2955, %v90
    %v2957 = vpop.permute.xlu0 %2956
    %2959 = vset.pattern.permute.xlu0 14
    %2960 = vperm.xlu0 %2959, %v91
    %v2961 = vpop.permute.xlu0 %2960
    %2963 = vset.pattern.permute.xlu0 14
    %2964 = vperm.xlu0 %2963, %v92
    %v2965 = vpop.permute.xlu0 %2964
    %v2967 = vlaneseq
    %v2968 = vshrl.u32 %v2967, 7
    %v2969 = vsub.s32 6, %v2968
    %v2970 = vrot.slane %v94, %v2969
    %v2971 = vmul.f32 %v2841, %v2970
    %v2972 = vmul.f32 %v2845, %v2970
    %v2973 = vmul.f32 %v2849, %v2970
    %v2974 = vmul.f32 %v2853, %v2970
    %v2975 = vmul.f32 %v2857, %v2970
    %v2976 = vmul.f32 %v2861, %v2970
    %v2977 = vmul.f32 %v2865, %v2970
    %v2978 = vmul.f32 %v2869, %v2970
    %v2979 = vmul.f32 %v2873, %v2970
    %v2980 = vmul.f32 %v2877, %v2970
    %v2981 = vmul.f32 %v2881, %v2970
    %v2982 = vmul.f32 %v2885, %v2970
    %v2983 = vmul.f32 %v2889, %v2970
    %v2984 = vmul.f32 %v2893, %v2970
    %v2985 = vmul.f32 %v2897, %v2970
    %v2986 = vmul.f32 %v2901, %v2970
    %v2987 = vmul.f32 %v2905, %v2970
    %v2988 = vmul.f32 %v2909, %v2970
    %v2989 = vmul.f32 %v2913, %v2970
    %v2990 = vmul.f32 %v2917, %v2970
    %v2991 = vmul.f32 %v2921, %v2970
    %v2992 = vmul.f32 %v2925, %v2970
    %v2993 = vmul.f32 %v2929, %v2970
    %v2994 = vmul.f32 %v2933, %v2970
    %v2995 = vmul.f32 %v2937, %v2970
    %v2996 = vmul.f32 %v2941, %v2970
    %v2997 = vmul.f32 %v2945, %v2970
    %v2998 = vmul.f32 %v2949, %v2970
    %v2999 = vmul.f32 %v2953, %v2970
    %v3000 = vmul.f32 %v2957, %v2970
    %v3001 = vmul.f32 %v2961, %v2970
    %v3002 = vmul.f32 %v2965, %v2970
    %v3003 = vadd.f32 %v2807, %v2971
    %v3004 = vadd.f32 %v2808, %v2972
    %v3005 = vadd.f32 %v2809, %v2973
    %v3006 = vadd.f32 %v2810, %v2974
    %v3007 = vadd.f32 %v2811, %v2975
    %v3008 = vadd.f32 %v2812, %v2976
    %v3009 = vadd.f32 %v2813, %v2977
    %v3010 = vadd.f32 %v2814, %v2978
    %v3011 = vadd.f32 %v2815, %v2979
    %v3012 = vadd.f32 %v2816, %v2980
    %v3013 = vadd.f32 %v2817, %v2981
    %v3014 = vadd.f32 %v2818, %v2982
    %v3015 = vadd.f32 %v2819, %v2983
    %v3016 = vadd.f32 %v2820, %v2984
    %v3017 = vadd.f32 %v2821, %v2985
    %v3018 = vadd.f32 %v2822, %v2986
    %v3019 = vadd.f32 %v2823, %v2987
    %v3020 = vadd.f32 %v2824, %v2988
    %v3021 = vadd.f32 %v2825, %v2989
    %v3022 = vadd.f32 %v2826, %v2990
    %v3023 = vadd.f32 %v2827, %v2991
    %v3024 = vadd.f32 %v2828, %v2992
    %v3025 = vadd.f32 %v2829, %v2993
    %v3026 = vadd.f32 %v2830, %v2994
    %v3027 = vadd.f32 %v2831, %v2995
    %v3028 = vadd.f32 %v2832, %v2996
    %v3029 = vadd.f32 %v2833, %v2997
    %v3030 = vadd.f32 %v2834, %v2998
    %v3031 = vadd.f32 %v2835, %v2999
    %v3032 = vadd.f32 %v2836, %v3000
    %v3033 = vadd.f32 %v2837, %v3001
    %v3034 = vadd.f32 %v2838, %v3002
    %3035 = vset.pattern.permute.xlu0 15
    %3036 = vperm.xlu0 %3035, %v61
    %v3037 = vpop.permute.xlu0 %3036
    %3039 = vset.pattern.permute.xlu0 15
    %3040 = vperm.xlu0 %3039, %v62
    %v3041 = vpop.permute.xlu0 %3040
    %3043 = vset.pattern.permute.xlu0 15
    %3044 = vperm.xlu0 %3043, %v63
    %v3045 = vpop.permute.xlu0 %3044
    %3047 = vset.pattern.permute.xlu0 15
    %3048 = vperm.xlu0 %3047, %v64
    %v3049 = vpop.permute.xlu0 %3048
    %3051 = vset.pattern.permute.xlu0 15
    %3052 = vperm.xlu0 %3051, %v65
    %v3053 = vpop.permute.xlu0 %3052
    %3055 = vset.pattern.permute.xlu0 15
    %3056 = vperm.xlu0 %3055, %v66
    %v3057 = vpop.permute.xlu0 %3056
    %3059 = vset.pattern.permute.xlu0 15
    %3060 = vperm.xlu0 %3059, %v67
    %v3061 = vpop.permute.xlu0 %3060
    %3063 = vset.pattern.permute.xlu0 15
    %3064 = vperm.xlu0 %3063, %v68
    %v3065 = vpop.permute.xlu0 %3064
    %3067 = vset.pattern.permute.xlu0 15
    %3068 = vperm.xlu0 %3067, %v69
    %v3069 = vpop.permute.xlu0 %3068
    %3071 = vset.pattern.permute.xlu0 15
    %3072 = vperm.xlu0 %3071, %v70
    %v3073 = vpop.permute.xlu0 %3072
    %3075 = vset.pattern.permute.xlu0 15
    %3076 = vperm.xlu0 %3075, %v71
    %v3077 = vpop.permute.xlu0 %3076
    %3079 = vset.pattern.permute.xlu0 15
    %3080 = vperm.xlu0 %3079, %v72
    %v3081 = vpop.permute.xlu0 %3080
    %3083 = vset.pattern.permute.xlu0 15
    %3084 = vperm.xlu0 %3083, %v73
    %v3085 = vpop.permute.xlu0 %3084
    %3087 = vset.pattern.permute.xlu0 15
    %3088 = vperm.xlu0 %3087, %v74
    %v3089 = vpop.permute.xlu0 %3088
    %3091 = vset.pattern.permute.xlu0 15
    %3092 = vperm.xlu0 %3091, %v75
    %v3093 = vpop.permute.xlu0 %3092
    %3095 = vset.pattern.permute.xlu0 15
    %3096 = vperm.xlu0 %3095, %v76
    %v3097 = vpop.permute.xlu0 %3096
    %3099 = vset.pattern.permute.xlu0 15
    %3100 = vperm.xlu0 %3099, %v77
    %v3101 = vpop.permute.xlu0 %3100
    %3103 = vset.pattern.permute.xlu0 15
    %3104 = vperm.xlu0 %3103, %v78
    %v3105 = vpop.permute.xlu0 %3104
    %3107 = vset.pattern.permute.xlu0 15
    %3108 = vperm.xlu0 %3107, %v79
    %v3109 = vpop.permute.xlu0 %3108
    %3111 = vset.pattern.permute.xlu0 15
    %3112 = vperm.xlu0 %3111, %v80
    %v3113 = vpop.permute.xlu0 %3112
    %3115 = vset.pattern.permute.xlu0 15
    %3116 = vperm.xlu0 %3115, %v81
    %v3117 = vpop.permute.xlu0 %3116
    %3119 = vset.pattern.permute.xlu0 15
    %3120 = vperm.xlu0 %3119, %v82
    %v3121 = vpop.permute.xlu0 %3120
    %3123 = vset.pattern.permute.xlu0 15
    %3124 = vperm.xlu0 %3123, %v83
    %v3125 = vpop.permute.xlu0 %3124
    %3127 = vset.pattern.permute.xlu0 15
    %3128 = vperm.xlu0 %3127, %v84
    %v3129 = vpop.permute.xlu0 %3128
    %3131 = vset.pattern.permute.xlu0 15
    %3132 = vperm.xlu0 %3131, %v85
    %v3133 = vpop.permute.xlu0 %3132
    %3135 = vset.pattern.permute.xlu0 15
    %3136 = vperm.xlu0 %3135, %v86
    %v3137 = vpop.permute.xlu0 %3136
    %3139 = vset.pattern.permute.xlu0 15
    %3140 = vperm.xlu0 %3139, %v87
    %v3141 = vpop.permute.xlu0 %3140
    %3143 = vset.pattern.permute.xlu0 15
    %3144 = vperm.xlu0 %3143, %v88
    %v3145 = vpop.permute.xlu0 %3144
    %3147 = vset.pattern.permute.xlu0 15
    %3148 = vperm.xlu0 %3147, %v89
    %v3149 = vpop.permute.xlu0 %3148
    %3151 = vset.pattern.permute.xlu0 15
    %3152 = vperm.xlu0 %3151, %v90
    %v3153 = vpop.permute.xlu0 %3152
    %3155 = vset.pattern.permute.xlu0 15
    %3156 = vperm.xlu0 %3155, %v91
    %v3157 = vpop.permute.xlu0 %3156
    %3159 = vset.pattern.permute.xlu0 15
    %3160 = vperm.xlu0 %3159, %v92
    %v3161 = vpop.permute.xlu0 %3160
    %v3163 = vlaneseq
    %v3164 = vshrl.u32 %v3163, 7
    %v3165 = vsub.s32 7, %v3164
    %v3166 = vrot.slane %v94, %v3165
    %v3167 = vmul.f32 %v3037, %v3166
    %v3168 = vmul.f32 %v3041, %v3166
    %v3169 = vmul.f32 %v3045, %v3166
    %v3170 = vmul.f32 %v3049, %v3166
    %v3171 = vmul.f32 %v3053, %v3166
    %v3172 = vmul.f32 %v3057, %v3166
    %v3173 = vmul.f32 %v3061, %v3166
    %v3174 = vmul.f32 %v3065, %v3166
    %v3175 = vmul.f32 %v3069, %v3166
    %v3176 = vmul.f32 %v3073, %v3166
    %v3177 = vmul.f32 %v3077, %v3166
    %v3178 = vmul.f32 %v3081, %v3166
    %v3179 = vmul.f32 %v3085, %v3166
    %v3180 = vmul.f32 %v3089, %v3166
    %v3181 = vmul.f32 %v3093, %v3166
    %v3182 = vmul.f32 %v3097, %v3166
    %v3183 = vmul.f32 %v3101, %v3166
    %v3184 = vmul.f32 %v3105, %v3166
    %v3185 = vmul.f32 %v3109, %v3166
    %v3186 = vmul.f32 %v3113, %v3166
    %v3187 = vmul.f32 %v3117, %v3166
    %v3188 = vmul.f32 %v3121, %v3166
    %v3189 = vmul.f32 %v3125, %v3166
    %v3190 = vmul.f32 %v3129, %v3166
    %v3191 = vmul.f32 %v3133, %v3166
    %v3192 = vmul.f32 %v3137, %v3166
    %v3193 = vmul.f32 %v3141, %v3166
    %v3194 = vmul.f32 %v3145, %v3166
    %v3195 = vmul.f32 %v3149, %v3166
    %v3196 = vmul.f32 %v3153, %v3166
    %v3197 = vmul.f32 %v3157, %v3166
    %v3198 = vmul.f32 %v3161, %v3166
    %v3199 = vadd.f32 %v3003, %v3167
    %v3200 = vadd.f32 %v3004, %v3168
    %v3201 = vadd.f32 %v3005, %v3169
    %v3202 = vadd.f32 %v3006, %v3170
    %v3203 = vadd.f32 %v3007, %v3171
    %v3204 = vadd.f32 %v3008, %v3172
    %v3205 = vadd.f32 %v3009, %v3173
    %v3206 = vadd.f32 %v3010, %v3174
    %v3207 = vadd.f32 %v3011, %v3175
    %v3208 = vadd.f32 %v3012, %v3176
    %v3209 = vadd.f32 %v3013, %v3177
    %v3210 = vadd.f32 %v3014, %v3178
    %v3211 = vadd.f32 %v3015, %v3179
    %v3212 = vadd.f32 %v3016, %v3180
    %v3213 = vadd.f32 %v3017, %v3181
    %v3214 = vadd.f32 %v3018, %v3182
    %v3215 = vadd.f32 %v3019, %v3183
    %v3216 = vadd.f32 %v3020, %v3184
    %v3217 = vadd.f32 %v3021, %v3185
    %v3218 = vadd.f32 %v3022, %v3186
    %v3219 = vadd.f32 %v3023, %v3187
    %v3220 = vadd.f32 %v3024, %v3188
    %v3221 = vadd.f32 %v3025, %v3189
    %v3222 = vadd.f32 %v3026, %v3190
    %v3223 = vadd.f32 %v3027, %v3191
    %v3224 = vadd.f32 %v3028, %v3192
    %v3225 = vadd.f32 %v3029, %v3193
    %v3226 = vadd.f32 %v3030, %v3194
    %v3227 = vadd.f32 %v3031, %v3195
    %v3228 = vadd.f32 %v3032, %v3196
    %v3229 = vadd.f32 %v3033, %v3197
    %v3230 = vadd.f32 %v3034, %v3198
    %v3231 = vld [vmem:[%s2] sm:$0x1]
    %v3233 = vlaneseq
    %v3234 = vshrl.u32 %v3233, 7
    %v3235 = vsub.s32 0, %v3234
    %v3236 = vrot.slane %v3231, %v3235
    %v3238 = vadd.f32 %v3199, %v3236
    %v3239 = vadd.f32 %v3200, %v3236
    %v3240 = vadd.f32 %v3201, %v3236
    %v3241 = vadd.f32 %v3202, %v3236
    %v3242 = vadd.f32 %v3203, %v3236
    %v3243 = vadd.f32 %v3204, %v3236
    %v3244 = vadd.f32 %v3205, %v3236
    %v3245 = vadd.f32 %v3206, %v3236
    %v3246 = vadd.f32 %v3207, %v3236
    %v3247 = vadd.f32 %v3208, %v3236
    %v3248 = vadd.f32 %v3209, %v3236
    %v3249 = vadd.f32 %v3210, %v3236
    %v3250 = vadd.f32 %v3211, %v3236
    %v3251 = vadd.f32 %v3212, %v3236
    %v3252 = vadd.f32 %v3213, %v3236
    %v3253 = vadd.f32 %v3214, %v3236
    %v3254 = vadd.f32 %v3215, %v3236
    %v3255 = vadd.f32 %v3216, %v3236
    %v3256 = vadd.f32 %v3217, %v3236
    %v3257 = vadd.f32 %v3218, %v3236
    %v3258 = vadd.f32 %v3219, %v3236
    %v3259 = vadd.f32 %v3220, %v3236
    %v3260 = vadd.f32 %v3221, %v3236
    %v3261 = vadd.f32 %v3222, %v3236
    %v3262 = vadd.f32 %v3223, %v3236
    %v3263 = vadd.f32 %v3224, %v3236
    %v3264 = vadd.f32 %v3225, %v3236
    %v3265 = vadd.f32 %v3226, %v3236
    %v3266 = vadd.f32 %v3227, %v3236
    %v3267 = vadd.f32 %v3228, %v3236
    %v3268 = vadd.f32 %v3229, %v3236
    %v3269 = vadd.f32 %v3230, %v3236
    %v3270 = vmax.f32 %v3238, 0.0
    %v3271 = vmax.f32 %v3239, 0.0
    %v3272 = vmax.f32 %v3240, 0.0
    %v3273 = vmax.f32 %v3241, 0.0
    %v3274 = vmax.f32 %v3242, 0.0
    %v3275 = vmax.f32 %v3243, 0.0
    %v3276 = vmax.f32 %v3244, 0.0
    %v3277 = vmax.f32 %v3245, 0.0
    %v3278 = vmax.f32 %v3246, 0.0
    %v3279 = vmax.f32 %v3247, 0.0
    %v3280 = vmax.f32 %v3248, 0.0
    %v3281 = vmax.f32 %v3249, 0.0
    %v3282 = vmax.f32 %v3250, 0.0
    %v3283 = vmax.f32 %v3251, 0.0
    %v3284 = vmax.f32 %v3252, 0.0
    %v3285 = vmax.f32 %v3253, 0.0
    %v3286 = vmax.f32 %v3254, 0.0
    %v3287 = vmax.f32 %v3255, 0.0
    %v3288 = vmax.f32 %v3256, 0.0
    %v3289 = vmax.f32 %v3257, 0.0
    %v3290 = vmax.f32 %v3258, 0.0
    %v3291 = vmax.f32 %v3259, 0.0
    %v3292 = vmax.f32 %v3260, 0.0
    %v3293 = vmax.f32 %v3261, 0.0
    %v3294 = vmax.f32 %v3262, 0.0
    %v3295 = vmax.f32 %v3263, 0.0
    %v3296 = vmax.f32 %v3264, 0.0
    %v3297 = vmax.f32 %v3265, 0.0
    %v3298 = vmax.f32 %v3266, 0.0
    %v3299 = vmax.f32 %v3267, 0.0
    %v3300 = vmax.f32 %v3268, 0.0
    %v3301 = vmax.f32 %v3269, 0.0
    %v3302 = vpack.c.bf16 %v3271, %v3270
    %v3303 = vpack.c.bf16 %v3273, %v3272
    %v3304 = vpack.c.bf16 %v3275, %v3274
    %v3305 = vpack.c.bf16 %v3277, %v3276
    %v3306 = vpack.c.bf16 %v3279, %v3278
    %v3307 = vpack.c.bf16 %v3281, %v3280
    %v3308 = vpack.c.bf16 %v3283, %v3282
    %v3309 = vpack.c.bf16 %v3285, %v3284
    %v3310 = vpack.c.bf16 %v3287, %v3286
    %v3311 = vpack.c.bf16 %v3289, %v3288
    %v3312 = vpack.c.bf16 %v3291, %v3290
    %v3313 = vpack.c.bf16 %v3293, %v3292
    %v3314 = vpack.c.bf16 %v3295, %v3294
    %v3315 = vpack.c.bf16 %v3297, %v3296
    %v3316 = vpack.c.bf16 %v3299, %v3298
    %v3317 = vpack.c.bf16 %v3301, %v3300
    %v3318 = vld [vmem:[%s3] sm:$0xf]
    %v3319 = vld [vmem:[%s3 + $0x4] sm:$0xf]
    %v3320 = vld [vmem:[%s3 + $0x8] sm:$0xf]
    %v3321 = vld [vmem:[%s3 + $0xc] sm:$0xf]
    %v3322 = vld [vmem:[%s3 + $0x10] sm:$0xf]
    %v3323 = vld [vmem:[%s3 + $0x14] sm:$0xf]
    %v3324 = vld [vmem:[%s3 + $0x18] sm:$0xf]
    %v3325 = vld [vmem:[%s3 + $0x1c] sm:$0xf]
    %v3326 = vld [vmem:[%s3 + $0x20] sm:$0xf]
    %v3327 = vld [vmem:[%s3 + $0x24] sm:$0xf]
    %v3328 = vld [vmem:[%s3 + $0x28] sm:$0xf]
    %v3329 = vld [vmem:[%s3 + $0x2c] sm:$0xf]
    %v3330 = vld [vmem:[%s3 + $0x30] sm:$0xf]
    %v3331 = vld [vmem:[%s3 + $0x34] sm:$0xf]
    %v3332 = vld [vmem:[%s3 + $0x38] sm:$0xf]
    %v3333 = vld [vmem:[%s3 + $0x3c] sm:$0xf]
    %v3334 = vld [vmem:[%s4] sm:$0x1]
    %v3336 = vlaneseq
    %v3337 = vshrl.u32 %v3336, 7
    %v3338 = vsub.s32 0, %v3337
    %v3339 = vrot.slane %v3334, %v3338
    %v3357 = vunpack.c.l.b16 %v3318
    %v3358 = vunpack.c.l.b16 %v3319
    %v3359 = vunpack.c.l.b16 %v3320
    %v3360 = vunpack.c.l.b16 %v3321
    %v3361 = vunpack.c.l.b16 %v3322
    %v3362 = vunpack.c.l.b16 %v3323
    %v3363 = vunpack.c.l.b16 %v3324
    %v3364 = vunpack.c.l.b16 %v3325
    %v3365 = vunpack.c.l.b16 %v3326
    %v3366 = vunpack.c.l.b16 %v3327
    %v3367 = vunpack.c.l.b16 %v3328
    %v3368 = vunpack.c.l.b16 %v3329
    %v3369 = vunpack.c.l.b16 %v3330
    %v3370 = vunpack.c.l.b16 %v3331
    %v3371 = vunpack.c.l.b16 %v3332
    %v3372 = vunpack.c.l.b16 %v3333
    %v3373 = vpack.c.b16 %v3358, %v3357
    %v3374 = vpack.c.b16 %v3360, %v3359
    %v3375 = vpack.c.b16 %v3362, %v3361
    %v3376 = vpack.c.b16 %v3364, %v3363
    %v3377 = vpack.c.b16 %v3366, %v3365
    %v3378 = vpack.c.b16 %v3368, %v3367
    %v3379 = vpack.c.b16 %v3370, %v3369
    %v3380 = vpack.c.b16 %v3372, %v3371
    %3389 = vmatprep.subr.bf16.mxu0 0
    %3390 = vmatpush1.bf16.msra.mxu0 %v3373
    %3391 = vmatprep.subr.bf16.mxu0 0
    %3392 = vmatpush1.bf16.msra.mxu0 %v3374
    %3393 = vmatprep.subr.bf16.mxu0 0
    %3394 = vmatpush1.bf16.msra.mxu0 %v3375
    %3395 = vmatprep.subr.bf16.mxu0 0
    %3396 = vmatpush1.bf16.msra.mxu0 %v3376
    %3397 = vmatprep.subr.bf16.mxu0 0
    %3398 = vmatpush1.bf16.msra.mxu0 %v3377
    %3399 = vmatprep.subr.bf16.mxu0 0
    %3400 = vmatpush1.bf16.msra.mxu0 %v3378
    %3401 = vmatprep.subr.bf16.mxu0 0
    %3402 = vmatpush1.bf16.msra.mxu0 %v3379
    %3403 = vmatprep.subr.bf16.mxu0 0
    %3404 = vmatpush1.bf16.msra.mxu0 %v3380
    %3405 = vmatprep.subr.bf16.mxu0 0
    %3406 = vmatpush1.bf16.msra.mxu0 0
    %3407 = vmatprep.subr.bf16.mxu0 0
    %3408 = vmatpush1.bf16.msra.mxu0 0
    %3409 = vmatprep.subr.bf16.mxu0 0
    %3410 = vmatpush1.bf16.msra.mxu0 0
    %3411 = vmatprep.subr.bf16.mxu0 0
    %3412 = vmatpush1.bf16.msra.mxu0 0
    %3413 = vmatprep.subr.bf16.mxu0 0
    %3414 = vmatpush1.bf16.msra.mxu0 0
    %3415 = vmatprep.subr.bf16.mxu0 0
    %3416 = vmatpush1.bf16.msra.mxu0 0
    %3417 = vmatprep.subr.bf16.mxu0 0
    %3418 = vmatpush1.bf16.msra.mxu0 0
    %3419 = vmatprep.subr.bf16.mxu0 0
    %3420 = vmatpush1.bf16.msra.mxu0 0
    %3421 = vmatprep.mubr.bf16.mxu0 0
    %3422 = vmatmul.mubr.bf16.gmra.mrb[0].mxu0 %v3302
    %v3423 = vpop.f32.mrb[0].mxu0
    %v3424 = vadd.f32 %v3339, %v3423
    %v3425 = vpop.f32.mrb[0].mxu0
    %v3426 = vpop.f32.mrb[0].mxu0
    %v3427 = vadd.f32 %v3339, %v3426
    %v3428 = vpop.f32.mrb[0].mxu0
    %3429 = vmatprep.mubr.bf16.mxu0 0
    %3430 = vmatmul.mubr.bf16.gmra.mrb[0].mxu0 %v3303
    %v3431 = vpop.f32.mrb[0].mxu0
    %v3432 = vadd.f32 %v3339, %v3431
    %v3433 = vpop.f32.mrb[0].mxu0
    %v3434 = vpop.f32.mrb[0].mxu0
    %v3435 = vadd.f32 %v3339, %v3434
    %v3436 = vpop.f32.mrb[0].mxu0
    %3437 = vmatprep.mubr.bf16.mxu0 0
    %3438 = vmatmul.mubr.bf16.gmra.mrb[0].mxu0 %v3304
    %v3439 = vpop.f32.mrb[0].mxu0
    %v3440 = vadd.f32 %v3339, %v3439
    %v3441 = vpop.f32.mrb[0].mxu0
    %v3442 = vpop.f32.mrb[0].mxu0
    %v3443 = vadd.f32 %v3339, %v3442
    %v3444 = vpop.f32.mrb[0].mxu0
    %3445 = vmatprep.mubr.bf16.mxu0 0
    %3446 = vmatmul.mubr.bf16.gmra.mrb[0].mxu0 %v3305
    %v3447 = vpop.f32.mrb[0].mxu0
    %v3448 = vadd.f32 %v3339, %v3447
    %v3449 = vpop.f32.mrb[0].mxu0
    %v3450 = vpop.f32.mrb[0].mxu0
    %v3451 = vadd.f32 %v3339, %v3450
    %v3452 = vpop.f32.mrb[0].mxu0
    %3453 = vmatprep.mubr.bf16.mxu0 0
    %3454 = vmatmul.mubr.bf16.gmra.mrb[0].mxu0 %v3306
    %v3455 = vpop.f32.mrb[0].mxu0
    %v3456 = vadd.f32 %v3339, %v3455
    %v3457 = vpop.f32.mrb[0].mxu0
    %v3458 = vpop.f32.mrb[0].mxu0
    %v3459 = vadd.f32 %v3339, %v3458
    %v3460 = vpop.f32.mrb[0].mxu0
    %3461 = vmatprep.mubr.bf16.mxu0 0
    %3462 = vmatmul.mubr.bf16.gmra.mrb[0].mxu0 %v3307
    %v3463 = vpop.f32.mrb[0].mxu0
    %v3464 = vadd.f32 %v3339, %v3463
    %v3465 = vpop.f32.mrb[0].mxu0
    %v3466 = vpop.f32.mrb[0].mxu0
    %v3467 = vadd.f32 %v3339, %v3466
    %v3468 = vpop.f32.mrb[0].mxu0
    %3469 = vmatprep.mubr.bf16.mxu0 0
    %3470 = vmatmul.mubr.bf16.gmra.mrb[0].mxu0 %v3308
    %v3471 = vpop.f32.mrb[0].mxu0
    %v3472 = vadd.f32 %v3339, %v3471
    %v3473 = vpop.f32.mrb[0].mxu0
    %v3474 = vpop.f32.mrb[0].mxu0
    %v3475 = vadd.f32 %v3339, %v3474
    %v3476 = vpop.f32.mrb[0].mxu0
    %3477 = vmatprep.mubr.bf16.mxu0 0
    %3478 = vmatmul.mubr.bf16.gmra.mrb[0].mxu0 %v3309
    %v3479 = vpop.f32.mrb[0].mxu0
    %v3480 = vadd.f32 %v3339, %v3479
    %v3481 = vpop.f32.mrb[0].mxu0
    %v3482 = vpop.f32.mrb[0].mxu0
    %v3483 = vadd.f32 %v3339, %v3482
    %v3484 = vpop.f32.mrb[0].mxu0
    %3485 = vmatprep.mubr.bf16.mxu0 0
    %3486 = vmatmul.mubr.bf16.gmra.mrb[0].mxu0 %v3310
    %v3487 = vpop.f32.mrb[0].mxu0
    %v3488 = vadd.f32 %v3339, %v3487
    %v3489 = vpop.f32.mrb[0].mxu0
    %v3490 = vpop.f32.mrb[0].mxu0
    %v3491 = vadd.f32 %v3339, %v3490
    %v3492 = vpop.f32.mrb[0].mxu0
    %3493 = vmatprep.mubr.bf16.mxu0 0
    %3494 = vmatmul.mubr.bf16.gmra.mrb[0].mxu0 %v3311
    %v3495 = vpop.f32.mrb[0].mxu0
    %v3496 = vadd.f32 %v3339, %v3495
    %v3497 = vpop.f32.mrb[0].mxu0
    %v3498 = vpop.f32.mrb[0].mxu0
    %v3499 = vadd.f32 %v3339, %v3498
    %v3500 = vpop.f32.mrb[0].mxu0
    %3501 = vmatprep.mubr.bf16.mxu0 0
    %3502 = vmatmul.mubr.bf16.gmra.mrb[0].mxu0 %v3312
    %v3503 = vpop.f32.mrb[0].mxu0
    %v3504 = vadd.f32 %v3339, %v3503
    %v3505 = vpop.f32.mrb[0].mxu0
    %v3506 = vpop.f32.mrb[0].mxu0
    %v3507 = vadd.f32 %v3339, %v3506
    %v3508 = vpop.f32.mrb[0].mxu0
    %3509 = vmatprep.mubr.bf16.mxu0 0
    %3510 = vmatmul.mubr.bf16.gmra.mrb[0].mxu0 %v3313
    %v3511 = vpop.f32.mrb[0].mxu0
    %v3512 = vadd.f32 %v3339, %v3511
    %v3513 = vpop.f32.mrb[0].mxu0
    %v3514 = vpop.f32.mrb[0].mxu0
    %v3515 = vadd.f32 %v3339, %v3514
    %v3516 = vpop.f32.mrb[0].mxu0
    %3517 = vmatprep.mubr.bf16.mxu0 0
    %3518 = vmatmul.mubr.bf16.gmra.mrb[0].mxu0 %v3314
    %v3519 = vpop.f32.mrb[0].mxu0
    %v3520 = vadd.f32 %v3339, %v3519
    %v3521 = vpop.f32.mrb[0].mxu0
    %v3522 = vpop.f32.mrb[0].mxu0
    %v3523 = vadd.f32 %v3339, %v3522
    %v3524 = vpop.f32.mrb[0].mxu0
    %3525 = vmatprep.mubr.bf16.mxu0 0
    %3526 = vmatmul.mubr.bf16.gmra.mrb[0].mxu0 %v3315
    %v3527 = vpop.f32.mrb[0].mxu0
    %v3528 = vadd.f32 %v3339, %v3527
    %v3529 = vpop.f32.mrb[0].mxu0
    %v3530 = vpop.f32.mrb[0].mxu0
    %v3531 = vadd.f32 %v3339, %v3530
    %v3532 = vpop.f32.mrb[0].mxu0
    %3533 = vmatprep.mubr.bf16.mxu0 0
    %3534 = vmatmul.mubr.bf16.gmra.mrb[0].mxu0 %v3316
    %v3535 = vpop.f32.mrb[0].mxu0
    %v3536 = vadd.f32 %v3339, %v3535
    %v3537 = vpop.f32.mrb[0].mxu0
    %v3538 = vpop.f32.mrb[0].mxu0
    %v3539 = vadd.f32 %v3339, %v3538
    %v3540 = vpop.f32.mrb[0].mxu0
    %3541 = vmatprep.mubr.bf16.mxu0 0
    %3542 = vmatmul.mubr.bf16.gmra.mrb[0].mxu0 %v3317
    %v3543 = vpop.f32.mrb[0].mxu0
    %v3544 = vadd.f32 %v3339, %v3543
    %v3545 = vpop.f32.mrb[0].mxu0
    %v3546 = vpop.f32.mrb[0].mxu0
    %v3547 = vadd.f32 %v3339, %v3546
    %v3548 = vpop.f32.mrb[0].mxu0
    %3549 = vdwg.mxu0
    %v3550 = vmax.f32 %v3424, 0.0
    %v3551 = vmax.f32 %v3427, 0.0
    %v3552 = vmax.f32 %v3432, 0.0
    %v3553 = vmax.f32 %v3435, 0.0
    %v3554 = vmax.f32 %v3440, 0.0
    %v3555 = vmax.f32 %v3443, 0.0
    %v3556 = vmax.f32 %v3448, 0.0
    %v3557 = vmax.f32 %v3451, 0.0
    %v3558 = vmax.f32 %v3456, 0.0
    %v3559 = vmax.f32 %v3459, 0.0
    %v3560 = vmax.f32 %v3464, 0.0
    %v3561 = vmax.f32 %v3467, 0.0
    %v3562 = vmax.f32 %v3472, 0.0
    %v3563 = vmax.f32 %v3475, 0.0
    %v3564 = vmax.f32 %v3480, 0.0
    %v3565 = vmax.f32 %v3483, 0.0
    %v3566 = vmax.f32 %v3488, 0.0
    %v3567 = vmax.f32 %v3491, 0.0
    %v3568 = vmax.f32 %v3496, 0.0
    %v3569 = vmax.f32 %v3499, 0.0
    %v3570 = vmax.f32 %v3504, 0.0
    %v3571 = vmax.f32 %v3507, 0.0
    %v3572 = vmax.f32 %v3512, 0.0
    %v3573 = vmax.f32 %v3515, 0.0
    %v3574 = vmax.f32 %v3520, 0.0
    %v3575 = vmax.f32 %v3523, 0.0
    %v3576 = vmax.f32 %v3528, 0.0
    %v3577 = vmax.f32 %v3531, 0.0
    %v3578 = vmax.f32 %v3536, 0.0
    %v3579 = vmax.f32 %v3539, 0.0
    %v3580 = vmax.f32 %v3544, 0.0
    %v3581 = vmax.f32 %v3547, 0.0
    %v3582 = vld [vmem:[%s5] sm:$0x1]
    %v3583 = vpack.c.bf16 %v3551, %v3550
    %v3584 = vpack.c.bf16 %v3553, %v3552
    %v3585 = vpack.c.bf16 %v3555, %v3554
    %v3586 = vpack.c.bf16 %v3557, %v3556
    %v3587 = vpack.c.bf16 %v3559, %v3558
    %v3588 = vpack.c.bf16 %v3561, %v3560
    %v3589 = vpack.c.bf16 %v3563, %v3562
    %v3590 = vpack.c.bf16 %v3565, %v3564
    %v3591 = vpack.c.bf16 %v3567, %v3566
    %v3592 = vpack.c.bf16 %v3569, %v3568
    %v3593 = vpack.c.bf16 %v3571, %v3570
    %v3594 = vpack.c.bf16 %v3573, %v3572
    %v3595 = vpack.c.bf16 %v3575, %v3574
    %v3596 = vpack.c.bf16 %v3577, %v3576
    %v3597 = vpack.c.bf16 %v3579, %v3578
    %v3598 = vpack.c.bf16 %v3581, %v3580
    %s3599 = sld [smem:[#allocation2]]
    %v3600 = vstv %s3599
    %vm3601 = vcmask 523264
    %v3603 = vsel %vm3601, %v3582, 0
    %v3606 = vsel %vm3601, %v3583, 0
    %v3609 = vsel %vm3601, %v3584, 0
    %v3612 = vsel %vm3601, %v3585, 0
    %v3615 = vsel %vm3601, %v3586, 0
    %v3618 = vsel %vm3601, %v3587, 0
    %v3621 = vsel %vm3601, %v3588, 0
    %v3624 = vsel %vm3601, %v3589, 0
    %v3627 = vsel %vm3601, %v3590, 0
    %v3630 = vsel %vm3601, %v3591, 0
    %v3633 = vsel %vm3601, %v3592, 0
    %v3636 = vsel %vm3601, %v3593, 0
    %v3639 = vsel %vm3601, %v3594, 0
    %v3642 = vsel %vm3601, %v3595, 0
    %v3645 = vsel %vm3601, %v3596, 0
    %v3648 = vsel %vm3601, %v3597, 0
    %v3651 = vsel %vm3601, %v3598, 0
    %3653 = vmatprep.subr.bf16.mxu0 0
    %3654 = vmatpush1.bf16.xpose.msra.mxu0 %v3606
    %3655 = vmatprep.subr.bf16.mxu0 0
    %3656 = vmatpush1.bf16.xpose.msra.mxu0 %v3609
    %3657 = vmatprep.subr.bf16.mxu0 0
    %3658 = vmatpush1.bf16.xpose.msra.mxu0 %v3612
    %3659 = vmatprep.subr.bf16.mxu0 0
    %3660 = vmatpush1.bf16.xpose.msra.mxu0 %v3615
    %3661 = vmatprep.subr.bf16.mxu0 0
    %3662 = vmatpush1.bf16.xpose.msra.mxu0 %v3618
    %3663 = vmatprep.subr.bf16.mxu0 0
    %3664 = vmatpush1.bf16.xpose.msra.mxu0 %v3621
    %3665 = vmatprep.subr.bf16.mxu0 0
    %3666 = vmatpush1.bf16.xpose.msra.mxu0 %v3624
    %3667 = vmatprep.subr.bf16.mxu0 0
    %3668 = vmatpush1.bf16.xpose.msra.mxu0 %v3627
    %3669 = vmatprep.subr.bf16.mxu0 0
    %3670 = vmatpush1.bf16.xpose.msra.mxu0 %v3630
    %3671 = vmatprep.subr.bf16.mxu0 0
    %3672 = vmatpush1.bf16.xpose.msra.mxu0 %v3633
    %3673 = vmatprep.subr.bf16.mxu0 0
    %3674 = vmatpush1.bf16.xpose.msra.mxu0 %v3636
    %3675 = vmatprep.subr.bf16.mxu0 0
    %3676 = vmatpush1.bf16.xpose.msra.mxu0 %v3639
    %3677 = vmatprep.subr.bf16.mxu0 0
    %3678 = vmatpush1.bf16.xpose.msra.mxu0 %v3642
    %3679 = vmatprep.subr.bf16.mxu0 0
    %3680 = vmatpush1.bf16.xpose.msra.mxu0 %v3645
    %3681 = vmatprep.subr.bf16.mxu0 0
    %3682 = vmatpush1.bf16.xpose.msra.mxu0 %v3648
    %3683 = vmatprep.subr.bf16.mxu0 0
    %3684 = vmatpush1.bf16.xpose.msra.mxu0 %v3651
    %3685 = vmatprep.mubr.bf16.mxu0 0
    %3686 = vmatmul.mubr.bf16.gmra.mrb[0].mxu0 %v3603
    %v3687 = vpop.f32.mrb[0].mxu0
    %v3688 = vadd.f32 %v3600, %v3687
    %v3689 = vpop.f32.mrb[0].mxu0
    %v3690 = vadd.f32 %v3600, %v3689
    %v3691 = vpop.f32.mrb[0].mxu0
    %v3692 = vpop.f32.mrb[0].mxu0
    %3693 = vdwg.mxu0
    %v3696 = vcombine.low %v3688, %v3690
    %v3698 = vunpack.c.l.s4 1966171168
    %v3699 = vunpack.c.0.s8 %v3698
    %v3700 = vlaneseq
    %v3701 = vshrl.u32 %v3700, 7
    %v3702 = vsub.s32 %v3699, %v3701
    %v3703 = vrot.slane %v3696, %v3702
    %v3705 = vunpack.c.l.s4 1966171168
    %v3706 = vunpack.c.0.s8 %v3705
    %v3707 = vlaneseq
    %v3708 = vshrl.u32 %v3707, 7
    %v3709 = vsub.s32 %v3706, %v3708
    %v3710 = vrot.slane %v3703, %v3709
    %v3712 = vlaneseq
    %vm3713 = vcmp.ge.s32.totalorder %v3712, 0
    %vm3714 = vcmp.lt.s32.totalorder %v3712, 256
    %vm3715 = vmand %vm3713, %vm3714
    %3716 = vst.msk [vmem:[#allocation3] sm:$0x3] %vm3715, %v3710
    // Predicated region
    $region30: #{tpu_custom_call.1} parent=1 // pred_check
      _
    $region31: #{tpu_custom_call.1} parent=1 // pred_check_branch
      %3718 = sbr.rel (0) target = $region33
    $region32: #{tpu_custom_call.1} parent=1 // pred_region
      %s3720 = ssub.s32 32, 32
      %3721 = vsyncadd [#allocation4], %s3720
      %s3723 = sshll.u32 [#allocation3], 4
      %s3724 = int_to_ptr.vmem [resolvable:$true] %s3723
      %3726 = dma.vmem_to_hbm [thread:$0]  %s3724, 32, %s7, [#allocation4]
    $region33: #{tpu_custom_call.1} parent=1 // pred_fallthru
      _
    // Predicated region
    $region34: #{tpu_custom_call.1} parent=1 // pred_check
      _
    $region35: #{tpu_custom_call.1} parent=1 // pred_check_branch
      %3728 = sbr.rel (0) target = $region37
    $region36: #{tpu_custom_call.1} parent=1 // pred_region
      %3729 = dma.done [#allocation4], 32
    $region37: #{tpu_custom_call.1} parent=1 // pred_fallthru
      _
    %3730 = vsyncpa [#allocation4], 1

</llo_original>
